<compile_context>
chip_gen: v5e
topology: v5e:2x2
jax: 0.10.0
libtpu: 0.0.40
codegen_flags: <defaults>
</compile_context>

<pallas_src>
import functools
import math

import jax
import jax.numpy as jnp
from jax.experimental import pallas as pl
from jax.experimental.pallas import tpu as pltpu


# ----------------------------------------------------------------------------
# Fused Pallas kernel: y = relu( relu(x@We + be) @ Wd1 + bd1 ) @ Wd2 + bd2
# ----------------------------------------------------------------------------
def _autoencoder_kernel(x_ref, we_ref, be_ref, wd1_ref, bd1_ref, wd2_ref,
                        bd2_ref, o_ref):
    # Cast x f32 -> bf16 inside the kernel (VPU work hidden under DMA/MXU;
    # avoids a separate XLA cast fusion + extra HBM round trip of x).
    x = x_ref[...].astype(we_ref.dtype)
    # Encoder: Linear -> ReLU (MXU matmul, f32 accumulation; VPU bias/relu).
    z = jnp.dot(x, we_ref[...], preferred_element_type=jnp.float32)
    z = jnp.maximum(z + be_ref[...], 0.0)
    # Decoder: Linear -> ReLU -> Linear. Intermediates stay VMEM/vreg resident.
    h = jnp.dot(z.astype(wd1_ref.dtype), wd1_ref[...],
                preferred_element_type=jnp.float32)
    h = jnp.maximum(h + bd1_ref[...], 0.0)
    y = jnp.dot(h.astype(wd2_ref.dtype), wd2_ref[...],
                preferred_element_type=jnp.float32)
    o_ref[...] = (y + bd2_ref[...]).astype(o_ref.dtype)


def autoencoder_forward(params, x, *, block_b=None):
    """Fused Autoencoder.forward. x: [batch, input_dim] f32 -> [batch, out] f32."""
    w_e, b_e, w_d1, b_d1, w_d2, b_d2 = params
    batch, input_dim = x.shape
    embed_dim = w_e.shape[1]
    dec_hidden = w_d1.shape[1]          # already padded to a multiple of 128
    out_dim = w_d2.shape[1]

    # One grid step for small batches (v5e/v6e single TC); tile 256 rows
    # per step for larger batches (batch axis marked "parallel").
    if block_b is None:
        block_b = batch if batch <= 256 else 256
    assert batch % block_b == 0, "batch must be a multiple of the row tile"

    flops = 2 * batch * (input_dim * embed_dim
                         + embed_dim * dec_hidden
                         + dec_hidden * out_dim)
    bytes_accessed = (int(x.size) * x.dtype.itemsize
                      + sum(int(p.size) * p.dtype.itemsize for p in params)
                      + batch * out_dim * 4)

    full = lambda i: (0, 0)  # weights/biases: same whole-array block every step
    return pl.pallas_call(
        _autoencoder_kernel,
        out_shape=jax.ShapeDtypeStruct((batch, out_dim), jnp.float32),
        grid_spec=pltpu.PrefetchScalarGridSpec(
            num_scalar_prefetch=0,
            grid=(batch // block_b,),
            in_specs=[
                pl.BlockSpec((block_b, input_dim), lambda i: (i, 0)),
                pl.BlockSpec((input_dim, embed_dim), full),
                pl.BlockSpec((1, embed_dim), full),
                pl.BlockSpec((embed_dim, dec_hidden), full),
                pl.BlockSpec((1, dec_hidden), full),
                pl.BlockSpec((dec_hidden, out_dim), full),
                pl.BlockSpec((1, out_dim), full),
            ],
            out_specs=pl.BlockSpec((block_b, out_dim), lambda i: (i, 0)),
        ),
        compiler_params=pltpu.CompilerParams(
            # Batch tiles are independent; with grid=(1,) this is a no-op.
            # TODO(synk): on v7x with large batch, benchmark CORE_PARALLEL here.
            dimension_semantics=("parallel",),
            vmem_limit_bytes=32 * 1024 * 1024,
        ),
        cost_estimate=pl.CostEstimate(flops=flops, transcendentals=0,
                                      bytes_accessed=bytes_accessed),
    )(x, *params)


# ----------------------------------------------------------------------------
# Deterministic parameter construction (PyTorch-style uniform init) + padding.
# ----------------------------------------------------------------------------
def make_autoencoder_params(key, input_dim, embed_dim, dec_hidden, output_dim,
                            weight_dtype=jnp.bfloat16):
    def linear(k, d_in, d_out):
        kw, kb = jax.random.split(k)
        bound = 1.0 / math.sqrt(d_in)
        w = jax.random.uniform(kw, (d_in, d_out), jnp.float32, -bound, bound)
        b = jax.random.uniform(kb, (1, d_out), jnp.float32, -bound, bound)
        return w.astype(weight_dtype), b  # bf16 weights, f32 biases

    k1, k2, k3 = jax.random.split(key, 3)
    w_e, b_e = linear(k1, input_dim, embed_dim)       # encoder Linear
    w_d1, b_d1 = linear(k2, embed_dim, dec_hidden)    # decoder Linear 1
    w_d2, b_d2 = linear(k3, dec_hidden, output_dim)   # decoder Linear 2
    return (w_e, b_e, w_d1, b_d1, w_d2, b_d2)


def pad_decoder_hidden(params, multiple=128):
    """Zero-pad the decoder hidden dim to a lane/MXU-aligned multiple.

    Numerically exact: padded columns of w_d1/b_d1 produce relu(0)=0, and the
    corresponding zero rows of w_d2 contribute nothing to the final matmul.
    """
    w_e, b_e, w_d1, b_d1, w_d2, b_d2 = params
    h = w_d1.shape[1]
    h_pad = ((h + multiple - 1) // multiple) * multiple
    if h_pad == h:
        return params
    pad = h_pad - h
    w_d1 = jnp.pad(w_d1, ((0, 0), (0, pad)))
    b_d1 = jnp.pad(b_d1, ((0, 0), (0, pad)))
    w_d2 = jnp.pad(w_d2, ((0, pad), (0, 0)))
    return (w_e, b_e, w_d1, b_d1, w_d2, b_d2)


# Pure-JAX reference (unpadded params) with the same bf16/f32 precision flow.
def _forward_ref(params, x):
    w_e, b_e, w_d1, b_d1, w_d2, b_d2 = params
    xb = x.astype(w_e.dtype)
    z = jnp.maximum(jnp.dot(xb, w_e, preferred_element_type=jnp.float32) + b_e, 0.0)
    h = jnp.maximum(jnp.dot(z.astype(w_d1.dtype), w_d1,
                            preferred_element_type=jnp.float32) + b_d1, 0.0)
    y = jnp.dot(h.astype(w_d2.dtype), w_d2,
                preferred_element_type=jnp.float32) + b_d2
    return y.astype(jnp.float32)


if __name__ == "__main__":
    BATCH = 256        # one row-tile -> grid=(1,) on single-TC chips
    INPUT_DIM = 256    # lane-dense (multiple of 128)
    EMBED_DIM = 128    # embed_dim of the autoencoder
    DEC_HIDDEN = 1000  # hard-coded in the PyTorch module for num_layers=3
    OUTPUT_DIM = INPUT_DIM  # output_dim defaults to input_dim

    root = jax.random.PRNGKey(0)
    k_params, k_x = jax.random.split(root)

    params = make_autoencoder_params(k_params, INPUT_DIM, EMBED_DIM,
                                     DEC_HIDDEN, OUTPUT_DIM)
    params_padded = pad_decoder_hidden(params, multiple=128)  # 1000 -> 1024
    x = jax.random.normal(k_x, (BATCH, INPUT_DIM), jnp.float32)

    fwd = jax.jit(functools.partial(autoencoder_forward, params_padded))
    y = jax.block_until_ready(fwd(x))

    y_ref = _forward_ref(params, x)   # reference on the ORIGINAL (1000-wide) params
    assert y.shape == y_ref.shape and y.dtype == y_ref.dtype
    err = float(jnp.max(jnp.abs(y - y_ref)))
    assert err < 2e-3, f"mismatch vs reference: max abs err = {err}"

    print("KERNEL_OK")
</pallas_src>

<mosaic_0001>
module attributes {stable_mosaic.version = 11 : i64} {
  func.func @_autoencoder_kernel(%arg0: i32, %arg1: memref<256x256xf32, #tpu.memory_space<vmem>>, %arg2: memref<256x128xbf16, #tpu.memory_space<vmem>>, %arg3: memref<1x128xf32, #tpu.memory_space<vmem>>, %arg4: memref<128x1024xbf16, #tpu.memory_space<vmem>>, %arg5: memref<1x1024xf32, #tpu.memory_space<vmem>>, %arg6: memref<1024x256xbf16, #tpu.memory_space<vmem>>, %arg7: memref<1x256xf32, #tpu.memory_space<vmem>>, %arg8: memref<256x256xf32, #tpu.memory_space<vmem>>) attributes {dimension_semantics = [#tpu.dimension_semantics<parallel>], iteration_bounds = array<i64: 1>, scalar_prefetch = 0 : i64, scratch_operands = 0 : i64, tpu.core_type = #tpu.core_type<tc>, window_params = [{transform_indices = @transform_0, window_bounds = array<i64: 256, 256>}, {pipeline_mode = #tpu.pipeline_mode<synchronous>, transform_indices = @transform_1, window_bounds = array<i64: 256, 128>}, {pipeline_mode = #tpu.pipeline_mode<synchronous>, transform_indices = @transform_2, window_bounds = array<i64: 1, 128>}, {pipeline_mode = #tpu.pipeline_mode<synchronous>, transform_indices = @transform_3, window_bounds = array<i64: 128, 1024>}, {pipeline_mode = #tpu.pipeline_mode<synchronous>, transform_indices = @transform_4, window_bounds = array<i64: 1, 1024>}, {pipeline_mode = #tpu.pipeline_mode<synchronous>, transform_indices = @transform_5, window_bounds = array<i64: 1024, 256>}, {pipeline_mode = #tpu.pipeline_mode<synchronous>, transform_indices = @transform_6, window_bounds = array<i64: 1, 256>}, {transform_indices = @transform_7, window_bounds = array<i64: 256, 256>}]} {
    %c0 = arith.constant 0 : index
    %c0_0 = arith.constant 0 : index
    %0 = vector.load %arg1[%c0, %c0_0] : memref<256x256xf32, #tpu.memory_space<vmem>>, vector<256x256xf32>
    %1 = arith.truncf %0 : vector<256x256xf32> to vector<256x256xbf16>
    %c0_1 = arith.constant 0 : index
    %c0_2 = arith.constant 0 : index
    %2 = vector.load %arg2[%c0_1, %c0_2] : memref<256x128xbf16, #tpu.memory_space<vmem>>, vector<256x128xbf16>
    %cst = arith.constant dense<0.000000e+00> : vector<256x128xf32>
    %3 = tpu.matmul %1, %2, %cst {dimension_numbers = #tpu.dot_dimension_numbers<[1], [0], [0], [1], [0, 0, 1, 1], [], []>} : vector<256x256xbf16>, vector<256x128xbf16>, vector<256x128xf32> -> vector<256x128xf32>
    %c0_3 = arith.constant 0 : index
    %c0_4 = arith.constant 0 : index
    %4 = vector.load %arg3[%c0_3, %c0_4] : memref<1x128xf32, #tpu.memory_space<vmem>>, vector<1x128xf32>
    %5 = vector.broadcast %4 : vector<1x128xf32> to vector<256x128xf32>
    %6 = arith.addf %3, %5 : vector<256x128xf32>
    %cst_5 = arith.constant 0.000000e+00 : f32
    %7 = vector.broadcast %cst_5 : f32 to vector<256x128xf32>
    %8 = arith.maximumf %6, %7 : vector<256x128xf32>
    %9 = arith.truncf %8 : vector<256x128xf32> to vector<256x128xbf16>
    %c0_6 = arith.constant 0 : index
    %c0_7 = arith.constant 0 : index
    %10 = vector.load %arg4[%c0_6, %c0_7] : memref<128x1024xbf16, #tpu.memory_space<vmem>>, vector<128x1024xbf16>
    %cst_8 = arith.constant dense<0.000000e+00> : vector<256x1024xf32>
    %11 = tpu.matmul %9, %10, %cst_8 {dimension_numbers = #tpu.dot_dimension_numbers<[1], [0], [0], [1], [0, 0, 1, 1], [], []>} : vector<256x128xbf16>, vector<128x1024xbf16>, vector<256x1024xf32> -> vector<256x1024xf32>
    %c0_9 = arith.constant 0 : index
    %c0_10 = arith.constant 0 : index
    %12 = vector.load %arg5[%c0_9, %c0_10] : memref<1x1024xf32, #tpu.memory_space<vmem>>, vector<1x1024xf32>
    %13 = vector.broadcast %12 : vector<1x1024xf32> to vector<256x1024xf32>
    %14 = arith.addf %11, %13 : vector<256x1024xf32>
    %cst_11 = arith.constant 0.000000e+00 : f32
    %15 = vector.broadcast %cst_11 : f32 to vector<256x1024xf32>
    %16 = arith.maximumf %14, %15 : vector<256x1024xf32>
    %17 = arith.truncf %16 : vector<256x1024xf32> to vector<256x1024xbf16>
    %c0_12 = arith.constant 0 : index
    %c0_13 = arith.constant 0 : index
    %18 = vector.load %arg6[%c0_12, %c0_13] : memref<1024x256xbf16, #tpu.memory_space<vmem>>, vector<1024x256xbf16>
    %cst_14 = arith.constant dense<0.000000e+00> : vector<256x256xf32>
    %19 = tpu.matmul %17, %18, %cst_14 {dimension_numbers = #tpu.dot_dimension_numbers<[1], [0], [0], [1], [0, 0, 1, 1], [], []>} : vector<256x1024xbf16>, vector<1024x256xbf16>, vector<256x256xf32> -> vector<256x256xf32>
    %c0_15 = arith.constant 0 : index
    %c0_16 = arith.constant 0 : index
    %20 = vector.load %arg7[%c0_15, %c0_16] : memref<1x256xf32, #tpu.memory_space<vmem>>, vector<1x256xf32>
    %21 = vector.broadcast %20 : vector<1x256xf32> to vector<256x256xf32>
    %22 = arith.addf %19, %21 : vector<256x256xf32>
    %c0_17 = arith.constant 0 : index
    %c0_18 = arith.constant 0 : index
    %23 = vector.load %arg8[%c0_17, %c0_18] : memref<256x256xf32, #tpu.memory_space<vmem>>, vector<256x256xf32>
    tpu.vector_store %arg8[%c0_17, %c0_18], %22 {strides = array<i32>} : memref<256x256xf32, #tpu.memory_space<vmem>>, vector<256x256xf32>,
    return
  }
  func.func @transform_0(%arg0: i32) -> (i32, i32) {
    %c0_i32 = arith.constant 0 : i32
    %c0_i32_0 = arith.constant 0 : i32
    return %arg0, %c0_i32 : i32, i32
  }
  func.func @transform_1(%arg0: i32) -> (i32, i32) {
    %c0_i32 = arith.constant 0 : i32
    %c0_i32_0 = arith.constant 0 : i32
    %c0_i32_1 = arith.constant 0 : i32
    return %c0_i32, %c0_i32_0 : i32, i32
  }
  func.func @transform_2(%arg0: i32) -> (i32, i32) {
    %c0_i32 = arith.constant 0 : i32
    %c0_i32_0 = arith.constant 0 : i32
    %c0_i32_1 = arith.constant 0 : i32
    return %c0_i32, %c0_i32_0 : i32, i32
  }
  func.func @transform_3(%arg0: i32) -> (i32, i32) {
    %c0_i32 = arith.constant 0 : i32
    %c0_i32_0 = arith.constant 0 : i32
    %c0_i32_1 = arith.constant 0 : i32
    return %c0_i32, %c0_i32_0 : i32, i32
  }
  func.func @transform_4(%arg0: i32) -> (i32, i32) {
    %c0_i32 = arith.constant 0 : i32
    %c0_i32_0 = arith.constant 0 : i32
    %c0_i32_1 = arith.constant 0 : i32
    return %c0_i32, %c0_i32_0 : i32, i32
  }
  func.func @transform_5(%arg0: i32) -> (i32, i32) {
    %c0_i32 = arith.constant 0 : i32
    %c0_i32_0 = arith.constant 0 : i32
    %c0_i32_1 = arith.constant 0 : i32
    return %c0_i32, %c0_i32_0 : i32, i32
  }
  func.func @transform_6(%arg0: i32) -> (i32, i32) {
    %c0_i32 = arith.constant 0 : i32
    %c0_i32_0 = arith.constant 0 : i32
    %c0_i32_1 = arith.constant 0 : i32
    return %c0_i32, %c0_i32_0 : i32, i32
  }
  func.func @transform_7(%arg0: i32) -> (i32, i32) {
    %c0_i32 = arith.constant 0 : i32
    %c0_i32_0 = arith.constant 0 : i32
    return %arg0, %c0_i32 : i32, i32
  }
}

</mosaic_0001>

<llo_original>
// kernel: autoencoder_forward.1
$region0: #{autoencoder_forward.1}
  #allocation0 [shape = 'u32[]', space=smem, size = 0x4, offset = 0x4, fixed_abs, tag = 'smem constant byte address 0x4 - core index']
  #allocation1 [shape = 'u32[72,128]{1,0:T(1,128)}', space=vmem, size = 0x9000, scoped, tag = 'internal scratch']
  %s0 = inlined_call_operand.hbm [shape: f32[256,256], index: 0, kind: input, shape index: {}]
  %s1 = inlined_call_operand.hbm [shape: bf16[256,128], index: 1, kind: input, shape index: {}]
  %s2 = inlined_call_operand.vmem [shape: f32[1,128], index: 2, kind: input, shape index: {}]
  %s3 = inlined_call_operand.hbm [shape: bf16[128,1024], index: 3, kind: input, shape index: {}]
  %s4 = inlined_call_operand.hbm [shape: f32[1,1024], index: 4, kind: input, shape index: {}]
  %s5 = inlined_call_operand.hbm [shape: bf16[1024,256], index: 5, kind: input, shape index: {}]
  %s6 = inlined_call_operand.vmem [shape: f32[1,256], index: 6, kind: input, shape index: {}]
  %s7 = inlined_call_operand.hbm [shape: f32[256,256], index: 7, kind: output, shape index: {}]
  %s8 = sld [smem:[#allocation0]]
  $region58: #{autoencoder_forward.1} parent=0
    _
  %s10 = ssub.s32 1, %s8
  %s11 = scalar_select 0, %s10, %s8
  $region1: #{autoencoder_forward.1} parent=0
    #allocation2 [shape = 'u8[262144]{0}', space=vmem, size = 0x40000, scoped, tag = 'input window, operand 0, single buffered']
    #allocation3 [shape = 's32[1]{0}', space=sflag, size = 0x4, scoped, tag = 'scoped memory for autoencoder_forward.1']
    #allocation4 [shape = 's32[1]{0}', space=sflag, size = 0x4, scoped, tag = 'scoped memory for autoencoder_forward.1']
    #allocation5 [shape = 'u8[65536]{0}', space=vmem, size = 0x10000, scoped, tag = 'input window, operand 1, single buffered']
    #allocation6 [shape = 's32[1]{0}', space=sflag, size = 0x4, scoped, tag = 'scoped memory for autoencoder_forward.1']
    #allocation7 [shape = 'u8[262144]{0}', space=vmem, size = 0x40000, scoped, tag = 'input window, operand 3, single buffered']
    #allocation8 [shape = 'u8[4096]{0}', space=vmem, size = 0x1000, scoped, tag = 'input window, operand 4, single buffered']
    #allocation9 [shape = 's32[1]{0}', space=sflag, size = 0x4, scoped, tag = 'scoped memory for autoencoder_forward.1']
    #allocation10 [shape = 'u8[524288]{0}', space=vmem, size = 0x80000, scoped, tag = 'input window, operand 5, single buffered']
    #allocation11 [shape = 'u8[262144]{0}', space=vmem, size = 0x40000, scoped, tag = 'output window, operand 0, single buffered']
    %12 = vsyncpa [#allocation3], 0
    %13 = vsyncpa [#allocation6], 0
    %14 = vsyncpa [#allocation9], 0
    %15 = vsyncpa [#allocation4], 0
    // Predicated region
    $region2: #{autoencoder_forward.1} parent=1 // pred_check
      _
    $region3: #{autoencoder_forward.1} parent=1 // pred_check_branch
      %17 = sbr.rel (0) target = $region5
    $region4: #{autoencoder_forward.1} parent=1 // pred_region
      %19 = vsyncadd [#allocation3], 0
      %s20 = sshll.u32 %s0, 4
      %s21 = int_to_ptr.hbm [resolvable:$true] %s20
      %s22 = sshll.u32 [#allocation2], 4
      %s23 = int_to_ptr.vmem [resolvable:$true] %s22
      %28 = dma.hbm_to_vmem [thread:$0]  %s21, 8192, %s23, [#allocation3], 256, 256, 16
    $region5: #{autoencoder_forward.1} parent=1 // pred_fallthru
      _
    // Predicated region
    $region6: #{autoencoder_forward.1} parent=1 // pred_check
      _
    $region7: #{autoencoder_forward.1} parent=1 // pred_check_branch
      %30 = sbr.rel (0) target = $region9
    $region8: #{autoencoder_forward.1} parent=1 // pred_region
      %32 = vsyncadd [#allocation6], 0
      %s33 = sshll.u32 %s1, 4
      %s34 = int_to_ptr.hbm [resolvable:$true] %s33
      %s35 = sshll.u32 [#allocation5], 4
      %s36 = int_to_ptr.vmem [resolvable:$true] %s35
      %41 = dma.hbm_to_vmem [thread:$0]  %s34, 2048, %s36, [#allocation6], 64, 64, 4
    $region9: #{autoencoder_forward.1} parent=1 // pred_fallthru
      _
    // Predicated region
    $region10: #{autoencoder_forward.1} parent=1 // pred_check
      _
    $region11: #{autoencoder_forward.1} parent=1 // pred_check_branch
      %43 = sbr.rel (0) target = $region13
    $region12: #{autoencoder_forward.1} parent=1 // pred_region
      _
    $region13: #{autoencoder_forward.1} parent=1 // pred_fallthru
      _
    // Predicated region
    $region14: #{autoencoder_forward.1} parent=1 // pred_check
      _
    $region15: #{autoencoder_forward.1} parent=1 // pred_check_branch
      %45 = sbr.rel (0) target = $region17
    $region16: #{autoencoder_forward.1} parent=1 // pred_region
      %47 = vsyncadd [#allocation6], 0
      %s48 = sshll.u32 %s3, 4
      %s49 = int_to_ptr.hbm [resolvable:$true] %s48
      %s50 = sshll.u32 [#allocation7], 4
      %s51 = int_to_ptr.vmem [resolvable:$true] %s50
      %56 = dma.hbm_to_vmem [thread:$0]  %s49, 8192, %s51, [#allocation6], 512, 512, 32
    $region17: #{autoencoder_forward.1} parent=1 // pred_fallthru
      _
    // Predicated region
    $region18: #{autoencoder_forward.1} parent=1 // pred_check
      _
    $region19: #{autoencoder_forward.1} parent=1 // pred_check_branch
      %58 = sbr.rel (0) target = $region21
    $region20: #{autoencoder_forward.1} parent=1 // pred_region
      %60 = vsyncadd [#allocation9], 0
      %s62 = sshll.u32 %s4, 4
      %s63 = int_to_ptr.hbm [resolvable:$true] %s62
      %s64 = sshll.u32 [#allocation8], 4
      %s65 = int_to_ptr.vmem [resolvable:$true] %s64
      %67 = dma.hbm_to_vmem [thread:$0]  %s63, 128, %s65, [#allocation9]
    $region21: #{autoencoder_forward.1} parent=1 // pred_fallthru
      _
    // Predicated region
    $region22: #{autoencoder_forward.1} parent=1 // pred_check
      _
    $region23: #{autoencoder_forward.1} parent=1 // pred_check_branch
      %69 = sbr.rel (0) target = $region25
    $region24: #{autoencoder_forward.1} parent=1 // pred_region
      %71 = vsyncadd [#allocation9], 0
      %s72 = sshll.u32 %s5, 4
      %s73 = int_to_ptr.hbm [resolvable:$true] %s72
      %s74 = sshll.u32 [#allocation10], 4
      %s75 = int_to_ptr.vmem [resolvable:$true] %s74
      %80 = dma.hbm_to_vmem [thread:$0]  %s73, 16384, %s75, [#allocation9], 128, 128, 8
    $region25: #{autoencoder_forward.1} parent=1 // pred_fallthru
      _
    // Predicated region
    $region26: #{autoencoder_forward.1} parent=1 // pred_check
      _
    $region27: #{autoencoder_forward.1} parent=1 // pred_check_branch
      %82 = sbr.rel (0) target = $region29
    $region28: #{autoencoder_forward.1} parent=1 // pred_region
      _
    $region29: #{autoencoder_forward.1} parent=1 // pred_fallthru
      _
    // Predicated region
    $region30: #{autoencoder_forward.1} parent=1 // pred_check
      _
    $region31: #{autoencoder_forward.1} parent=1 // pred_check_branch
      %84 = sbr.rel (0) target = $region33
    $region32: #{autoencoder_forward.1} parent=1 // pred_region
      %86 = dma.done [#allocation3], 8192
    $region33: #{autoencoder_forward.1} parent=1 // pred_fallthru
      _
    // Predicated region
    $region34: #{autoencoder_forward.1} parent=1 // pred_check
      _
    $region35: #{autoencoder_forward.1} parent=1 // pred_check_branch
      %88 = sbr.rel (0) target = $region37
    $region36: #{autoencoder_forward.1} parent=1 // pred_region
      %90 = dma.done [#allocation6], 2048
    $region37: #{autoencoder_forward.1} parent=1 // pred_fallthru
      _
    // Predicated region
    $region38: #{autoencoder_forward.1} parent=1 // pred_check
      _
    $region39: #{autoencoder_forward.1} parent=1 // pred_check_branch
      %92 = sbr.rel (0) target = $region41
    $region40: #{autoencoder_forward.1} parent=1 // pred_region
      %94 = dma.done [#allocation6], 8192
    $region41: #{autoencoder_forward.1} parent=1 // pred_fallthru
      _
    // Predicated region
    $region42: #{autoencoder_forward.1} parent=1 // pred_check
      _
    $region43: #{autoencoder_forward.1} parent=1 // pred_check_branch
      %96 = sbr.rel (0) target = $region45
    $region44: #{autoencoder_forward.1} parent=1 // pred_region
      %98 = dma.done [#allocation9], 128
    $region45: #{autoencoder_forward.1} parent=1 // pred_fallthru
      _
    // Predicated region
    $region46: #{autoencoder_forward.1} parent=1 // pred_check
      _
    $region47: #{autoencoder_forward.1} parent=1 // pred_check_branch
      %100 = sbr.rel (0) target = $region49
    $region48: #{autoencoder_forward.1} parent=1 // pred_region
      %102 = dma.done [#allocation9], 16384
    $region49: #{autoencoder_forward.1} parent=1 // pred_fallthru
      _
    %v103 = vld [vmem:[#allocation2] sm:$0xff]
    %v104 = vld [vmem:[#allocation2 + $0x8] sm:$0xff]
    %v105 = vld [vmem:[#allocation2 + $0x10] sm:$0xff]
    %v106 = vld [vmem:[#allocation2 + $0x18] sm:$0xff]
    %v107 = vld [vmem:[#allocation2 + $0x20] sm:$0xff]
    %v108 = vld [vmem:[#allocation2 + $0x28] sm:$0xff]
    %v109 = vld [vmem:[#allocation2 + $0x30] sm:$0xff]
    %v110 = vld [vmem:[#allocation2 + $0x38] sm:$0xff]
    %v111 = vld [vmem:[#allocation2 + $0x40] sm:$0xff]
    %v112 = vld [vmem:[#allocation2 + $0x48] sm:$0xff]
    %v113 = vld [vmem:[#allocation2 + $0x50] sm:$0xff]
    %v114 = vld [vmem:[#allocation2 + $0x58] sm:$0xff]
    %v115 = vld [vmem:[#allocation2 + $0x60] sm:$0xff]
    %v116 = vld [vmem:[#allocation2 + $0x68] sm:$0xff]
    %v117 = vld [vmem:[#allocation2 + $0x70] sm:$0xff]
    %v118 = vld [vmem:[#allocation2 + $0x78] sm:$0xff]
    %v119 = vld [vmem:[#allocation2 + $0x80] sm:$0xff]
    %v120 = vld [vmem:[#allocation2 + $0x88] sm:$0xff]
    %v121 = vld [vmem:[#allocation2 + $0x90] sm:$0xff]
    %v122 = vld [vmem:[#allocation2 + $0x98] sm:$0xff]
    %v123 = vld [vmem:[#allocation2 + $0xa0] sm:$0xff]
    %v124 = vld [vmem:[#allocation2 + $0xa8] sm:$0xff]
    %v125 = vld [vmem:[#allocation2 + $0xb0] sm:$0xff]
    %v126 = vld [vmem:[#allocation2 + $0xb8] sm:$0xff]
    %v127 = vld [vmem:[#allocation2 + $0xc0] sm:$0xff]
    %v128 = vld [vmem:[#allocation2 + $0xc8] sm:$0xff]
    %v129 = vld [vmem:[#allocation2 + $0xd0] sm:$0xff]
    %v130 = vld [vmem:[#allocation2 + $0xd8] sm:$0xff]
    %v131 = vld [vmem:[#allocation2 + $0xe0] sm:$0xff]
    %v132 = vld [vmem:[#allocation2 + $0xe8] sm:$0xff]
    %v133 = vld [vmem:[#allocation2 + $0xf0] sm:$0xff]
    %v134 = vld [vmem:[#allocation2 + $0xf8] sm:$0xff]
    %v135 = vld [vmem:[#allocation2 + $0x100] sm:$0xff]
    %v136 = vld [vmem:[#allocation2 + $0x108] sm:$0xff]
    %v137 = vld [vmem:[#allocation2 + $0x110] sm:$0xff]
    %v138 = vld [vmem:[#allocation2 + $0x118] sm:$0xff]
    %v139 = vld [vmem:[#allocation2 + $0x120] sm:$0xff]
    %v140 = vld [vmem:[#allocation2 + $0x128] sm:$0xff]
    %v141 = vld [vmem:[#allocation2 + $0x130] sm:$0xff]
    %v142 = vld [vmem:[#allocation2 + $0x138] sm:$0xff]
    %v143 = vld [vmem:[#allocation2 + $0x140] sm:$0xff]
    %v144 = vld [vmem:[#allocation2 + $0x148] sm:$0xff]
    %v145 = vld [vmem:[#allocation2 + $0x150] sm:$0xff]
    %v146 = vld [vmem:[#allocation2 + $0x158] sm:$0xff]
    %v147 = vld [vmem:[#allocation2 + $0x160] sm:$0xff]
    %v148 = vld [vmem:[#allocation2 + $0x168] sm:$0xff]
    %v149 = vld [vmem:[#allocation2 + $0x170] sm:$0xff]
    %v150 = vld [vmem:[#allocation2 + $0x178] sm:$0xff]
    %v151 = vld [vmem:[#allocation2 + $0x180] sm:$0xff]
    %v152 = vld [vmem:[#allocation2 + $0x188] sm:$0xff]
    %v153 = vld [vmem:[#allocation2 + $0x190] sm:$0xff]
    %v154 = vld [vmem:[#allocation2 + $0x198] sm:$0xff]
    %v155 = vld [vmem:[#allocation2 + $0x1a0] sm:$0xff]
    %v156 = vld [vmem:[#allocation2 + $0x1a8] sm:$0xff]
    %v157 = vld [vmem:[#allocation2 + $0x1b0] sm:$0xff]
    %v158 = vld [vmem:[#allocation2 + $0x1b8] sm:$0xff]
    %v159 = vld [vmem:[#allocation2 + $0x1c0] sm:$0xff]
    %v160 = vld [vmem:[#allocation2 + $0x1c8] sm:$0xff]
    %v161 = vld [vmem:[#allocation2 + $0x1d0] sm:$0xff]
    %v162 = vld [vmem:[#allocation2 + $0x1d8] sm:$0xff]
    %v163 = vld [vmem:[#allocation2 + $0x1e0] sm:$0xff]
    %v164 = vld [vmem:[#allocation2 + $0x1e8] sm:$0xff]
    %v165 = vld [vmem:[#allocation2 + $0x1f0] sm:$0xff]
    %v166 = vld [vmem:[#allocation2 + $0x1f8] sm:$0xff]
    %v167 = vpack.c.bf16 %v105, %v103
    %v168 = vpack.c.bf16 %v106, %v104
    %v169 = vpack.c.bf16 %v109, %v107
    %v170 = vpack.c.bf16 %v110, %v108
    %v171 = vpack.c.bf16 %v113, %v111
    %v172 = vpack.c.bf16 %v114, %v112
    %v173 = vpack.c.bf16 %v117, %v115
    %v174 = vpack.c.bf16 %v118, %v116
    %v175 = vpack.c.bf16 %v121, %v119
    %v176 = vpack.c.bf16 %v122, %v120
    %v177 = vpack.c.bf16 %v125, %v123
    %v178 = vpack.c.bf16 %v126, %v124
    %v179 = vpack.c.bf16 %v129, %v127
    %v180 = vpack.c.bf16 %v130, %v128
    %v181 = vpack.c.bf16 %v133, %v131
    %v182 = vpack.c.bf16 %v134, %v132
    %v183 = vpack.c.bf16 %v137, %v135
    %v184 = vpack.c.bf16 %v138, %v136
    %v185 = vpack.c.bf16 %v141, %v139
    %v186 = vpack.c.bf16 %v142, %v140
    %v187 = vpack.c.bf16 %v145, %v143
    %v188 = vpack.c.bf16 %v146, %v144
    %v189 = vpack.c.bf16 %v149, %v147
    %v190 = vpack.c.bf16 %v150, %v148
    %v191 = vpack.c.bf16 %v153, %v151
    %v192 = vpack.c.bf16 %v154, %v152
    %v193 = vpack.c.bf16 %v157, %v155
    %v194 = vpack.c.bf16 %v158, %v156
    %v195 = vpack.c.bf16 %v161, %v159
    %v196 = vpack.c.bf16 %v162, %v160
    %v197 = vpack.c.bf16 %v165, %v163
    %v198 = vpack.c.bf16 %v166, %v164
    %v199 = vld [vmem:[#allocation5] sm:$0xf]
    %v200 = vld [vmem:[#allocation5 + $0x4] sm:$0xf]
    %v201 = vld [vmem:[#allocation5 + $0x8] sm:$0xf]
    %v202 = vld [vmem:[#allocation5 + $0xc] sm:$0xf]
    %v203 = vld [vmem:[#allocation5 + $0x10] sm:$0xf]
    %v204 = vld [vmem:[#allocation5 + $0x14] sm:$0xf]
    %v205 = vld [vmem:[#allocation5 + $0x18] sm:$0xf]
    %v206 = vld [vmem:[#allocation5 + $0x1c] sm:$0xf]
    %v207 = vld [vmem:[#allocation5 + $0x20] sm:$0xf]
    %v208 = vld [vmem:[#allocation5 + $0x24] sm:$0xf]
    %v209 = vld [vmem:[#allocation5 + $0x28] sm:$0xf]
    %v210 = vld [vmem:[#allocation5 + $0x2c] sm:$0xf]
    %v211 = vld [vmem:[#allocation5 + $0x30] sm:$0xf]
    %v212 = vld [vmem:[#allocation5 + $0x34] sm:$0xf]
    %v213 = vld [vmem:[#allocation5 + $0x38] sm:$0xf]
    %v214 = vld [vmem:[#allocation5 + $0x3c] sm:$0xf]
    %v215 = vld [vmem:[#allocation5 + $0x40] sm:$0xf]
    %v216 = vld [vmem:[#allocation5 + $0x44] sm:$0xf]
    %v217 = vld [vmem:[#allocation5 + $0x48] sm:$0xf]
    %v218 = vld [vmem:[#allocation5 + $0x4c] sm:$0xf]
    %v219 = vld [vmem:[#allocation5 + $0x50] sm:$0xf]
    %v220 = vld [vmem:[#allocation5 + $0x54] sm:$0xf]
    %v221 = vld [vmem:[#allocation5 + $0x58] sm:$0xf]
    %v222 = vld [vmem:[#allocation5 + $0x5c] sm:$0xf]
    %v223 = vld [vmem:[#allocation5 + $0x60] sm:$0xf]
    %v224 = vld [vmem:[#allocation5 + $0x64] sm:$0xf]
    %v225 = vld [vmem:[#allocation5 + $0x68] sm:$0xf]
    %v226 = vld [vmem:[#allocation5 + $0x6c] sm:$0xf]
    %v227 = vld [vmem:[#allocation5 + $0x70] sm:$0xf]
    %v228 = vld [vmem:[#allocation5 + $0x74] sm:$0xf]
    %v229 = vld [vmem:[#allocation5 + $0x78] sm:$0xf]
    %v230 = vld [vmem:[#allocation5 + $0x7c] sm:$0xf]
    %v231 = vld [vmem:[%s2] sm:$0x1]
    %v233 = vperm.slane %v231, 0
    %v267 = vunpack.c.l.b16 %v199
    %v268 = vunpack.c.l.b16 %v200
    %v269 = vunpack.c.l.b16 %v201
    %v270 = vunpack.c.l.b16 %v202
    %v271 = vunpack.c.l.b16 %v203
    %v272 = vunpack.c.l.b16 %v204
    %v273 = vunpack.c.l.b16 %v205
    %v274 = vunpack.c.l.b16 %v206
    %v275 = vunpack.c.l.b16 %v207
    %v276 = vunpack.c.l.b16 %v208
    %v277 = vunpack.c.l.b16 %v209
    %v278 = vunpack.c.l.b16 %v210
    %v279 = vunpack.c.l.b16 %v211
    %v280 = vunpack.c.l.b16 %v212
    %v281 = vunpack.c.l.b16 %v213
    %v282 = vunpack.c.l.b16 %v214
    %v283 = vunpack.c.l.b16 %v215
    %v284 = vunpack.c.l.b16 %v216
    %v285 = vunpack.c.l.b16 %v217
    %v286 = vunpack.c.l.b16 %v218
    %v287 = vunpack.c.l.b16 %v219
    %v288 = vunpack.c.l.b16 %v220
    %v289 = vunpack.c.l.b16 %v221
    %v290 = vunpack.c.l.b16 %v222
    %v291 = vunpack.c.l.b16 %v223
    %v292 = vunpack.c.l.b16 %v224
    %v293 = vunpack.c.l.b16 %v225
    %v294 = vunpack.c.l.b16 %v226
    %v295 = vunpack.c.l.b16 %v227
    %v296 = vunpack.c.l.b16 %v228
    %v297 = vunpack.c.l.b16 %v229
    %v298 = vunpack.c.l.b16 %v230
    %v299 = vpack.c.b16 %v268, %v267
    %v300 = vpack.c.b16 %v270, %v269
    %v301 = vpack.c.b16 %v272, %v271
    %v302 = vpack.c.b16 %v274, %v273
    %v303 = vpack.c.b16 %v276, %v275
    %v304 = vpack.c.b16 %v278, %v277
    %v305 = vpack.c.b16 %v280, %v279
    %v306 = vpack.c.b16 %v282, %v281
    %v307 = vpack.c.b16 %v284, %v283
    %v308 = vpack.c.b16 %v286, %v285
    %v309 = vpack.c.b16 %v288, %v287
    %v310 = vpack.c.b16 %v290, %v289
    %v311 = vpack.c.b16 %v292, %v291
    %v312 = vpack.c.b16 %v294, %v293
    %v313 = vpack.c.b16 %v296, %v295
    %v314 = vpack.c.b16 %v298, %v297
    %331 = vmatpush.bf16.msra.mxu0 %v306
    %332 = vmatpush.bf16.msra.mxu0 %v305
    %333 = vmatpush.bf16.msra.mxu0 %v304
    %334 = vmatpush.bf16.msra.mxu0 %v303
    %335 = vmatpush.bf16.msra.mxu0 %v302
    %336 = vmatpush.bf16.msra.mxu0 %v301
    %337 = vmatpush.bf16.msra.mxu0 %v300
    %338 = vmatpush.bf16.msra.mxu0 %v299
    %339 = vmatmul.bf16.gmra.mxu0 %v167
    %v340 = vpop.f32.mrf.mxu0
    %v341 = vadd.f32 %v233, %v340
    %v342 = vpop.f32.mrf.mxu0
    %v343 = vadd.f32 %v233, %v342
    %344 = vmatmul.bf16.gmra.mxu0 %v169
    %v345 = vpop.f32.mrf.mxu0
    %v346 = vadd.f32 %v233, %v345
    %v347 = vpop.f32.mrf.mxu0
    %v348 = vadd.f32 %v233, %v347
    %349 = vmatmul.bf16.gmra.mxu0 %v171
    %v350 = vpop.f32.mrf.mxu0
    %v351 = vadd.f32 %v233, %v350
    %v352 = vpop.f32.mrf.mxu0
    %v353 = vadd.f32 %v233, %v352
    %354 = vmatmul.bf16.gmra.mxu0 %v173
    %v355 = vpop.f32.mrf.mxu0
    %v356 = vadd.f32 %v233, %v355
    %v357 = vpop.f32.mrf.mxu0
    %v358 = vadd.f32 %v233, %v357
    %359 = vmatmul.bf16.gmra.mxu0 %v175
    %v360 = vpop.f32.mrf.mxu0
    %v361 = vadd.f32 %v233, %v360
    %v362 = vpop.f32.mrf.mxu0
    %v363 = vadd.f32 %v233, %v362
    %364 = vmatmul.bf16.gmra.mxu0 %v177
    %v365 = vpop.f32.mrf.mxu0
    %v366 = vadd.f32 %v233, %v365
    %v367 = vpop.f32.mrf.mxu0
    %v368 = vadd.f32 %v233, %v367
    %369 = vmatmul.bf16.gmra.mxu0 %v179
    %v370 = vpop.f32.mrf.mxu0
    %v371 = vadd.f32 %v233, %v370
    %v372 = vpop.f32.mrf.mxu0
    %v373 = vadd.f32 %v233, %v372
    %374 = vmatmul.bf16.gmra.mxu0 %v181
    %v375 = vpop.f32.mrf.mxu0
    %v376 = vadd.f32 %v233, %v375
    %v377 = vpop.f32.mrf.mxu0
    %v378 = vadd.f32 %v233, %v377
    %379 = vmatmul.bf16.gmra.mxu0 %v183
    %v380 = vpop.f32.mrf.mxu0
    %v381 = vadd.f32 %v233, %v380
    %v382 = vpop.f32.mrf.mxu0
    %v383 = vadd.f32 %v233, %v382
    %384 = vmatmul.bf16.gmra.mxu0 %v185
    %v385 = vpop.f32.mrf.mxu0
    %v386 = vadd.f32 %v233, %v385
    %v387 = vpop.f32.mrf.mxu0
    %v388 = vadd.f32 %v233, %v387
    %389 = vmatmul.bf16.gmra.mxu0 %v187
    %v390 = vpop.f32.mrf.mxu0
    %v391 = vadd.f32 %v233, %v390
    %v392 = vpop.f32.mrf.mxu0
    %v393 = vadd.f32 %v233, %v392
    %394 = vmatmul.bf16.gmra.mxu0 %v189
    %v395 = vpop.f32.mrf.mxu0
    %v396 = vadd.f32 %v233, %v395
    %v397 = vpop.f32.mrf.mxu0
    %v398 = vadd.f32 %v233, %v397
    %399 = vmatmul.bf16.gmra.mxu0 %v191
    %v400 = vpop.f32.mrf.mxu0
    %v401 = vadd.f32 %v233, %v400
    %v402 = vpop.f32.mrf.mxu0
    %v403 = vadd.f32 %v233, %v402
    %404 = vmatmul.bf16.gmra.mxu0 %v193
    %v405 = vpop.f32.mrf.mxu0
    %v406 = vadd.f32 %v233, %v405
    %v407 = vpop.f32.mrf.mxu0
    %v408 = vadd.f32 %v233, %v407
    %409 = vmatmul.bf16.gmra.mxu0 %v195
    %v410 = vpop.f32.mrf.mxu0
    %v411 = vadd.f32 %v233, %v410
    %v412 = vpop.f32.mrf.mxu0
    %v413 = vadd.f32 %v233, %v412
    %414 = vmatmul.bf16.gmra.mxu0 %v197
    %v415 = vpop.f32.mrf.mxu0
    %v416 = vadd.f32 %v233, %v415
    %v417 = vpop.f32.mrf.mxu0
    %v418 = vadd.f32 %v233, %v417
    %419 = vdwg.mxu0
    %420 = vmatpush.bf16.msra.mxu0 %v314
    %421 = vmatpush.bf16.msra.mxu0 %v313
    %422 = vmatpush.bf16.msra.mxu0 %v312
    %423 = vmatpush.bf16.msra.mxu0 %v311
    %424 = vmatpush.bf16.msra.mxu0 %v310
    %425 = vmatpush.bf16.msra.mxu0 %v309
    %426 = vmatpush.bf16.msra.mxu0 %v308
    %427 = vmatpush.bf16.msra.mxu0 %v307
    %428 = vmatmul.bf16.gmra.mxu0 %v168
    %v429 = vpop.f32.mrf.mxu0
    %v430 = vadd.f32 %v341, %v429
    %v431 = vpop.f32.mrf.mxu0
    %v432 = vadd.f32 %v343, %v431
    %433 = vmatmul.bf16.gmra.mxu0 %v170
    %v434 = vpop.f32.mrf.mxu0
    %v435 = vadd.f32 %v346, %v434
    %v436 = vpop.f32.mrf.mxu0
    %v437 = vadd.f32 %v348, %v436
    %438 = vmatmul.bf16.gmra.mxu0 %v172
    %v439 = vpop.f32.mrf.mxu0
    %v440 = vadd.f32 %v351, %v439
    %v441 = vpop.f32.mrf.mxu0
    %v442 = vadd.f32 %v353, %v441
    %443 = vmatmul.bf16.gmra.mxu0 %v174
    %v444 = vpop.f32.mrf.mxu0
    %v445 = vadd.f32 %v356, %v444
    %v446 = vpop.f32.mrf.mxu0
    %v447 = vadd.f32 %v358, %v446
    %448 = vmatmul.bf16.gmra.mxu0 %v176
    %v449 = vpop.f32.mrf.mxu0
    %v450 = vadd.f32 %v361, %v449
    %v451 = vpop.f32.mrf.mxu0
    %v452 = vadd.f32 %v363, %v451
    %453 = vmatmul.bf16.gmra.mxu0 %v178
    %v454 = vpop.f32.mrf.mxu0
    %v455 = vadd.f32 %v366, %v454
    %v456 = vpop.f32.mrf.mxu0
    %v457 = vadd.f32 %v368, %v456
    %458 = vmatmul.bf16.gmra.mxu0 %v180
    %v459 = vpop.f32.mrf.mxu0
    %v460 = vadd.f32 %v371, %v459
    %v461 = vpop.f32.mrf.mxu0
    %v462 = vadd.f32 %v373, %v461
    %463 = vmatmul.bf16.gmra.mxu0 %v182
    %v464 = vpop.f32.mrf.mxu0
    %v465 = vadd.f32 %v376, %v464
    %v466 = vpop.f32.mrf.mxu0
    %v467 = vadd.f32 %v378, %v466
    %468 = vmatmul.bf16.gmra.mxu0 %v184
    %v469 = vpop.f32.mrf.mxu0
    %v470 = vadd.f32 %v381, %v469
    %v471 = vpop.f32.mrf.mxu0
    %v472 = vadd.f32 %v383, %v471
    %473 = vmatmul.bf16.gmra.mxu0 %v186
    %v474 = vpop.f32.mrf.mxu0
    %v475 = vadd.f32 %v386, %v474
    %v476 = vpop.f32.mrf.mxu0
    %v477 = vadd.f32 %v388, %v476
    %478 = vmatmul.bf16.gmra.mxu0 %v188
    %v479 = vpop.f32.mrf.mxu0
    %v480 = vadd.f32 %v391, %v479
    %v481 = vpop.f32.mrf.mxu0
    %v482 = vadd.f32 %v393, %v481
    %483 = vmatmul.bf16.gmra.mxu0 %v190
    %v484 = vpop.f32.mrf.mxu0
    %v485 = vadd.f32 %v396, %v484
    %v486 = vpop.f32.mrf.mxu0
    %v487 = vadd.f32 %v398, %v486
    %488 = vmatmul.bf16.gmra.mxu0 %v192
    %v489 = vpop.f32.mrf.mxu0
    %v490 = vadd.f32 %v401, %v489
    %v491 = vpop.f32.mrf.mxu0
    %v492 = vadd.f32 %v403, %v491
    %493 = vmatmul.bf16.gmra.mxu0 %v194
    %v494 = vpop.f32.mrf.mxu0
    %v495 = vadd.f32 %v406, %v494
    %v496 = vpop.f32.mrf.mxu0
    %v497 = vadd.f32 %v408, %v496
    %498 = vmatmul.bf16.gmra.mxu0 %v196
    %v499 = vpop.f32.mrf.mxu0
    %v500 = vadd.f32 %v411, %v499
    %v501 = vpop.f32.mrf.mxu0
    %v502 = vadd.f32 %v413, %v501
    %503 = vmatmul.bf16.gmra.mxu0 %v198
    %v504 = vpop.f32.mrf.mxu0
    %v505 = vadd.f32 %v416, %v504
    %v506 = vpop.f32.mrf.mxu0
    %v507 = vadd.f32 %v418, %v506
    %508 = vdwg.mxu0
    %v509 = vmax.f32 %v430, 0.0
    %v510 = vmax.f32 %v432, 0.0
    %v511 = vmax.f32 %v435, 0.0
    %v512 = vmax.f32 %v437, 0.0
    %v513 = vmax.f32 %v440, 0.0
    %v514 = vmax.f32 %v442, 0.0
    %v515 = vmax.f32 %v445, 0.0
    %v516 = vmax.f32 %v447, 0.0
    %v517 = vmax.f32 %v450, 0.0
    %v518 = vmax.f32 %v452, 0.0
    %v519 = vmax.f32 %v455, 0.0
    %v520 = vmax.f32 %v457, 0.0
    %v521 = vmax.f32 %v460, 0.0
    %v522 = vmax.f32 %v462, 0.0
    %v523 = vmax.f32 %v465, 0.0
    %v524 = vmax.f32 %v467, 0.0
    %v525 = vmax.f32 %v470, 0.0
    %v526 = vmax.f32 %v472, 0.0
    %v527 = vmax.f32 %v475, 0.0
    %v528 = vmax.f32 %v477, 0.0
    %v529 = vmax.f32 %v480, 0.0
    %v530 = vmax.f32 %v482, 0.0
    %v531 = vmax.f32 %v485, 0.0
    %v532 = vmax.f32 %v487, 0.0
    %v533 = vmax.f32 %v490, 0.0
    %v534 = vmax.f32 %v492, 0.0
    %v535 = vmax.f32 %v495, 0.0
    %v536 = vmax.f32 %v497, 0.0
    %v537 = vmax.f32 %v500, 0.0
    %v538 = vmax.f32 %v502, 0.0
    %v539 = vmax.f32 %v505, 0.0
    %v540 = vmax.f32 %v507, 0.0
    %v541 = vpack.c.bf16 %v510, %v509
    %v542 = vpack.c.bf16 %v512, %v511
    %v543 = vpack.c.bf16 %v514, %v513
    %v544 = vpack.c.bf16 %v516, %v515
    %v545 = vpack.c.bf16 %v518, %v517
    %v546 = vpack.c.bf16 %v520, %v519
    %v547 = vpack.c.bf16 %v522, %v521
    %v548 = vpack.c.bf16 %v524, %v523
    %v549 = vpack.c.bf16 %v526, %v525
    %v550 = vpack.c.bf16 %v528, %v527
    %v551 = vpack.c.bf16 %v530, %v529
    %v552 = vpack.c.bf16 %v532, %v531
    %v553 = vpack.c.bf16 %v534, %v533
    %v554 = vpack.c.bf16 %v536, %v535
    %v555 = vpack.c.bf16 %v538, %v537
    %v556 = vpack.c.bf16 %v540, %v539
    %v557 = vld [vmem:[#allocation7] sm:$0xff]
    %v558 = vld [vmem:[#allocation7 + $0x8] sm:$0xff]
    %v559 = vld [vmem:[#allocation7 + $0x10] sm:$0xff]
    %v560 = vld [vmem:[#allocation7 + $0x18] sm:$0xff]
    %v561 = vld [vmem:[#allocation7 + $0x20] sm:$0xff]
    %v562 = vld [vmem:[#allocation7 + $0x28] sm:$0xff]
    %v563 = vld [vmem:[#allocation7 + $0x30] sm:$0xff]
    %v564 = vld [vmem:[#allocation7 + $0x38] sm:$0xff]
    %v565 = vld [vmem:[#allocation7 + $0x40] sm:$0xff]
    %v566 = vld [vmem:[#allocation7 + $0x48] sm:$0xff]
    %v567 = vld [vmem:[#allocation7 + $0x50] sm:$0xff]
    %v568 = vld [vmem:[#allocation7 + $0x58] sm:$0xff]
    %v569 = vld [vmem:[#allocation7 + $0x60] sm:$0xff]
    %v570 = vld [vmem:[#allocation7 + $0x68] sm:$0xff]
    %v571 = vld [vmem:[#allocation7 + $0x70] sm:$0xff]
    %v572 = vld [vmem:[#allocation7 + $0x78] sm:$0xff]
    %v573 = vld [vmem:[#allocation7 + $0x80] sm:$0xff]
    %v574 = vld [vmem:[#allocation7 + $0x88] sm:$0xff]
    %v575 = vld [vmem:[#allocation7 + $0x90] sm:$0xff]
    %v576 = vld [vmem:[#allocation7 + $0x98] sm:$0xff]
    %v577 = vld [vmem:[#allocation7 + $0xa0] sm:$0xff]
    %v578 = vld [vmem:[#allocation7 + $0xa8] sm:$0xff]
    %v579 = vld [vmem:[#allocation7 + $0xb0] sm:$0xff]
    %v580 = vld [vmem:[#allocation7 + $0xb8] sm:$0xff]
    %v581 = vld [vmem:[#allocation7 + $0xc0] sm:$0xff]
    %v582 = vld [vmem:[#allocation7 + $0xc8] sm:$0xff]
    %v583 = vld [vmem:[#allocation7 + $0xd0] sm:$0xff]
    %v584 = vld [vmem:[#allocation7 + $0xd8] sm:$0xff]
    %v585 = vld [vmem:[#allocation7 + $0xe0] sm:$0xff]
    %v586 = vld [vmem:[#allocation7 + $0xe8] sm:$0xff]
    %v587 = vld [vmem:[#allocation7 + $0xf0] sm:$0xff]
    %v588 = vld [vmem:[#allocation7 + $0xf8] sm:$0xff]
    %v589 = vld [vmem:[#allocation7 + $0x100] sm:$0xff]
    %v590 = vld [vmem:[#allocation7 + $0x108] sm:$0xff]
    %v591 = vld [vmem:[#allocation7 + $0x110] sm:$0xff]
    %v592 = vld [vmem:[#allocation7 + $0x118] sm:$0xff]
    %v593 = vld [vmem:[#allocation7 + $0x120] sm:$0xff]
    %v594 = vld [vmem:[#allocation7 + $0x128] sm:$0xff]
    %v595 = vld [vmem:[#allocation7 + $0x130] sm:$0xff]
    %v596 = vld [vmem:[#allocation7 + $0x138] sm:$0xff]
    %v597 = vld [vmem:[#allocation7 + $0x140] sm:$0xff]
    %v598 = vld [vmem:[#allocation7 + $0x148] sm:$0xff]
    %v599 = vld [vmem:[#allocation7 + $0x150] sm:$0xff]
    %v600 = vld [vmem:[#allocation7 + $0x158] sm:$0xff]
    %v601 = vld [vmem:[#allocation7 + $0x160] sm:$0xff]
    %v602 = vld [vmem:[#allocation7 + $0x168] sm:$0xff]
    %v603 = vld [vmem:[#allocation7 + $0x170] sm:$0xff]
    %v604 = vld [vmem:[#allocation7 + $0x178] sm:$0xff]
    %v605 = vld [vmem:[#allocation7 + $0x180] sm:$0xff]
    %v606 = vld [vmem:[#allocation7 + $0x188] sm:$0xff]
    %v607 = vld [vmem:[#allocation7 + $0x190] sm:$0xff]
    %v608 = vld [vmem:[#allocation7 + $0x198] sm:$0xff]
    %v609 = vld [vmem:[#allocation7 + $0x1a0] sm:$0xff]
    %v610 = vld [vmem:[#allocation7 + $0x1a8] sm:$0xff]
    %v611 = vld [vmem:[#allocation7 + $0x1b0] sm:$0xff]
    %v612 = vld [vmem:[#allocation7 + $0x1b8] sm:$0xff]
    %v613 = vld [vmem:[#allocation7 + $0x1c0] sm:$0xff]
    %v614 = vld [vmem:[#allocation7 + $0x1c8] sm:$0xff]
    %v615 = vld [vmem:[#allocation7 + $0x1d0] sm:$0xff]
    %v616 = vld [vmem:[#allocation7 + $0x1d8] sm:$0xff]
    %v617 = vld [vmem:[#allocation7 + $0x1e0] sm:$0xff]
    %v618 = vld [vmem:[#allocation7 + $0x1e8] sm:$0xff]
    %v619 = vld [vmem:[#allocation7 + $0x1f0] sm:$0xff]
    %v620 = vld [vmem:[#allocation7 + $0x1f8] sm:$0xff]
    %v621 = vld [vmem:[#allocation8] sm:$0xff]
    %v623 = vperm.slane %v621, 0
    %v624 = vperm.slane %v621, 1
    %v625 = vperm.slane %v621, 2
    %v626 = vperm.slane %v621, 3
    %v627 = vperm.slane %v621, 4
    %v628 = vperm.slane %v621, 5
    %v629 = vperm.slane %v621, 6
    %v630 = vperm.slane %v621, 7
    %v703 = vunpack.c.l.b16 %v557
    %v704 = vunpack.c.h.b16 %v557
    %v705 = vunpack.c.l.b16 %v558
    %v706 = vunpack.c.h.b16 %v558
    %v707 = vunpack.c.l.b16 %v559
    %v708 = vunpack.c.h.b16 %v559
    %v709 = vunpack.c.l.b16 %v560
    %v710 = vunpack.c.h.b16 %v560
    %v711 = vunpack.c.l.b16 %v561
    %v712 = vunpack.c.h.b16 %v561
    %v713 = vunpack.c.l.b16 %v562
    %v714 = vunpack.c.h.b16 %v562
    %v715 = vunpack.c.l.b16 %v563
    %v716 = vunpack.c.h.b16 %v563
    %v717 = vunpack.c.l.b16 %v564
    %v718 = vunpack.c.h.b16 %v564
    %v719 = vunpack.c.l.b16 %v565
    %v720 = vunpack.c.h.b16 %v565
    %v721 = vunpack.c.l.b16 %v566
    %v722 = vunpack.c.h.b16 %v566
    %v723 = vunpack.c.l.b16 %v567
    %v724 = vunpack.c.h.b16 %v567
    %v725 = vunpack.c.l.b16 %v568
    %v726 = vunpack.c.h.b16 %v568
    %v727 = vunpack.c.l.b16 %v569
    %v728 = vunpack.c.h.b16 %v569
    %v729 = vunpack.c.l.b16 %v570
    %v730 = vunpack.c.h.b16 %v570
    %v731 = vunpack.c.l.b16 %v571
    %v732 = vunpack.c.h.b16 %v571
    %v733 = vunpack.c.l.b16 %v572
    %v734 = vunpack.c.h.b16 %v572
    %v735 = vunpack.c.l.b16 %v573
    %v736 = vunpack.c.h.b16 %v573
    %v737 = vunpack.c.l.b16 %v574
    %v738 = vunpack.c.h.b16 %v574
    %v739 = vunpack.c.l.b16 %v575
    %v740 = vunpack.c.h.b16 %v575
    %v741 = vunpack.c.l.b16 %v576
    %v742 = vunpack.c.h.b16 %v576
    %v743 = vunpack.c.l.b16 %v577
    %v744 = vunpack.c.h.b16 %v577
    %v745 = vunpack.c.l.b16 %v578
    %v746 = vunpack.c.h.b16 %v578
    %v747 = vunpack.c.l.b16 %v579
    %v748 = vunpack.c.h.b16 %v579
    %v749 = vunpack.c.l.b16 %v580
    %v750 = vunpack.c.h.b16 %v580
    %v751 = vunpack.c.l.b16 %v581
    %v752 = vunpack.c.h.b16 %v581
    %v753 = vunpack.c.l.b16 %v582
    %v754 = vunpack.c.h.b16 %v582
    %v755 = vunpack.c.l.b16 %v583
    %v756 = vunpack.c.h.b16 %v583
    %v757 = vunpack.c.l.b16 %v584
    %v758 = vunpack.c.h.b16 %v584
    %v759 = vunpack.c.l.b16 %v585
    %v760 = vunpack.c.h.b16 %v585
    %v761 = vunpack.c.l.b16 %v586
    %v762 = vunpack.c.h.b16 %v586
    %v763 = vunpack.c.l.b16 %v587
    %v764 = vunpack.c.h.b16 %v587
    %v765 = vunpack.c.l.b16 %v588
    %v766 = vunpack.c.h.b16 %v588
    %v767 = vunpack.c.l.b16 %v589
    %v768 = vunpack.c.h.b16 %v589
    %v769 = vunpack.c.l.b16 %v590
    %v770 = vunpack.c.h.b16 %v590
    %v771 = vunpack.c.l.b16 %v591
    %v772 = vunpack.c.h.b16 %v591
    %v773 = vunpack.c.l.b16 %v592
    %v774 = vunpack.c.h.b16 %v592
    %v775 = vunpack.c.l.b16 %v593
    %v776 = vunpack.c.h.b16 %v593
    %v777 = vunpack.c.l.b16 %v594
    %v778 = vunpack.c.h.b16 %v594
    %v779 = vunpack.c.l.b16 %v595
    %v780 = vunpack.c.h.b16 %v595
    %v781 = vunpack.c.l.b16 %v596
    %v782 = vunpack.c.h.b16 %v596
    %v783 = vunpack.c.l.b16 %v597
    %v784 = vunpack.c.h.b16 %v597
    %v785 = vunpack.c.l.b16 %v598
    %v786 = vunpack.c.h.b16 %v598
    %v787 = vunpack.c.l.b16 %v599
    %v788 = vunpack.c.h.b16 %v599
    %v789 = vunpack.c.l.b16 %v600
    %v790 = vunpack.c.h.b16 %v600
    %v791 = vunpack.c.l.b16 %v601
    %v792 = vunpack.c.h.b16 %v601
    %v793 = vunpack.c.l.b16 %v602
    %v794 = vunpack.c.h.b16 %v602
    %v795 = vunpack.c.l.b16 %v603
    %v796 = vunpack.c.h.b16 %v603
    %v797 = vunpack.c.l.b16 %v604
    %v798 = vunpack.c.h.b16 %v604
    %v799 = vunpack.c.l.b16 %v605
    %v800 = vunpack.c.h.b16 %v605
    %v801 = vunpack.c.l.b16 %v606
    %v802 = vunpack.c.h.b16 %v606
    %v803 = vunpack.c.l.b16 %v607
    %v804 = vunpack.c.h.b16 %v607
    %v805 = vunpack.c.l.b16 %v608
    %v806 = vunpack.c.h.b16 %v608
    %v807 = vunpack.c.l.b16 %v609
    %v808 = vunpack.c.h.b16 %v609
    %v809 = vunpack.c.l.b16 %v610
    %v810 = vunpack.c.h.b16 %v610
    %v811 = vunpack.c.l.b16 %v611
    %v812 = vunpack.c.h.b16 %v611
    %v813 = vunpack.c.l.b16 %v612
    %v814 = vunpack.c.h.b16 %v612
    %v815 = vunpack.c.l.b16 %v613
    %v816 = vunpack.c.h.b16 %v613
    %v817 = vunpack.c.l.b16 %v614
    %v818 = vunpack.c.h.b16 %v614
    %v819 = vunpack.c.l.b16 %v615
    %v820 = vunpack.c.h.b16 %v615
    %v821 = vunpack.c.l.b16 %v616
    %v822 = vunpack.c.h.b16 %v616
    %v823 = vunpack.c.l.b16 %v617
    %v824 = vunpack.c.h.b16 %v617
    %v825 = vunpack.c.l.b16 %v618
    %v826 = vunpack.c.h.b16 %v618
    %v827 = vunpack.c.l.b16 %v619
    %v828 = vunpack.c.h.b16 %v619
    %v829 = vunpack.c.l.b16 %v620
    %v830 = vunpack.c.h.b16 %v620
    %v831 = vpack.c.b16 %v711, %v703
    %v832 = vpack.c.b16 %v712, %v704
    %v833 = vpack.c.b16 %v713, %v705
    %v834 = vpack.c.b16 %v714, %v706
    %v835 = vpack.c.b16 %v715, %v707
    %v836 = vpack.c.b16 %v716, %v708
    %v837 = vpack.c.b16 %v717, %v709
    %v838 = vpack.c.b16 %v718, %v710
    %v839 = vpack.c.b16 %v727, %v719
    %v840 = vpack.c.b16 %v728, %v720
    %v841 = vpack.c.b16 %v729, %v721
    %v842 = vpack.c.b16 %v730, %v722
    %v843 = vpack.c.b16 %v731, %v723
    %v844 = vpack.c.b16 %v732, %v724
    %v845 = vpack.c.b16 %v733, %v725
    %v846 = vpack.c.b16 %v734, %v726
    %v847 = vpack.c.b16 %v743, %v735
    %v848 = vpack.c.b16 %v744, %v736
    %v849 = vpack.c.b16 %v745, %v737
    %v850 = vpack.c.b16 %v746, %v738
    %v851 = vpack.c.b16 %v747, %v739
    %v852 = vpack.c.b16 %v748, %v740
    %v853 = vpack.c.b16 %v749, %v741
    %v854 = vpack.c.b16 %v750, %v742
    %v855 = vpack.c.b16 %v759, %v751
    %v856 = vpack.c.b16 %v760, %v752
    %v857 = vpack.c.b16 %v761, %v753
    %v858 = vpack.c.b16 %v762, %v754
    %v859 = vpack.c.b16 %v763, %v755
    %v860 = vpack.c.b16 %v764, %v756
    %v861 = vpack.c.b16 %v765, %v757
    %v862 = vpack.c.b16 %v766, %v758
    %v863 = vpack.c.b16 %v775, %v767
    %v864 = vpack.c.b16 %v776, %v768
    %v865 = vpack.c.b16 %v777, %v769
    %v866 = vpack.c.b16 %v778, %v770
    %v867 = vpack.c.b16 %v779, %v771
    %v868 = vpack.c.b16 %v780, %v772
    %v869 = vpack.c.b16 %v781, %v773
    %v870 = vpack.c.b16 %v782, %v774
    %v871 = vpack.c.b16 %v791, %v783
    %v872 = vpack.c.b16 %v792, %v784
    %v873 = vpack.c.b16 %v793, %v785
    %v874 = vpack.c.b16 %v794, %v786
    %v875 = vpack.c.b16 %v795, %v787
    %v876 = vpack.c.b16 %v796, %v788
    %v877 = vpack.c.b16 %v797, %v789
    %v878 = vpack.c.b16 %v798, %v790
    %v879 = vpack.c.b16 %v807, %v799
    %v880 = vpack.c.b16 %v808, %v800
    %v881 = vpack.c.b16 %v809, %v801
    %v882 = vpack.c.b16 %v810, %v802
    %v883 = vpack.c.b16 %v811, %v803
    %v884 = vpack.c.b16 %v812, %v804
    %v885 = vpack.c.b16 %v813, %v805
    %v886 = vpack.c.b16 %v814, %v806
    %v887 = vpack.c.b16 %v823, %v815
    %v888 = vpack.c.b16 %v824, %v816
    %v889 = vpack.c.b16 %v825, %v817
    %v890 = vpack.c.b16 %v826, %v818
    %v891 = vpack.c.b16 %v827, %v819
    %v892 = vpack.c.b16 %v828, %v820
    %v893 = vpack.c.b16 %v829, %v821
    %v894 = vpack.c.b16 %v830, %v822
    %959 = vmatpush.bf16.msra.mxu0 %v887
    %960 = vmatpush.bf16.msra.mxu0 %v879
    %961 = vmatpush.bf16.msra.mxu0 %v871
    %962 = vmatpush.bf16.msra.mxu0 %v863
    %963 = vmatpush.bf16.msra.mxu0 %v855
    %964 = vmatpush.bf16.msra.mxu0 %v847
    %965 = vmatpush.bf16.msra.mxu0 %v839
    %966 = vmatpush.bf16.msra.mxu0 %v831
    %967 = vmatmul.bf16.gmra.mxu0 %v541
    %v968 = vpop.f32.mrf.mxu0
    %v969 = vadd.f32 %v623, %v968
    %v970 = vpop.f32.mrf.mxu0
    %v971 = vadd.f32 %v623, %v970
    %972 = vmatmul.bf16.gmra.mxu0 %v542
    %v973 = vpop.f32.mrf.mxu0
    %v974 = vadd.f32 %v623, %v973
    %v975 = vpop.f32.mrf.mxu0
    %v976 = vadd.f32 %v623, %v975
    %977 = vmatmul.bf16.gmra.mxu0 %v543
    %v978 = vpop.f32.mrf.mxu0
    %v979 = vadd.f32 %v623, %v978
    %v980 = vpop.f32.mrf.mxu0
    %v981 = vadd.f32 %v623, %v980
    %982 = vmatmul.bf16.gmra.mxu0 %v544
    %v983 = vpop.f32.mrf.mxu0
    %v984 = vadd.f32 %v623, %v983
    %v985 = vpop.f32.mrf.mxu0
    %v986 = vadd.f32 %v623, %v985
    %987 = vmatmul.bf16.gmra.mxu0 %v545
    %v988 = vpop.f32.mrf.mxu0
    %v989 = vadd.f32 %v623, %v988
    %v990 = vpop.f32.mrf.mxu0
    %v991 = vadd.f32 %v623, %v990
    %992 = vmatmul.bf16.gmra.mxu0 %v546
    %v993 = vpop.f32.mrf.mxu0
    %v994 = vadd.f32 %v623, %v993
    %v995 = vpop.f32.mrf.mxu0
    %v996 = vadd.f32 %v623, %v995
    %997 = vmatmul.bf16.gmra.mxu0 %v547
    %v998 = vpop.f32.mrf.mxu0
    %v999 = vadd.f32 %v623, %v998
    %v1000 = vpop.f32.mrf.mxu0
    %v1001 = vadd.f32 %v623, %v1000
    %1002 = vmatmul.bf16.gmra.mxu0 %v548
    %v1003 = vpop.f32.mrf.mxu0
    %v1004 = vadd.f32 %v623, %v1003
    %v1005 = vpop.f32.mrf.mxu0
    %v1006 = vadd.f32 %v623, %v1005
    %1007 = vmatmul.bf16.gmra.mxu0 %v549
    %v1008 = vpop.f32.mrf.mxu0
    %v1009 = vadd.f32 %v623, %v1008
    %v1010 = vpop.f32.mrf.mxu0
    %v1011 = vadd.f32 %v623, %v1010
    %1012 = vmatmul.bf16.gmra.mxu0 %v550
    %v1013 = vpop.f32.mrf.mxu0
    %v1014 = vadd.f32 %v623, %v1013
    %v1015 = vpop.f32.mrf.mxu0
    %v1016 = vadd.f32 %v623, %v1015
    %1017 = vmatmul.bf16.gmra.mxu0 %v551
    %v1018 = vpop.f32.mrf.mxu0
    %v1019 = vadd.f32 %v623, %v1018
    %v1020 = vpop.f32.mrf.mxu0
    %v1021 = vadd.f32 %v623, %v1020
    %1022 = vmatmul.bf16.gmra.mxu0 %v552
    %v1023 = vpop.f32.mrf.mxu0
    %v1024 = vadd.f32 %v623, %v1023
    %v1025 = vpop.f32.mrf.mxu0
    %v1026 = vadd.f32 %v623, %v1025
    %1027 = vmatmul.bf16.gmra.mxu0 %v553
    %v1028 = vpop.f32.mrf.mxu0
    %v1029 = vadd.f32 %v623, %v1028
    %v1030 = vpop.f32.mrf.mxu0
    %v1031 = vadd.f32 %v623, %v1030
    %1032 = vmatmul.bf16.gmra.mxu0 %v554
    %v1033 = vpop.f32.mrf.mxu0
    %v1034 = vadd.f32 %v623, %v1033
    %v1035 = vpop.f32.mrf.mxu0
    %v1036 = vadd.f32 %v623, %v1035
    %1037 = vmatmul.bf16.gmra.mxu0 %v555
    %v1038 = vpop.f32.mrf.mxu0
    %v1039 = vadd.f32 %v623, %v1038
    %v1040 = vpop.f32.mrf.mxu0
    %v1041 = vadd.f32 %v623, %v1040
    %1042 = vmatmul.bf16.gmra.mxu0 %v556
    %v1043 = vpop.f32.mrf.mxu0
    %v1044 = vadd.f32 %v623, %v1043
    %v1045 = vpop.f32.mrf.mxu0
    %v1046 = vadd.f32 %v623, %v1045
    %1047 = vdwg.mxu0
    %1048 = vmatpush.bf16.msra.mxu0 %v888
    %1049 = vmatpush.bf16.msra.mxu0 %v880
    %1050 = vmatpush.bf16.msra.mxu0 %v872
    %1051 = vmatpush.bf16.msra.mxu0 %v864
    %1052 = vmatpush.bf16.msra.mxu0 %v856
    %1053 = vmatpush.bf16.msra.mxu0 %v848
    %1054 = vmatpush.bf16.msra.mxu0 %v840
    %1055 = vmatpush.bf16.msra.mxu0 %v832
    %1056 = vmatmul.bf16.gmra.mxu0 %v541
    %v1057 = vpop.f32.mrf.mxu0
    %v1058 = vadd.f32 %v624, %v1057
    %v1059 = vpop.f32.mrf.mxu0
    %v1060 = vadd.f32 %v624, %v1059
    %1061 = vmatmul.bf16.gmra.mxu0 %v542
    %v1062 = vpop.f32.mrf.mxu0
    %v1063 = vadd.f32 %v624, %v1062
    %v1064 = vpop.f32.mrf.mxu0
    %v1065 = vadd.f32 %v624, %v1064
    %1066 = vmatmul.bf16.gmra.mxu0 %v543
    %v1067 = vpop.f32.mrf.mxu0
    %v1068 = vadd.f32 %v624, %v1067
    %v1069 = vpop.f32.mrf.mxu0
    %v1070 = vadd.f32 %v624, %v1069
    %1071 = vmatmul.bf16.gmra.mxu0 %v544
    %v1072 = vpop.f32.mrf.mxu0
    %v1073 = vadd.f32 %v624, %v1072
    %v1074 = vpop.f32.mrf.mxu0
    %v1075 = vadd.f32 %v624, %v1074
    %1076 = vmatmul.bf16.gmra.mxu0 %v545
    %v1077 = vpop.f32.mrf.mxu0
    %v1078 = vadd.f32 %v624, %v1077
    %v1079 = vpop.f32.mrf.mxu0
    %v1080 = vadd.f32 %v624, %v1079
    %1081 = vmatmul.bf16.gmra.mxu0 %v546
    %v1082 = vpop.f32.mrf.mxu0
    %v1083 = vadd.f32 %v624, %v1082
    %v1084 = vpop.f32.mrf.mxu0
    %v1085 = vadd.f32 %v624, %v1084
    %1086 = vmatmul.bf16.gmra.mxu0 %v547
    %v1087 = vpop.f32.mrf.mxu0
    %v1088 = vadd.f32 %v624, %v1087
    %v1089 = vpop.f32.mrf.mxu0
    %v1090 = vadd.f32 %v624, %v1089
    %1091 = vmatmul.bf16.gmra.mxu0 %v548
    %v1092 = vpop.f32.mrf.mxu0
    %v1093 = vadd.f32 %v624, %v1092
    %v1094 = vpop.f32.mrf.mxu0
    %v1095 = vadd.f32 %v624, %v1094
    %1096 = vmatmul.bf16.gmra.mxu0 %v549
    %v1097 = vpop.f32.mrf.mxu0
    %v1098 = vadd.f32 %v624, %v1097
    %v1099 = vpop.f32.mrf.mxu0
    %v1100 = vadd.f32 %v624, %v1099
    %1101 = vmatmul.bf16.gmra.mxu0 %v550
    %v1102 = vpop.f32.mrf.mxu0
    %v1103 = vadd.f32 %v624, %v1102
    %v1104 = vpop.f32.mrf.mxu0
    %v1105 = vadd.f32 %v624, %v1104
    %1106 = vmatmul.bf16.gmra.mxu0 %v551
    %v1107 = vpop.f32.mrf.mxu0
    %v1108 = vadd.f32 %v624, %v1107
    %v1109 = vpop.f32.mrf.mxu0
    %v1110 = vadd.f32 %v624, %v1109
    %1111 = vmatmul.bf16.gmra.mxu0 %v552
    %v1112 = vpop.f32.mrf.mxu0
    %v1113 = vadd.f32 %v624, %v1112
    %v1114 = vpop.f32.mrf.mxu0
    %v1115 = vadd.f32 %v624, %v1114
    %1116 = vmatmul.bf16.gmra.mxu0 %v553
    %v1117 = vpop.f32.mrf.mxu0
    %v1118 = vadd.f32 %v624, %v1117
    %v1119 = vpop.f32.mrf.mxu0
    %v1120 = vadd.f32 %v624, %v1119
    %1121 = vmatmul.bf16.gmra.mxu0 %v554
    %v1122 = vpop.f32.mrf.mxu0
    %v1123 = vadd.f32 %v624, %v1122
    %v1124 = vpop.f32.mrf.mxu0
    %v1125 = vadd.f32 %v624, %v1124
    %1126 = vmatmul.bf16.gmra.mxu0 %v555
    %v1127 = vpop.f32.mrf.mxu0
    %v1128 = vadd.f32 %v624, %v1127
    %v1129 = vpop.f32.mrf.mxu0
    %v1130 = vadd.f32 %v624, %v1129
    %1131 = vmatmul.bf16.gmra.mxu0 %v556
    %v1132 = vpop.f32.mrf.mxu0
    %v1133 = vadd.f32 %v624, %v1132
    %v1134 = vpop.f32.mrf.mxu0
    %v1135 = vadd.f32 %v624, %v1134
    %1136 = vdwg.mxu0
    %1137 = vmatpush.bf16.msra.mxu0 %v889
    %1138 = vmatpush.bf16.msra.mxu0 %v881
    %1139 = vmatpush.bf16.msra.mxu0 %v873
    %1140 = vmatpush.bf16.msra.mxu0 %v865
    %1141 = vmatpush.bf16.msra.mxu0 %v857
    %1142 = vmatpush.bf16.msra.mxu0 %v849
    %1143 = vmatpush.bf16.msra.mxu0 %v841
    %1144 = vmatpush.bf16.msra.mxu0 %v833
    %1145 = vmatmul.bf16.gmra.mxu0 %v541
    %v1146 = vpop.f32.mrf.mxu0
    %v1147 = vadd.f32 %v625, %v1146
    %v1148 = vpop.f32.mrf.mxu0
    %v1149 = vadd.f32 %v625, %v1148
    %1150 = vmatmul.bf16.gmra.mxu0 %v542
    %v1151 = vpop.f32.mrf.mxu0
    %v1152 = vadd.f32 %v625, %v1151
    %v1153 = vpop.f32.mrf.mxu0
    %v1154 = vadd.f32 %v625, %v1153
    %1155 = vmatmul.bf16.gmra.mxu0 %v543
    %v1156 = vpop.f32.mrf.mxu0
    %v1157 = vadd.f32 %v625, %v1156
    %v1158 = vpop.f32.mrf.mxu0
    %v1159 = vadd.f32 %v625, %v1158
    %1160 = vmatmul.bf16.gmra.mxu0 %v544
    %v1161 = vpop.f32.mrf.mxu0
    %v1162 = vadd.f32 %v625, %v1161
    %v1163 = vpop.f32.mrf.mxu0
    %v1164 = vadd.f32 %v625, %v1163
    %1165 = vmatmul.bf16.gmra.mxu0 %v545
    %v1166 = vpop.f32.mrf.mxu0
    %v1167 = vadd.f32 %v625, %v1166
    %v1168 = vpop.f32.mrf.mxu0
    %v1169 = vadd.f32 %v625, %v1168
    %1170 = vmatmul.bf16.gmra.mxu0 %v546
    %v1171 = vpop.f32.mrf.mxu0
    %v1172 = vadd.f32 %v625, %v1171
    %v1173 = vpop.f32.mrf.mxu0
    %v1174 = vadd.f32 %v625, %v1173
    %1175 = vmatmul.bf16.gmra.mxu0 %v547
    %v1176 = vpop.f32.mrf.mxu0
    %v1177 = vadd.f32 %v625, %v1176
    %v1178 = vpop.f32.mrf.mxu0
    %v1179 = vadd.f32 %v625, %v1178
    %1180 = vmatmul.bf16.gmra.mxu0 %v548
    %v1181 = vpop.f32.mrf.mxu0
    %v1182 = vadd.f32 %v625, %v1181
    %v1183 = vpop.f32.mrf.mxu0
    %v1184 = vadd.f32 %v625, %v1183
    %1185 = vmatmul.bf16.gmra.mxu0 %v549
    %v1186 = vpop.f32.mrf.mxu0
    %v1187 = vadd.f32 %v625, %v1186
    %v1188 = vpop.f32.mrf.mxu0
    %v1189 = vadd.f32 %v625, %v1188
    %1190 = vmatmul.bf16.gmra.mxu0 %v550
    %v1191 = vpop.f32.mrf.mxu0
    %v1192 = vadd.f32 %v625, %v1191
    %v1193 = vpop.f32.mrf.mxu0
    %v1194 = vadd.f32 %v625, %v1193
    %1195 = vmatmul.bf16.gmra.mxu0 %v551
    %v1196 = vpop.f32.mrf.mxu0
    %v1197 = vadd.f32 %v625, %v1196
    %v1198 = vpop.f32.mrf.mxu0
    %v1199 = vadd.f32 %v625, %v1198
    %1200 = vmatmul.bf16.gmra.mxu0 %v552
    %v1201 = vpop.f32.mrf.mxu0
    %v1202 = vadd.f32 %v625, %v1201
    %v1203 = vpop.f32.mrf.mxu0
    %v1204 = vadd.f32 %v625, %v1203
    %1205 = vmatmul.bf16.gmra.mxu0 %v553
    %v1206 = vpop.f32.mrf.mxu0
    %v1207 = vadd.f32 %v625, %v1206
    %v1208 = vpop.f32.mrf.mxu0
    %v1209 = vadd.f32 %v625, %v1208
    %1210 = vmatmul.bf16.gmra.mxu0 %v554
    %v1211 = vpop.f32.mrf.mxu0
    %v1212 = vadd.f32 %v625, %v1211
    %v1213 = vpop.f32.mrf.mxu0
    %v1214 = vadd.f32 %v625, %v1213
    %1215 = vmatmul.bf16.gmra.mxu0 %v555
    %v1216 = vpop.f32.mrf.mxu0
    %v1217 = vadd.f32 %v625, %v1216
    %v1218 = vpop.f32.mrf.mxu0
    %v1219 = vadd.f32 %v625, %v1218
    %1220 = vmatmul.bf16.gmra.mxu0 %v556
    %v1221 = vpop.f32.mrf.mxu0
    %v1222 = vadd.f32 %v625, %v1221
    %v1223 = vpop.f32.mrf.mxu0
    %v1224 = vadd.f32 %v625, %v1223
    %1225 = vdwg.mxu0
    %1226 = vmatpush.bf16.msra.mxu0 %v890
    %1227 = vmatpush.bf16.msra.mxu0 %v882
    %1228 = vmatpush.bf16.msra.mxu0 %v874
    %1229 = vmatpush.bf16.msra.mxu0 %v866
    %1230 = vmatpush.bf16.msra.mxu0 %v858
    %1231 = vmatpush.bf16.msra.mxu0 %v850
    %1232 = vmatpush.bf16.msra.mxu0 %v842
    %1233 = vmatpush.bf16.msra.mxu0 %v834
    %1234 = vmatmul.bf16.gmra.mxu0 %v541
    %v1235 = vpop.f32.mrf.mxu0
    %v1236 = vadd.f32 %v626, %v1235
    %v1237 = vpop.f32.mrf.mxu0
    %v1238 = vadd.f32 %v626, %v1237
    %1239 = vmatmul.bf16.gmra.mxu0 %v542
    %v1240 = vpop.f32.mrf.mxu0
    %v1241 = vadd.f32 %v626, %v1240
    %v1242 = vpop.f32.mrf.mxu0
    %v1243 = vadd.f32 %v626, %v1242
    %1244 = vmatmul.bf16.gmra.mxu0 %v543
    %v1245 = vpop.f32.mrf.mxu0
    %v1246 = vadd.f32 %v626, %v1245
    %v1247 = vpop.f32.mrf.mxu0
    %v1248 = vadd.f32 %v626, %v1247
    %1249 = vmatmul.bf16.gmra.mxu0 %v544
    %v1250 = vpop.f32.mrf.mxu0
    %v1251 = vadd.f32 %v626, %v1250
    %v1252 = vpop.f32.mrf.mxu0
    %v1253 = vadd.f32 %v626, %v1252
    %1254 = vmatmul.bf16.gmra.mxu0 %v545
    %v1255 = vpop.f32.mrf.mxu0
    %v1256 = vadd.f32 %v626, %v1255
    %v1257 = vpop.f32.mrf.mxu0
    %v1258 = vadd.f32 %v626, %v1257
    %1259 = vmatmul.bf16.gmra.mxu0 %v546
    %v1260 = vpop.f32.mrf.mxu0
    %v1261 = vadd.f32 %v626, %v1260
    %v1262 = vpop.f32.mrf.mxu0
    %v1263 = vadd.f32 %v626, %v1262
    %1264 = vmatmul.bf16.gmra.mxu0 %v547
    %v1265 = vpop.f32.mrf.mxu0
    %v1266 = vadd.f32 %v626, %v1265
    %v1267 = vpop.f32.mrf.mxu0
    %v1268 = vadd.f32 %v626, %v1267
    %1269 = vmatmul.bf16.gmra.mxu0 %v548
    %v1270 = vpop.f32.mrf.mxu0
    %v1271 = vadd.f32 %v626, %v1270
    %v1272 = vpop.f32.mrf.mxu0
    %v1273 = vadd.f32 %v626, %v1272
    %1274 = vmatmul.bf16.gmra.mxu0 %v549
    %v1275 = vpop.f32.mrf.mxu0
    %v1276 = vadd.f32 %v626, %v1275
    %v1277 = vpop.f32.mrf.mxu0
    %v1278 = vadd.f32 %v626, %v1277
    %1279 = vmatmul.bf16.gmra.mxu0 %v550
    %v1280 = vpop.f32.mrf.mxu0
    %v1281 = vadd.f32 %v626, %v1280
    %v1282 = vpop.f32.mrf.mxu0
    %v1283 = vadd.f32 %v626, %v1282
    %1284 = vmatmul.bf16.gmra.mxu0 %v551
    %v1285 = vpop.f32.mrf.mxu0
    %v1286 = vadd.f32 %v626, %v1285
    %v1287 = vpop.f32.mrf.mxu0
    %v1288 = vadd.f32 %v626, %v1287
    %1289 = vmatmul.bf16.gmra.mxu0 %v552
    %v1290 = vpop.f32.mrf.mxu0
    %v1291 = vadd.f32 %v626, %v1290
    %v1292 = vpop.f32.mrf.mxu0
    %v1293 = vadd.f32 %v626, %v1292
    %1294 = vmatmul.bf16.gmra.mxu0 %v553
    %v1295 = vpop.f32.mrf.mxu0
    %v1296 = vadd.f32 %v626, %v1295
    %v1297 = vpop.f32.mrf.mxu0
    %v1298 = vadd.f32 %v626, %v1297
    %1299 = vmatmul.bf16.gmra.mxu0 %v554
    %v1300 = vpop.f32.mrf.mxu0
    %v1301 = vadd.f32 %v626, %v1300
    %v1302 = vpop.f32.mrf.mxu0
    %v1303 = vadd.f32 %v626, %v1302
    %1304 = vmatmul.bf16.gmra.mxu0 %v555
    %v1305 = vpop.f32.mrf.mxu0
    %v1306 = vadd.f32 %v626, %v1305
    %v1307 = vpop.f32.mrf.mxu0
    %v1308 = vadd.f32 %v626, %v1307
    %1309 = vmatmul.bf16.gmra.mxu0 %v556
    %v1310 = vpop.f32.mrf.mxu0
    %v1311 = vadd.f32 %v626, %v1310
    %v1312 = vpop.f32.mrf.mxu0
    %v1313 = vadd.f32 %v626, %v1312
    %1314 = vdwg.mxu0
    %1315 = vmatpush.bf16.msra.mxu0 %v891
    %1316 = vmatpush.bf16.msra.mxu0 %v883
    %1317 = vmatpush.bf16.msra.mxu0 %v875
    %1318 = vmatpush.bf16.msra.mxu0 %v867
    %1319 = vmatpush.bf16.msra.mxu0 %v859
    %1320 = vmatpush.bf16.msra.mxu0 %v851
    %1321 = vmatpush.bf16.msra.mxu0 %v843
    %1322 = vmatpush.bf16.msra.mxu0 %v835
    %1323 = vmatmul.bf16.gmra.mxu0 %v541
    %v1324 = vpop.f32.mrf.mxu0
    %v1325 = vadd.f32 %v627, %v1324
    %v1326 = vpop.f32.mrf.mxu0
    %v1327 = vadd.f32 %v627, %v1326
    %1328 = vmatmul.bf16.gmra.mxu0 %v542
    %v1329 = vpop.f32.mrf.mxu0
    %v1330 = vadd.f32 %v627, %v1329
    %v1331 = vpop.f32.mrf.mxu0
    %v1332 = vadd.f32 %v627, %v1331
    %1333 = vmatmul.bf16.gmra.mxu0 %v543
    %v1334 = vpop.f32.mrf.mxu0
    %v1335 = vadd.f32 %v627, %v1334
    %v1336 = vpop.f32.mrf.mxu0
    %v1337 = vadd.f32 %v627, %v1336
    %1338 = vmatmul.bf16.gmra.mxu0 %v544
    %v1339 = vpop.f32.mrf.mxu0
    %v1340 = vadd.f32 %v627, %v1339
    %v1341 = vpop.f32.mrf.mxu0
    %v1342 = vadd.f32 %v627, %v1341
    %1343 = vmatmul.bf16.gmra.mxu0 %v545
    %v1344 = vpop.f32.mrf.mxu0
    %v1345 = vadd.f32 %v627, %v1344
    %v1346 = vpop.f32.mrf.mxu0
    %v1347 = vadd.f32 %v627, %v1346
    %1348 = vmatmul.bf16.gmra.mxu0 %v546
    %v1349 = vpop.f32.mrf.mxu0
    %v1350 = vadd.f32 %v627, %v1349
    %v1351 = vpop.f32.mrf.mxu0
    %v1352 = vadd.f32 %v627, %v1351
    %1353 = vmatmul.bf16.gmra.mxu0 %v547
    %v1354 = vpop.f32.mrf.mxu0
    %v1355 = vadd.f32 %v627, %v1354
    %v1356 = vpop.f32.mrf.mxu0
    %v1357 = vadd.f32 %v627, %v1356
    %1358 = vmatmul.bf16.gmra.mxu0 %v548
    %v1359 = vpop.f32.mrf.mxu0
    %v1360 = vadd.f32 %v627, %v1359
    %v1361 = vpop.f32.mrf.mxu0
    %v1362 = vadd.f32 %v627, %v1361
    %1363 = vmatmul.bf16.gmra.mxu0 %v549
    %v1364 = vpop.f32.mrf.mxu0
    %v1365 = vadd.f32 %v627, %v1364
    %v1366 = vpop.f32.mrf.mxu0
    %v1367 = vadd.f32 %v627, %v1366
    %1368 = vmatmul.bf16.gmra.mxu0 %v550
    %v1369 = vpop.f32.mrf.mxu0
    %v1370 = vadd.f32 %v627, %v1369
    %v1371 = vpop.f32.mrf.mxu0
    %v1372 = vadd.f32 %v627, %v1371
    %1373 = vmatmul.bf16.gmra.mxu0 %v551
    %v1374 = vpop.f32.mrf.mxu0
    %v1375 = vadd.f32 %v627, %v1374
    %v1376 = vpop.f32.mrf.mxu0
    %v1377 = vadd.f32 %v627, %v1376
    %1378 = vmatmul.bf16.gmra.mxu0 %v552
    %v1379 = vpop.f32.mrf.mxu0
    %v1380 = vadd.f32 %v627, %v1379
    %v1381 = vpop.f32.mrf.mxu0
    %v1382 = vadd.f32 %v627, %v1381
    %1383 = vmatmul.bf16.gmra.mxu0 %v553
    %v1384 = vpop.f32.mrf.mxu0
    %v1385 = vadd.f32 %v627, %v1384
    %v1386 = vpop.f32.mrf.mxu0
    %v1387 = vadd.f32 %v627, %v1386
    %1388 = vmatmul.bf16.gmra.mxu0 %v554
    %v1389 = vpop.f32.mrf.mxu0
    %v1390 = vadd.f32 %v627, %v1389
    %v1391 = vpop.f32.mrf.mxu0
    %v1392 = vadd.f32 %v627, %v1391
    %1393 = vmatmul.bf16.gmra.mxu0 %v555
    %v1394 = vpop.f32.mrf.mxu0
    %v1395 = vadd.f32 %v627, %v1394
    %v1396 = vpop.f32.mrf.mxu0
    %v1397 = vadd.f32 %v627, %v1396
    %1398 = vmatmul.bf16.gmra.mxu0 %v556
    %v1399 = vpop.f32.mrf.mxu0
    %v1400 = vadd.f32 %v627, %v1399
    %v1401 = vpop.f32.mrf.mxu0
    %v1402 = vadd.f32 %v627, %v1401
    %1403 = vdwg.mxu0
    %1404 = vmatpush.bf16.msra.mxu0 %v892
    %1405 = vmatpush.bf16.msra.mxu0 %v884
    %1406 = vmatpush.bf16.msra.mxu0 %v876
    %1407 = vmatpush.bf16.msra.mxu0 %v868
    %1408 = vmatpush.bf16.msra.mxu0 %v860
    %1409 = vmatpush.bf16.msra.mxu0 %v852
    %1410 = vmatpush.bf16.msra.mxu0 %v844
    %1411 = vmatpush.bf16.msra.mxu0 %v836
    %1412 = vmatmul.bf16.gmra.mxu0 %v541
    %v1413 = vpop.f32.mrf.mxu0
    %v1414 = vadd.f32 %v628, %v1413
    %v1415 = vpop.f32.mrf.mxu0
    %v1416 = vadd.f32 %v628, %v1415
    %1417 = vmatmul.bf16.gmra.mxu0 %v542
    %v1418 = vpop.f32.mrf.mxu0
    %v1419 = vadd.f32 %v628, %v1418
    %v1420 = vpop.f32.mrf.mxu0
    %v1421 = vadd.f32 %v628, %v1420
    %1422 = vmatmul.bf16.gmra.mxu0 %v543
    %v1423 = vpop.f32.mrf.mxu0
    %v1424 = vadd.f32 %v628, %v1423
    %v1425 = vpop.f32.mrf.mxu0
    %v1426 = vadd.f32 %v628, %v1425
    %1427 = vmatmul.bf16.gmra.mxu0 %v544
    %v1428 = vpop.f32.mrf.mxu0
    %v1429 = vadd.f32 %v628, %v1428
    %v1430 = vpop.f32.mrf.mxu0
    %v1431 = vadd.f32 %v628, %v1430
    %1432 = vmatmul.bf16.gmra.mxu0 %v545
    %v1433 = vpop.f32.mrf.mxu0
    %v1434 = vadd.f32 %v628, %v1433
    %v1435 = vpop.f32.mrf.mxu0
    %v1436 = vadd.f32 %v628, %v1435
    %1437 = vmatmul.bf16.gmra.mxu0 %v546
    %v1438 = vpop.f32.mrf.mxu0
    %v1439 = vadd.f32 %v628, %v1438
    %v1440 = vpop.f32.mrf.mxu0
    %v1441 = vadd.f32 %v628, %v1440
    %1442 = vmatmul.bf16.gmra.mxu0 %v547
    %v1443 = vpop.f32.mrf.mxu0
    %v1444 = vadd.f32 %v628, %v1443
    %v1445 = vpop.f32.mrf.mxu0
    %v1446 = vadd.f32 %v628, %v1445
    %1447 = vmatmul.bf16.gmra.mxu0 %v548
    %v1448 = vpop.f32.mrf.mxu0
    %v1449 = vadd.f32 %v628, %v1448
    %v1450 = vpop.f32.mrf.mxu0
    %v1451 = vadd.f32 %v628, %v1450
    %1452 = vmatmul.bf16.gmra.mxu0 %v549
    %v1453 = vpop.f32.mrf.mxu0
    %v1454 = vadd.f32 %v628, %v1453
    %v1455 = vpop.f32.mrf.mxu0
    %v1456 = vadd.f32 %v628, %v1455
    %1457 = vmatmul.bf16.gmra.mxu0 %v550
    %v1458 = vpop.f32.mrf.mxu0
    %v1459 = vadd.f32 %v628, %v1458
    %v1460 = vpop.f32.mrf.mxu0
    %v1461 = vadd.f32 %v628, %v1460
    %1462 = vmatmul.bf16.gmra.mxu0 %v551
    %v1463 = vpop.f32.mrf.mxu0
    %v1464 = vadd.f32 %v628, %v1463
    %v1465 = vpop.f32.mrf.mxu0
    %v1466 = vadd.f32 %v628, %v1465
    %1467 = vmatmul.bf16.gmra.mxu0 %v552
    %v1468 = vpop.f32.mrf.mxu0
    %v1469 = vadd.f32 %v628, %v1468
    %v1470 = vpop.f32.mrf.mxu0
    %v1471 = vadd.f32 %v628, %v1470
    %1472 = vmatmul.bf16.gmra.mxu0 %v553
    %v1473 = vpop.f32.mrf.mxu0
    %v1474 = vadd.f32 %v628, %v1473
    %v1475 = vpop.f32.mrf.mxu0
    %v1476 = vadd.f32 %v628, %v1475
    %1477 = vmatmul.bf16.gmra.mxu0 %v554
    %v1478 = vpop.f32.mrf.mxu0
    %v1479 = vadd.f32 %v628, %v1478
    %v1480 = vpop.f32.mrf.mxu0
    %v1481 = vadd.f32 %v628, %v1480
    %1482 = vmatmul.bf16.gmra.mxu0 %v555
    %v1483 = vpop.f32.mrf.mxu0
    %v1484 = vadd.f32 %v628, %v1483
    %v1485 = vpop.f32.mrf.mxu0
    %v1486 = vadd.f32 %v628, %v1485
    %1487 = vmatmul.bf16.gmra.mxu0 %v556
    %v1488 = vpop.f32.mrf.mxu0
    %v1489 = vadd.f32 %v628, %v1488
    %v1490 = vpop.f32.mrf.mxu0
    %v1491 = vadd.f32 %v628, %v1490
    %1492 = vdwg.mxu0
    %1493 = vmatpush.bf16.msra.mxu0 %v893
    %1494 = vmatpush.bf16.msra.mxu0 %v885
    %1495 = vmatpush.bf16.msra.mxu0 %v877
    %1496 = vmatpush.bf16.msra.mxu0 %v869
    %1497 = vmatpush.bf16.msra.mxu0 %v861
    %1498 = vmatpush.bf16.msra.mxu0 %v853
    %1499 = vmatpush.bf16.msra.mxu0 %v845
    %1500 = vmatpush.bf16.msra.mxu0 %v837
    %1501 = vmatmul.bf16.gmra.mxu0 %v541
    %v1502 = vpop.f32.mrf.mxu0
    %v1503 = vadd.f32 %v629, %v1502
    %v1504 = vpop.f32.mrf.mxu0
    %v1505 = vadd.f32 %v629, %v1504
    %1506 = vmatmul.bf16.gmra.mxu0 %v542
    %v1507 = vpop.f32.mrf.mxu0
    %v1508 = vadd.f32 %v629, %v1507
    %v1509 = vpop.f32.mrf.mxu0
    %v1510 = vadd.f32 %v629, %v1509
    %1511 = vmatmul.bf16.gmra.mxu0 %v543
    %v1512 = vpop.f32.mrf.mxu0
    %v1513 = vadd.f32 %v629, %v1512
    %v1514 = vpop.f32.mrf.mxu0
    %v1515 = vadd.f32 %v629, %v1514
    %1516 = vmatmul.bf16.gmra.mxu0 %v544
    %v1517 = vpop.f32.mrf.mxu0
    %v1518 = vadd.f32 %v629, %v1517
    %v1519 = vpop.f32.mrf.mxu0
    %v1520 = vadd.f32 %v629, %v1519
    %1521 = vmatmul.bf16.gmra.mxu0 %v545
    %v1522 = vpop.f32.mrf.mxu0
    %v1523 = vadd.f32 %v629, %v1522
    %v1524 = vpop.f32.mrf.mxu0
    %v1525 = vadd.f32 %v629, %v1524
    %1526 = vmatmul.bf16.gmra.mxu0 %v546
    %v1527 = vpop.f32.mrf.mxu0
    %v1528 = vadd.f32 %v629, %v1527
    %v1529 = vpop.f32.mrf.mxu0
    %v1530 = vadd.f32 %v629, %v1529
    %1531 = vmatmul.bf16.gmra.mxu0 %v547
    %v1532 = vpop.f32.mrf.mxu0
    %v1533 = vadd.f32 %v629, %v1532
    %v1534 = vpop.f32.mrf.mxu0
    %v1535 = vadd.f32 %v629, %v1534
    %1536 = vmatmul.bf16.gmra.mxu0 %v548
    %v1537 = vpop.f32.mrf.mxu0
    %v1538 = vadd.f32 %v629, %v1537
    %v1539 = vpop.f32.mrf.mxu0
    %v1540 = vadd.f32 %v629, %v1539
    %1541 = vmatmul.bf16.gmra.mxu0 %v549
    %v1542 = vpop.f32.mrf.mxu0
    %v1543 = vadd.f32 %v629, %v1542
    %v1544 = vpop.f32.mrf.mxu0
    %v1545 = vadd.f32 %v629, %v1544
    %1546 = vmatmul.bf16.gmra.mxu0 %v550
    %v1547 = vpop.f32.mrf.mxu0
    %v1548 = vadd.f32 %v629, %v1547
    %v1549 = vpop.f32.mrf.mxu0
    %v1550 = vadd.f32 %v629, %v1549
    %1551 = vmatmul.bf16.gmra.mxu0 %v551
    %v1552 = vpop.f32.mrf.mxu0
    %v1553 = vadd.f32 %v629, %v1552
    %v1554 = vpop.f32.mrf.mxu0
    %v1555 = vadd.f32 %v629, %v1554
    %1556 = vmatmul.bf16.gmra.mxu0 %v552
    %v1557 = vpop.f32.mrf.mxu0
    %v1558 = vadd.f32 %v629, %v1557
    %v1559 = vpop.f32.mrf.mxu0
    %v1560 = vadd.f32 %v629, %v1559
    %1561 = vmatmul.bf16.gmra.mxu0 %v553
    %v1562 = vpop.f32.mrf.mxu0
    %v1563 = vadd.f32 %v629, %v1562
    %v1564 = vpop.f32.mrf.mxu0
    %v1565 = vadd.f32 %v629, %v1564
    %1566 = vmatmul.bf16.gmra.mxu0 %v554
    %v1567 = vpop.f32.mrf.mxu0
    %v1568 = vadd.f32 %v629, %v1567
    %v1569 = vpop.f32.mrf.mxu0
    %v1570 = vadd.f32 %v629, %v1569
    %1571 = vmatmul.bf16.gmra.mxu0 %v555
    %v1572 = vpop.f32.mrf.mxu0
    %v1573 = vadd.f32 %v629, %v1572
    %v1574 = vpop.f32.mrf.mxu0
    %v1575 = vadd.f32 %v629, %v1574
    %1576 = vmatmul.bf16.gmra.mxu0 %v556
    %v1577 = vpop.f32.mrf.mxu0
    %v1578 = vadd.f32 %v629, %v1577
    %v1579 = vpop.f32.mrf.mxu0
    %v1580 = vadd.f32 %v629, %v1579
    %1581 = vdwg.mxu0
    %1582 = vmatpush.bf16.msra.mxu0 %v894
    %1583 = vmatpush.bf16.msra.mxu0 %v886
    %1584 = vmatpush.bf16.msra.mxu0 %v878
    %1585 = vmatpush.bf16.msra.mxu0 %v870
    %1586 = vmatpush.bf16.msra.mxu0 %v862
    %1587 = vmatpush.bf16.msra.mxu0 %v854
    %1588 = vmatpush.bf16.msra.mxu0 %v846
    %1589 = vmatpush.bf16.msra.mxu0 %v838
    %1590 = vmatmul.bf16.gmra.mxu0 %v541
    %v1591 = vpop.f32.mrf.mxu0
    %v1592 = vadd.f32 %v630, %v1591
    %v1593 = vpop.f32.mrf.mxu0
    %v1594 = vadd.f32 %v630, %v1593
    %1595 = vmatmul.bf16.gmra.mxu0 %v542
    %v1596 = vpop.f32.mrf.mxu0
    %v1597 = vadd.f32 %v630, %v1596
    %v1598 = vpop.f32.mrf.mxu0
    %v1599 = vadd.f32 %v630, %v1598
    %1600 = vmatmul.bf16.gmra.mxu0 %v543
    %v1601 = vpop.f32.mrf.mxu0
    %v1602 = vadd.f32 %v630, %v1601
    %v1603 = vpop.f32.mrf.mxu0
    %v1604 = vadd.f32 %v630, %v1603
    %1605 = vmatmul.bf16.gmra.mxu0 %v544
    %v1606 = vpop.f32.mrf.mxu0
    %v1607 = vadd.f32 %v630, %v1606
    %v1608 = vpop.f32.mrf.mxu0
    %v1609 = vadd.f32 %v630, %v1608
    %1610 = vmatmul.bf16.gmra.mxu0 %v545
    %v1611 = vpop.f32.mrf.mxu0
    %v1612 = vadd.f32 %v630, %v1611
    %v1613 = vpop.f32.mrf.mxu0
    %v1614 = vadd.f32 %v630, %v1613
    %1615 = vmatmul.bf16.gmra.mxu0 %v546
    %v1616 = vpop.f32.mrf.mxu0
    %v1617 = vadd.f32 %v630, %v1616
    %v1618 = vpop.f32.mrf.mxu0
    %v1619 = vadd.f32 %v630, %v1618
    %1620 = vmatmul.bf16.gmra.mxu0 %v547
    %v1621 = vpop.f32.mrf.mxu0
    %v1622 = vadd.f32 %v630, %v1621
    %v1623 = vpop.f32.mrf.mxu0
    %v1624 = vadd.f32 %v630, %v1623
    %1625 = vmatmul.bf16.gmra.mxu0 %v548
    %v1626 = vpop.f32.mrf.mxu0
    %v1627 = vadd.f32 %v630, %v1626
    %v1628 = vpop.f32.mrf.mxu0
    %v1629 = vadd.f32 %v630, %v1628
    %1630 = vmatmul.bf16.gmra.mxu0 %v549
    %v1631 = vpop.f32.mrf.mxu0
    %v1632 = vadd.f32 %v630, %v1631
    %v1633 = vpop.f32.mrf.mxu0
    %v1634 = vadd.f32 %v630, %v1633
    %1635 = vmatmul.bf16.gmra.mxu0 %v550
    %v1636 = vpop.f32.mrf.mxu0
    %v1637 = vadd.f32 %v630, %v1636
    %v1638 = vpop.f32.mrf.mxu0
    %v1639 = vadd.f32 %v630, %v1638
    %1640 = vmatmul.bf16.gmra.mxu0 %v551
    %v1641 = vpop.f32.mrf.mxu0
    %v1642 = vadd.f32 %v630, %v1641
    %v1643 = vpop.f32.mrf.mxu0
    %v1644 = vadd.f32 %v630, %v1643
    %1645 = vmatmul.bf16.gmra.mxu0 %v552
    %v1646 = vpop.f32.mrf.mxu0
    %v1647 = vadd.f32 %v630, %v1646
    %v1648 = vpop.f32.mrf.mxu0
    %v1649 = vadd.f32 %v630, %v1648
    %1650 = vmatmul.bf16.gmra.mxu0 %v553
    %v1651 = vpop.f32.mrf.mxu0
    %v1652 = vadd.f32 %v630, %v1651
    %v1653 = vpop.f32.mrf.mxu0
    %v1654 = vadd.f32 %v630, %v1653
    %1655 = vmatmul.bf16.gmra.mxu0 %v554
    %v1656 = vpop.f32.mrf.mxu0
    %v1657 = vadd.f32 %v630, %v1656
    %v1658 = vpop.f32.mrf.mxu0
    %v1659 = vadd.f32 %v630, %v1658
    %1660 = vmatmul.bf16.gmra.mxu0 %v555
    %v1661 = vpop.f32.mrf.mxu0
    %v1662 = vadd.f32 %v630, %v1661
    %v1663 = vpop.f32.mrf.mxu0
    %v1664 = vadd.f32 %v630, %v1663
    %1665 = vmatmul.bf16.gmra.mxu0 %v556
    %v1666 = vpop.f32.mrf.mxu0
    %v1667 = vadd.f32 %v630, %v1666
    %v1668 = vpop.f32.mrf.mxu0
    %v1669 = vadd.f32 %v630, %v1668
    %1670 = vdwg.mxu0
    %v1671 = vmax.f32 %v969, 0.0
    %v1672 = vmax.f32 %v1058, 0.0
    %v1673 = vmax.f32 %v1147, 0.0
    %v1674 = vmax.f32 %v1236, 0.0
    %v1675 = vmax.f32 %v1325, 0.0
    %v1676 = vmax.f32 %v1414, 0.0
    %v1677 = vmax.f32 %v1503, 0.0
    %v1678 = vmax.f32 %v1592, 0.0
    %v1679 = vmax.f32 %v971, 0.0
    %v1680 = vmax.f32 %v1060, 0.0
    %v1681 = vmax.f32 %v1149, 0.0
    %v1682 = vmax.f32 %v1238, 0.0
    %v1683 = vmax.f32 %v1327, 0.0
    %v1684 = vmax.f32 %v1416, 0.0
    %v1685 = vmax.f32 %v1505, 0.0
    %v1686 = vmax.f32 %v1594, 0.0
    %v1687 = vmax.f32 %v974, 0.0
    %v1688 = vmax.f32 %v1063, 0.0
    %v1689 = vmax.f32 %v1152, 0.0
    %v1690 = vmax.f32 %v1241, 0.0
    %v1691 = vmax.f32 %v1330, 0.0
    %v1692 = vmax.f32 %v1419, 0.0
    %v1693 = vmax.f32 %v1508, 0.0
    %v1694 = vmax.f32 %v1597, 0.0
    %v1695 = vmax.f32 %v976, 0.0
    %v1696 = vmax.f32 %v1065, 0.0
    %v1697 = vmax.f32 %v1154, 0.0
    %v1698 = vmax.f32 %v1243, 0.0
    %v1699 = vmax.f32 %v1332, 0.0
    %v1700 = vmax.f32 %v1421, 0.0
    %v1701 = vmax.f32 %v1510, 0.0
    %v1702 = vmax.f32 %v1599, 0.0
    %v1703 = vmax.f32 %v979, 0.0
    %v1704 = vmax.f32 %v1068, 0.0
    %v1705 = vmax.f32 %v1157, 0.0
    %v1706 = vmax.f32 %v1246, 0.0
    %v1707 = vmax.f32 %v1335, 0.0
    %v1708 = vmax.f32 %v1424, 0.0
    %v1709 = vmax.f32 %v1513, 0.0
    %v1710 = vmax.f32 %v1602, 0.0
    %v1711 = vmax.f32 %v981, 0.0
    %v1712 = vmax.f32 %v1070, 0.0
    %v1713 = vmax.f32 %v1159, 0.0
    %v1714 = vmax.f32 %v1248, 0.0
    %v1715 = vmax.f32 %v1337, 0.0
    %v1716 = vmax.f32 %v1426, 0.0
    %v1717 = vmax.f32 %v1515, 0.0
    %v1718 = vmax.f32 %v1604, 0.0
    %v1719 = vmax.f32 %v984, 0.0
    %v1720 = vmax.f32 %v1073, 0.0
    %v1721 = vmax.f32 %v1162, 0.0
    %v1722 = vmax.f32 %v1251, 0.0
    %v1723 = vmax.f32 %v1340, 0.0
    %v1724 = vmax.f32 %v1429, 0.0
    %v1725 = vmax.f32 %v1518, 0.0
    %v1726 = vmax.f32 %v1607, 0.0
    %v1727 = vmax.f32 %v986, 0.0
    %v1728 = vmax.f32 %v1075, 0.0
    %v1729 = vmax.f32 %v1164, 0.0
    %v1730 = vmax.f32 %v1253, 0.0
    %v1731 = vmax.f32 %v1342, 0.0
    %v1732 = vmax.f32 %v1431, 0.0
    %v1733 = vmax.f32 %v1520, 0.0
    %v1734 = vmax.f32 %v1609, 0.0
    %v1735 = vmax.f32 %v989, 0.0
    %v1736 = vmax.f32 %v1078, 0.0
    %v1737 = vmax.f32 %v1167, 0.0
    %v1738 = vmax.f32 %v1256, 0.0
    %v1739 = vmax.f32 %v1345, 0.0
    %v1740 = vmax.f32 %v1434, 0.0
    %v1741 = vmax.f32 %v1523, 0.0
    %v1742 = vmax.f32 %v1612, 0.0
    %v1743 = vmax.f32 %v991, 0.0
    %v1744 = vmax.f32 %v1080, 0.0
    %v1745 = vmax.f32 %v1169, 0.0
    %v1746 = vmax.f32 %v1258, 0.0
    %v1747 = vmax.f32 %v1347, 0.0
    %v1748 = vmax.f32 %v1436, 0.0
    %v1749 = vmax.f32 %v1525, 0.0
    %v1750 = vmax.f32 %v1614, 0.0
    %v1751 = vmax.f32 %v994, 0.0
    %v1752 = vmax.f32 %v1083, 0.0
    %v1753 = vmax.f32 %v1172, 0.0
    %v1754 = vmax.f32 %v1261, 0.0
    %v1755 = vmax.f32 %v1350, 0.0
    %v1756 = vmax.f32 %v1439, 0.0
    %v1757 = vmax.f32 %v1528, 0.0
    %v1758 = vmax.f32 %v1617, 0.0
    %v1759 = vmax.f32 %v996, 0.0
    %v1760 = vmax.f32 %v1085, 0.0
    %v1761 = vmax.f32 %v1174, 0.0
    %v1762 = vmax.f32 %v1263, 0.0
    %v1763 = vmax.f32 %v1352, 0.0
    %v1764 = vmax.f32 %v1441, 0.0
    %v1765 = vmax.f32 %v1530, 0.0
    %v1766 = vmax.f32 %v1619, 0.0
    %v1767 = vmax.f32 %v999, 0.0
    %v1768 = vmax.f32 %v1088, 0.0
    %v1769 = vmax.f32 %v1177, 0.0
    %v1770 = vmax.f32 %v1266, 0.0
    %v1771 = vmax.f32 %v1355, 0.0
    %v1772 = vmax.f32 %v1444, 0.0
    %v1773 = vmax.f32 %v1533, 0.0
    %v1774 = vmax.f32 %v1622, 0.0
    %v1775 = vmax.f32 %v1001, 0.0
    %v1776 = vmax.f32 %v1090, 0.0
    %v1777 = vmax.f32 %v1179, 0.0
    %v1778 = vmax.f32 %v1268, 0.0
    %v1779 = vmax.f32 %v1357, 0.0
    %v1780 = vmax.f32 %v1446, 0.0
    %v1781 = vmax.f32 %v1535, 0.0
    %v1782 = vmax.f32 %v1624, 0.0
    %v1783 = vmax.f32 %v1004, 0.0
    %v1784 = vmax.f32 %v1093, 0.0
    %v1785 = vmax.f32 %v1182, 0.0
    %v1786 = vmax.f32 %v1271, 0.0
    %v1787 = vmax.f32 %v1360, 0.0
    %v1788 = vmax.f32 %v1449, 0.0
    %v1789 = vmax.f32 %v1538, 0.0
    %v1790 = vmax.f32 %v1627, 0.0
    %v1791 = vmax.f32 %v1006, 0.0
    %v1792 = vmax.f32 %v1095, 0.0
    %v1793 = vmax.f32 %v1184, 0.0
    %v1794 = vmax.f32 %v1273, 0.0
    %v1795 = vmax.f32 %v1362, 0.0
    %v1796 = vmax.f32 %v1451, 0.0
    %v1797 = vmax.f32 %v1540, 0.0
    %v1798 = vmax.f32 %v1629, 0.0
    %v1799 = vmax.f32 %v1009, 0.0
    %v1800 = vmax.f32 %v1098, 0.0
    %v1801 = vmax.f32 %v1187, 0.0
    %v1802 = vmax.f32 %v1276, 0.0
    %v1803 = vmax.f32 %v1365, 0.0
    %v1804 = vmax.f32 %v1454, 0.0
    %v1805 = vmax.f32 %v1543, 0.0
    %v1806 = vmax.f32 %v1632, 0.0
    %v1807 = vmax.f32 %v1011, 0.0
    %v1808 = vmax.f32 %v1100, 0.0
    %v1809 = vmax.f32 %v1189, 0.0
    %v1810 = vmax.f32 %v1278, 0.0
    %v1811 = vmax.f32 %v1367, 0.0
    %v1812 = vmax.f32 %v1456, 0.0
    %v1813 = vmax.f32 %v1545, 0.0
    %v1814 = vmax.f32 %v1634, 0.0
    %v1815 = vmax.f32 %v1014, 0.0
    %v1816 = vmax.f32 %v1103, 0.0
    %v1817 = vmax.f32 %v1192, 0.0
    %v1818 = vmax.f32 %v1281, 0.0
    %v1819 = vmax.f32 %v1370, 0.0
    %v1820 = vmax.f32 %v1459, 0.0
    %v1821 = vmax.f32 %v1548, 0.0
    %v1822 = vmax.f32 %v1637, 0.0
    %v1823 = vmax.f32 %v1016, 0.0
    %v1824 = vmax.f32 %v1105, 0.0
    %v1825 = vmax.f32 %v1194, 0.0
    %v1826 = vmax.f32 %v1283, 0.0
    %v1827 = vmax.f32 %v1372, 0.0
    %v1828 = vmax.f32 %v1461, 0.0
    %v1829 = vmax.f32 %v1550, 0.0
    %v1830 = vmax.f32 %v1639, 0.0
    %v1831 = vmax.f32 %v1019, 0.0
    %v1832 = vmax.f32 %v1108, 0.0
    %v1833 = vmax.f32 %v1197, 0.0
    %v1834 = vmax.f32 %v1286, 0.0
    %v1835 = vmax.f32 %v1375, 0.0
    %v1836 = vmax.f32 %v1464, 0.0
    %v1837 = vmax.f32 %v1553, 0.0
    %v1838 = vmax.f32 %v1642, 0.0
    %v1839 = vmax.f32 %v1021, 0.0
    %v1840 = vmax.f32 %v1110, 0.0
    %v1841 = vmax.f32 %v1199, 0.0
    %v1842 = vmax.f32 %v1288, 0.0
    %v1843 = vmax.f32 %v1377, 0.0
    %v1844 = vmax.f32 %v1466, 0.0
    %v1845 = vmax.f32 %v1555, 0.0
    %v1846 = vmax.f32 %v1644, 0.0
    %v1847 = vmax.f32 %v1024, 0.0
    %v1848 = vmax.f32 %v1113, 0.0
    %v1849 = vmax.f32 %v1202, 0.0
    %v1850 = vmax.f32 %v1291, 0.0
    %v1851 = vmax.f32 %v1380, 0.0
    %v1852 = vmax.f32 %v1469, 0.0
    %v1853 = vmax.f32 %v1558, 0.0
    %v1854 = vmax.f32 %v1647, 0.0
    %v1855 = vmax.f32 %v1026, 0.0
    %v1856 = vmax.f32 %v1115, 0.0
    %v1857 = vmax.f32 %v1204, 0.0
    %v1858 = vmax.f32 %v1293, 0.0
    %v1859 = vmax.f32 %v1382, 0.0
    %v1860 = vmax.f32 %v1471, 0.0
    %v1861 = vmax.f32 %v1560, 0.0
    %v1862 = vmax.f32 %v1649, 0.0
    %v1863 = vmax.f32 %v1029, 0.0
    %v1864 = vmax.f32 %v1118, 0.0
    %v1865 = vmax.f32 %v1207, 0.0
    %v1866 = vmax.f32 %v1296, 0.0
    %v1867 = vmax.f32 %v1385, 0.0
    %v1868 = vmax.f32 %v1474, 0.0
    %v1869 = vmax.f32 %v1563, 0.0
    %v1870 = vmax.f32 %v1652, 0.0
    %v1871 = vmax.f32 %v1031, 0.0
    %v1872 = vmax.f32 %v1120, 0.0
    %v1873 = vmax.f32 %v1209, 0.0
    %v1874 = vmax.f32 %v1298, 0.0
    %v1875 = vmax.f32 %v1387, 0.0
    %v1876 = vmax.f32 %v1476, 0.0
    %v1877 = vmax.f32 %v1565, 0.0
    %v1878 = vmax.f32 %v1654, 0.0
    %v1879 = vmax.f32 %v1034, 0.0
    %v1880 = vmax.f32 %v1123, 0.0
    %v1881 = vmax.f32 %v1212, 0.0
    %v1882 = vmax.f32 %v1301, 0.0
    %v1883 = vmax.f32 %v1390, 0.0
    %v1884 = vmax.f32 %v1479, 0.0
    %v1885 = vmax.f32 %v1568, 0.0
    %v1886 = vmax.f32 %v1657, 0.0
    %v1887 = vmax.f32 %v1036, 0.0
    %v1888 = vmax.f32 %v1125, 0.0
    %v1889 = vmax.f32 %v1214, 0.0
    %v1890 = vmax.f32 %v1303, 0.0
    %v1891 = vmax.f32 %v1392, 0.0
    %v1892 = vmax.f32 %v1481, 0.0
    %v1893 = vmax.f32 %v1570, 0.0
    %v1894 = vmax.f32 %v1659, 0.0
    %v1895 = vmax.f32 %v1039, 0.0
    %v1896 = vmax.f32 %v1128, 0.0
    %v1897 = vmax.f32 %v1217, 0.0
    %v1898 = vmax.f32 %v1306, 0.0
    %v1899 = vmax.f32 %v1395, 0.0
    %v1900 = vmax.f32 %v1484, 0.0
    %v1901 = vmax.f32 %v1573, 0.0
    %v1902 = vmax.f32 %v1662, 0.0
    %v1903 = vmax.f32 %v1041, 0.0
    %v1904 = vmax.f32 %v1130, 0.0
    %v1905 = vmax.f32 %v1219, 0.0
    %v1906 = vmax.f32 %v1308, 0.0
    %v1907 = vmax.f32 %v1397, 0.0
    %v1908 = vmax.f32 %v1486, 0.0
    %v1909 = vmax.f32 %v1575, 0.0
    %v1910 = vmax.f32 %v1664, 0.0
    %v1911 = vmax.f32 %v1044, 0.0
    %v1912 = vmax.f32 %v1133, 0.0
    %v1913 = vmax.f32 %v1222, 0.0
    %v1914 = vmax.f32 %v1311, 0.0
    %v1915 = vmax.f32 %v1400, 0.0
    %v1916 = vmax.f32 %v1489, 0.0
    %v1917 = vmax.f32 %v1578, 0.0
    %v1918 = vmax.f32 %v1667, 0.0
    %v1919 = vmax.f32 %v1046, 0.0
    %v1920 = vmax.f32 %v1135, 0.0
    %v1921 = vmax.f32 %v1224, 0.0
    %v1922 = vmax.f32 %v1313, 0.0
    %v1923 = vmax.f32 %v1402, 0.0
    %v1924 = vmax.f32 %v1491, 0.0
    %v1925 = vmax.f32 %v1580, 0.0
    %v1926 = vmax.f32 %v1669, 0.0
    %v1927 = vpack.c.bf16 %v1679, %v1671
    %v1928 = vpack.c.bf16 %v1680, %v1672
    %v1929 = vpack.c.bf16 %v1681, %v1673
    %v1930 = vpack.c.bf16 %v1682, %v1674
    %v1931 = vpack.c.bf16 %v1683, %v1675
    %v1932 = vpack.c.bf16 %v1684, %v1676
    %v1933 = vpack.c.bf16 %v1685, %v1677
    %v1934 = vpack.c.bf16 %v1686, %v1678
    %v1935 = vpack.c.bf16 %v1695, %v1687
    %v1936 = vpack.c.bf16 %v1696, %v1688
    %v1937 = vpack.c.bf16 %v1697, %v1689
    %v1938 = vpack.c.bf16 %v1698, %v1690
    %v1939 = vpack.c.bf16 %v1699, %v1691
    %v1940 = vpack.c.bf16 %v1700, %v1692
    %v1941 = vpack.c.bf16 %v1701, %v1693
    %v1942 = vpack.c.bf16 %v1702, %v1694
    %v1943 = vpack.c.bf16 %v1711, %v1703
    %v1944 = vpack.c.bf16 %v1712, %v1704
    %v1945 = vpack.c.bf16 %v1713, %v1705
    %v1946 = vpack.c.bf16 %v1714, %v1706
    %v1947 = vpack.c.bf16 %v1715, %v1707
    %v1948 = vpack.c.bf16 %v1716, %v1708
    %v1949 = vpack.c.bf16 %v1717, %v1709
    %v1950 = vpack.c.bf16 %v1718, %v1710
    %v1951 = vpack.c.bf16 %v1727, %v1719
    %v1952 = vpack.c.bf16 %v1728, %v1720
    %v1953 = vpack.c.bf16 %v1729, %v1721
    %v1954 = vpack.c.bf16 %v1730, %v1722
    %v1955 = vpack.c.bf16 %v1731, %v1723
    %v1956 = vpack.c.bf16 %v1732, %v1724
    %v1957 = vpack.c.bf16 %v1733, %v1725
    %v1958 = vpack.c.bf16 %v1734, %v1726
    %v1959 = vpack.c.bf16 %v1743, %v1735
    %v1960 = vpack.c.bf16 %v1744, %v1736
    %v1961 = vpack.c.bf16 %v1745, %v1737
    %v1962 = vpack.c.bf16 %v1746, %v1738
    %v1963 = vpack.c.bf16 %v1747, %v1739
    %v1964 = vpack.c.bf16 %v1748, %v1740
    %v1965 = vpack.c.bf16 %v1749, %v1741
    %v1966 = vpack.c.bf16 %v1750, %v1742
    %v1967 = vpack.c.bf16 %v1759, %v1751
    %v1968 = vpack.c.bf16 %v1760, %v1752
    %v1969 = vpack.c.bf16 %v1761, %v1753
    %v1970 = vpack.c.bf16 %v1762, %v1754
    %v1971 = vpack.c.bf16 %v1763, %v1755
    %v1972 = vpack.c.bf16 %v1764, %v1756
    %v1973 = vpack.c.bf16 %v1765, %v1757
    %v1974 = vpack.c.bf16 %v1766, %v1758
    %v1975 = vpack.c.bf16 %v1775, %v1767
    %v1976 = vpack.c.bf16 %v1776, %v1768
    %v1977 = vpack.c.bf16 %v1777, %v1769
    %v1978 = vpack.c.bf16 %v1778, %v1770
    %v1979 = vpack.c.bf16 %v1779, %v1771
    %v1980 = vpack.c.bf16 %v1780, %v1772
    %v1981 = vpack.c.bf16 %v1781, %v1773
    %v1982 = vpack.c.bf16 %v1782, %v1774
    %v1983 = vpack.c.bf16 %v1791, %v1783
    %v1984 = vpack.c.bf16 %v1792, %v1784
    %v1985 = vpack.c.bf16 %v1793, %v1785
    %v1986 = vpack.c.bf16 %v1794, %v1786
    %v1987 = vpack.c.bf16 %v1795, %v1787
    %v1988 = vpack.c.bf16 %v1796, %v1788
    %v1989 = vpack.c.bf16 %v1797, %v1789
    %v1990 = vpack.c.bf16 %v1798, %v1790
    %v1991 = vpack.c.bf16 %v1807, %v1799
    %v1992 = vpack.c.bf16 %v1808, %v1800
    %v1993 = vpack.c.bf16 %v1809, %v1801
    %v1994 = vpack.c.bf16 %v1810, %v1802
    %v1995 = vpack.c.bf16 %v1811, %v1803
    %v1996 = vpack.c.bf16 %v1812, %v1804
    %v1997 = vpack.c.bf16 %v1813, %v1805
    %v1998 = vpack.c.bf16 %v1814, %v1806
    %v1999 = vpack.c.bf16 %v1823, %v1815
    %v2000 = vpack.c.bf16 %v1824, %v1816
    %v2001 = vpack.c.bf16 %v1825, %v1817
    %v2002 = vpack.c.bf16 %v1826, %v1818
    %v2003 = vpack.c.bf16 %v1827, %v1819
    %v2004 = vpack.c.bf16 %v1828, %v1820
    %v2005 = vpack.c.bf16 %v1829, %v1821
    %v2006 = vpack.c.bf16 %v1830, %v1822
    %v2007 = vpack.c.bf16 %v1839, %v1831
    %v2008 = vpack.c.bf16 %v1840, %v1832
    %v2009 = vpack.c.bf16 %v1841, %v1833
    %v2010 = vpack.c.bf16 %v1842, %v1834
    %v2011 = vpack.c.bf16 %v1843, %v1835
    %v2012 = vpack.c.bf16 %v1844, %v1836
    %v2013 = vpack.c.bf16 %v1845, %v1837
    %v2014 = vpack.c.bf16 %v1846, %v1838
    %v2015 = vpack.c.bf16 %v1855, %v1847
    %v2016 = vpack.c.bf16 %v1856, %v1848
    %v2017 = vpack.c.bf16 %v1857, %v1849
    %v2018 = vpack.c.bf16 %v1858, %v1850
    %v2019 = vpack.c.bf16 %v1859, %v1851
    %v2020 = vpack.c.bf16 %v1860, %v1852
    %v2021 = vpack.c.bf16 %v1861, %v1853
    %v2022 = vpack.c.bf16 %v1862, %v1854
    %v2023 = vpack.c.bf16 %v1871, %v1863
    %v2024 = vpack.c.bf16 %v1872, %v1864
    %v2025 = vpack.c.bf16 %v1873, %v1865
    %v2026 = vpack.c.bf16 %v1874, %v1866
    %v2027 = vpack.c.bf16 %v1875, %v1867
    %v2028 = vpack.c.bf16 %v1876, %v1868
    %v2029 = vpack.c.bf16 %v1877, %v1869
    %v2030 = vpack.c.bf16 %v1878, %v1870
    %v2031 = vpack.c.bf16 %v1887, %v1879
    %v2032 = vpack.c.bf16 %v1888, %v1880
    %v2033 = vpack.c.bf16 %v1889, %v1881
    %v2034 = vpack.c.bf16 %v1890, %v1882
    %v2035 = vpack.c.bf16 %v1891, %v1883
    %v2036 = vpack.c.bf16 %v1892, %v1884
    %v2037 = vpack.c.bf16 %v1893, %v1885
    %v2038 = vpack.c.bf16 %v1894, %v1886
    %v2039 = vpack.c.bf16 %v1903, %v1895
    %v2040 = vpack.c.bf16 %v1904, %v1896
    %v2041 = vpack.c.bf16 %v1905, %v1897
    %v2042 = vpack.c.bf16 %v1906, %v1898
    %v2043 = vpack.c.bf16 %v1907, %v1899
    %v2044 = vpack.c.bf16 %v1908, %v1900
    %v2045 = vpack.c.bf16 %v1909, %v1901
    %v2046 = vpack.c.bf16 %v1910, %v1902
    %v2047 = vpack.c.bf16 %v1919, %v1911
    %v2048 = vpack.c.bf16 %v1920, %v1912
    %v2049 = vpack.c.bf16 %v1921, %v1913
    %v2050 = vpack.c.bf16 %v1922, %v1914
    %v2051 = vpack.c.bf16 %v1923, %v1915
    %v2052 = vpack.c.bf16 %v1924, %v1916
    %v2053 = vpack.c.bf16 %v1925, %v1917
    %v2054 = vpack.c.bf16 %v1926, %v1918
    %v2055 = vld [vmem:[#allocation10] sm:$0xff]
    %v2056 = vld [vmem:[#allocation10 + $0x8] sm:$0xff]
    %v2057 = vld [vmem:[#allocation10 + $0x10] sm:$0xff]
    %v2058 = vld [vmem:[#allocation10 + $0x18] sm:$0xff]
    %v2059 = vld [vmem:[#allocation10 + $0x20] sm:$0xff]
    %v2060 = vld [vmem:[#allocation10 + $0x28] sm:$0xff]
    %v2061 = vld [vmem:[#allocation10 + $0x30] sm:$0xff]
    %v2062 = vld [vmem:[#allocation10 + $0x38] sm:$0xff]
    %v2063 = vld [vmem:[#allocation10 + $0x40] sm:$0xff]
    %v2064 = vld [vmem:[#allocation10 + $0x48] sm:$0xff]
    %v2065 = vld [vmem:[#allocation10 + $0x50] sm:$0xff]
    %v2066 = vld [vmem:[#allocation10 + $0x58] sm:$0xff]
    %v2067 = vld [vmem:[#allocation10 + $0x60] sm:$0xff]
    %v2068 = vld [vmem:[#allocation10 + $0x68] sm:$0xff]
    %v2069 = vld [vmem:[#allocation10 + $0x70] sm:$0xff]
    %v2070 = vld [vmem:[#allocation10 + $0x78] sm:$0xff]
    %v2071 = vld [vmem:[#allocation10 + $0x80] sm:$0xff]
    %v2072 = vld [vmem:[#allocation10 + $0x88] sm:$0xff]
    %v2073 = vld [vmem:[#allocation10 + $0x90] sm:$0xff]
    %v2074 = vld [vmem:[#allocation10 + $0x98] sm:$0xff]
    %v2075 = vld [vmem:[#allocation10 + $0xa0] sm:$0xff]
    %v2076 = vld [vmem:[#allocation10 + $0xa8] sm:$0xff]
    %v2077 = vld [vmem:[#allocation10 + $0xb0] sm:$0xff]
    %v2078 = vld [vmem:[#allocation10 + $0xb8] sm:$0xff]
    %v2079 = vld [vmem:[#allocation10 + $0xc0] sm:$0xff]
    %v2080 = vld [vmem:[#allocation10 + $0xc8] sm:$0xff]
    %v2081 = vld [vmem:[#allocation10 + $0xd0] sm:$0xff]
    %v2082 = vld [vmem:[#allocation10 + $0xd8] sm:$0xff]
    %v2083 = vld [vmem:[#allocation10 + $0xe0] sm:$0xff]
    %v2084 = vld [vmem:[#allocation10 + $0xe8] sm:$0xff]
    %v2085 = vld [vmem:[#allocation10 + $0xf0] sm:$0xff]
    %v2086 = vld [vmem:[#allocation10 + $0xf8] sm:$0xff]
    %v2087 = vld [vmem:[#allocation10 + $0x100] sm:$0xff]
    %v2088 = vld [vmem:[#allocation10 + $0x108] sm:$0xff]
    %v2089 = vld [vmem:[#allocation10 + $0x110] sm:$0xff]
    %v2090 = vld [vmem:[#allocation10 + $0x118] sm:$0xff]
    %v2091 = vld [vmem:[#allocation10 + $0x120] sm:$0xff]
    %v2092 = vld [vmem:[#allocation10 + $0x128] sm:$0xff]
    %v2093 = vld [vmem:[#allocation10 + $0x130] sm:$0xff]
    %v2094 = vld [vmem:[#allocation10 + $0x138] sm:$0xff]
    %v2095 = vld [vmem:[#allocation10 + $0x140] sm:$0xff]
    %v2096 = vld [vmem:[#allocation10 + $0x148] sm:$0xff]
    %v2097 = vld [vmem:[#allocation10 + $0x150] sm:$0xff]
    %v2098 = vld [vmem:[#allocation10 + $0x158] sm:$0xff]
    %v2099 = vld [vmem:[#allocation10 + $0x160] sm:$0xff]
    %v2100 = vld [vmem:[#allocation10 + $0x168] sm:$0xff]
    %v2101 = vld [vmem:[#allocation10 + $0x170] sm:$0xff]
    %v2102 = vld [vmem:[#allocation10 + $0x178] sm:$0xff]
    %v2103 = vld [vmem:[#allocation10 + $0x180] sm:$0xff]
    %v2104 = vld [vmem:[#allocation10 + $0x188] sm:$0xff]
    %v2105 = vld [vmem:[#allocation10 + $0x190] sm:$0xff]
    %v2106 = vld [vmem:[#allocation10 + $0x198] sm:$0xff]
    %v2107 = vld [vmem:[#allocation10 + $0x1a0] sm:$0xff]
    %v2108 = vld [vmem:[#allocation10 + $0x1a8] sm:$0xff]
    %v2109 = vld [vmem:[#allocation10 + $0x1b0] sm:$0xff]
    %v2110 = vld [vmem:[#allocation10 + $0x1b8] sm:$0xff]
    %v2111 = vld [vmem:[#allocation10 + $0x1c0] sm:$0xff]
    %v2112 = vld [vmem:[#allocation10 + $0x1c8] sm:$0xff]
    %v2113 = vld [vmem:[#allocation10 + $0x1d0] sm:$0xff]
    %v2114 = vld [vmem:[#allocation10 + $0x1d8] sm:$0xff]
    %v2115 = vld [vmem:[#allocation10 + $0x1e0] sm:$0xff]
    %v2116 = vld [vmem:[#allocation10 + $0x1e8] sm:$0xff]
    %v2117 = vld [vmem:[#allocation10 + $0x1f0] sm:$0xff]
    %v2118 = vld [vmem:[#allocation10 + $0x1f8] sm:$0xff]
    %v2119 = vld [vmem:[#allocation10 + $0x200] sm:$0xff]
    %v2120 = vld [vmem:[#allocation10 + $0x208] sm:$0xff]
    %v2121 = vld [vmem:[#allocation10 + $0x210] sm:$0xff]
    %v2122 = vld [vmem:[#allocation10 + $0x218] sm:$0xff]
    %v2123 = vld [vmem:[#allocation10 + $0x220] sm:$0xff]
    %v2124 = vld [vmem:[#allocation10 + $0x228] sm:$0xff]
    %v2125 = vld [vmem:[#allocation10 + $0x230] sm:$0xff]
    %v2126 = vld [vmem:[#allocation10 + $0x238] sm:$0xff]
    %v2127 = vld [vmem:[#allocation10 + $0x240] sm:$0xff]
    %v2128 = vld [vmem:[#allocation10 + $0x248] sm:$0xff]
    %v2129 = vld [vmem:[#allocation10 + $0x250] sm:$0xff]
    %v2130 = vld [vmem:[#allocation10 + $0x258] sm:$0xff]
    %v2131 = vld [vmem:[#allocation10 + $0x260] sm:$0xff]
    %v2132 = vld [vmem:[#allocation10 + $0x268] sm:$0xff]
    %v2133 = vld [vmem:[#allocation10 + $0x270] sm:$0xff]
    %v2134 = vld [vmem:[#allocation10 + $0x278] sm:$0xff]
    %v2135 = vld [vmem:[#allocation10 + $0x280] sm:$0xff]
    %v2136 = vld [vmem:[#allocation10 + $0x288] sm:$0xff]
    %v2137 = vld [vmem:[#allocation10 + $0x290] sm:$0xff]
    %v2138 = vld [vmem:[#allocation10 + $0x298] sm:$0xff]
    %v2139 = vld [vmem:[#allocation10 + $0x2a0] sm:$0xff]
    %v2140 = vld [vmem:[#allocation10 + $0x2a8] sm:$0xff]
    %v2141 = vld [vmem:[#allocation10 + $0x2b0] sm:$0xff]
    %v2142 = vld [vmem:[#allocation10 + $0x2b8] sm:$0xff]
    %v2143 = vld [vmem:[#allocation10 + $0x2c0] sm:$0xff]
    %v2144 = vld [vmem:[#allocation10 + $0x2c8] sm:$0xff]
    %v2145 = vld [vmem:[#allocation10 + $0x2d0] sm:$0xff]
    %v2146 = vld [vmem:[#allocation10 + $0x2d8] sm:$0xff]
    %v2147 = vld [vmem:[#allocation10 + $0x2e0] sm:$0xff]
    %v2148 = vld [vmem:[#allocation10 + $0x2e8] sm:$0xff]
    %v2149 = vld [vmem:[#allocation10 + $0x2f0] sm:$0xff]
    %v2150 = vld [vmem:[#allocation10 + $0x2f8] sm:$0xff]
    %v2151 = vld [vmem:[#allocation10 + $0x300] sm:$0xff]
    %v2152 = vld [vmem:[#allocation10 + $0x308] sm:$0xff]
    %v2153 = vld [vmem:[#allocation10 + $0x310] sm:$0xff]
    %v2154 = vld [vmem:[#allocation10 + $0x318] sm:$0xff]
    %v2155 = vld [vmem:[#allocation10 + $0x320] sm:$0xff]
    %v2156 = vld [vmem:[#allocation10 + $0x328] sm:$0xff]
    %v2157 = vld [vmem:[#allocation10 + $0x330] sm:$0xff]
    %v2158 = vld [vmem:[#allocation10 + $0x338] sm:$0xff]
    %v2159 = vld [vmem:[#allocation10 + $0x340] sm:$0xff]
    %v2160 = vld [vmem:[#allocation10 + $0x348] sm:$0xff]
    %v2161 = vld [vmem:[#allocation10 + $0x350] sm:$0xff]
    %v2162 = vld [vmem:[#allocation10 + $0x358] sm:$0xff]
    %v2163 = vld [vmem:[#allocation10 + $0x360] sm:$0xff]
    %v2164 = vld [vmem:[#allocation10 + $0x368] sm:$0xff]
    %v2165 = vld [vmem:[#allocation10 + $0x370] sm:$0xff]
    %v2166 = vld [vmem:[#allocation10 + $0x378] sm:$0xff]
    %v2167 = vld [vmem:[#allocation10 + $0x380] sm:$0xff]
    %v2168 = vld [vmem:[#allocation10 + $0x388] sm:$0xff]
    %v2169 = vld [vmem:[#allocation10 + $0x390] sm:$0xff]
    %v2170 = vld [vmem:[#allocation10 + $0x398] sm:$0xff]
    %v2171 = vld [vmem:[#allocation10 + $0x3a0] sm:$0xff]
    %v2172 = vld [vmem:[#allocation10 + $0x3a8] sm:$0xff]
    %v2173 = vld [vmem:[#allocation10 + $0x3b0] sm:$0xff]
    %v2174 = vld [vmem:[#allocation10 + $0x3b8] sm:$0xff]
    %v2175 = vld [vmem:[#allocation10 + $0x3c0] sm:$0xff]
    %v2176 = vld [vmem:[#allocation10 + $0x3c8] sm:$0xff]
    %v2177 = vld [vmem:[#allocation10 + $0x3d0] sm:$0xff]
    %v2178 = vld [vmem:[#allocation10 + $0x3d8] sm:$0xff]
    %v2179 = vld [vmem:[#allocation10 + $0x3e0] sm:$0xff]
    %v2180 = vld [vmem:[#allocation10 + $0x3e8] sm:$0xff]
    %v2181 = vld [vmem:[#allocation10 + $0x3f0] sm:$0xff]
    %v2182 = vld [vmem:[#allocation10 + $0x3f8] sm:$0xff]
    %v2183 = vld [vmem:[%s6] sm:$0x3]
    %v2185 = vperm.slane %v2183, 0
    %v2186 = vperm.slane %v2183, 1
    %v2317 = vunpack.c.l.b16 %v2055
    %v2318 = vunpack.c.h.b16 %v2055
    %v2319 = vunpack.c.l.b16 %v2056
    %v2320 = vunpack.c.h.b16 %v2056
    %v2321 = vunpack.c.l.b16 %v2057
    %v2322 = vunpack.c.h.b16 %v2057
    %v2323 = vunpack.c.l.b16 %v2058
    %v2324 = vunpack.c.h.b16 %v2058
    %v2325 = vunpack.c.l.b16 %v2059
    %v2326 = vunpack.c.h.b16 %v2059
    %v2327 = vunpack.c.l.b16 %v2060
    %v2328 = vunpack.c.h.b16 %v2060
    %v2329 = vunpack.c.l.b16 %v2061
    %v2330 = vunpack.c.h.b16 %v2061
    %v2331 = vunpack.c.l.b16 %v2062
    %v2332 = vunpack.c.h.b16 %v2062
    %v2333 = vunpack.c.l.b16 %v2063
    %v2334 = vunpack.c.h.b16 %v2063
    %v2335 = vunpack.c.l.b16 %v2064
    %v2336 = vunpack.c.h.b16 %v2064
    %v2337 = vunpack.c.l.b16 %v2065
    %v2338 = vunpack.c.h.b16 %v2065
    %v2339 = vunpack.c.l.b16 %v2066
    %v2340 = vunpack.c.h.b16 %v2066
    %v2341 = vunpack.c.l.b16 %v2067
    %v2342 = vunpack.c.h.b16 %v2067
    %v2343 = vunpack.c.l.b16 %v2068
    %v2344 = vunpack.c.h.b16 %v2068
    %v2345 = vunpack.c.l.b16 %v2069
    %v2346 = vunpack.c.h.b16 %v2069
    %v2347 = vunpack.c.l.b16 %v2070
    %v2348 = vunpack.c.h.b16 %v2070
    %v2349 = vunpack.c.l.b16 %v2071
    %v2350 = vunpack.c.h.b16 %v2071
    %v2351 = vunpack.c.l.b16 %v2072
    %v2352 = vunpack.c.h.b16 %v2072
    %v2353 = vunpack.c.l.b16 %v2073
    %v2354 = vunpack.c.h.b16 %v2073
    %v2355 = vunpack.c.l.b16 %v2074
    %v2356 = vunpack.c.h.b16 %v2074
    %v2357 = vunpack.c.l.b16 %v2075
    %v2358 = vunpack.c.h.b16 %v2075
    %v2359 = vunpack.c.l.b16 %v2076
    %v2360 = vunpack.c.h.b16 %v2076
    %v2361 = vunpack.c.l.b16 %v2077
    %v2362 = vunpack.c.h.b16 %v2077
    %v2363 = vunpack.c.l.b16 %v2078
    %v2364 = vunpack.c.h.b16 %v2078
    %v2365 = vunpack.c.l.b16 %v2079
    %v2366 = vunpack.c.h.b16 %v2079
    %v2367 = vunpack.c.l.b16 %v2080
    %v2368 = vunpack.c.h.b16 %v2080
    %v2369 = vunpack.c.l.b16 %v2081
    %v2370 = vunpack.c.h.b16 %v2081
    %v2371 = vunpack.c.l.b16 %v2082
    %v2372 = vunpack.c.h.b16 %v2082
    %v2373 = vunpack.c.l.b16 %v2083
    %v2374 = vunpack.c.h.b16 %v2083
    %v2375 = vunpack.c.l.b16 %v2084
    %v2376 = vunpack.c.h.b16 %v2084
    %v2377 = vunpack.c.l.b16 %v2085
    %v2378 = vunpack.c.h.b16 %v2085
    %v2379 = vunpack.c.l.b16 %v2086
    %v2380 = vunpack.c.h.b16 %v2086
    %v2381 = vunpack.c.l.b16 %v2087
    %v2382 = vunpack.c.h.b16 %v2087
    %v2383 = vunpack.c.l.b16 %v2088
    %v2384 = vunpack.c.h.b16 %v2088
    %v2385 = vunpack.c.l.b16 %v2089
    %v2386 = vunpack.c.h.b16 %v2089
    %v2387 = vunpack.c.l.b16 %v2090
    %v2388 = vunpack.c.h.b16 %v2090
    %v2389 = vunpack.c.l.b16 %v2091
    %v2390 = vunpack.c.h.b16 %v2091
    %v2391 = vunpack.c.l.b16 %v2092
    %v2392 = vunpack.c.h.b16 %v2092
    %v2393 = vunpack.c.l.b16 %v2093
    %v2394 = vunpack.c.h.b16 %v2093
    %v2395 = vunpack.c.l.b16 %v2094
    %v2396 = vunpack.c.h.b16 %v2094
    %v2397 = vunpack.c.l.b16 %v2095
    %v2398 = vunpack.c.h.b16 %v2095
    %v2399 = vunpack.c.l.b16 %v2096
    %v2400 = vunpack.c.h.b16 %v2096
    %v2401 = vunpack.c.l.b16 %v2097
    %v2402 = vunpack.c.h.b16 %v2097
    %v2403 = vunpack.c.l.b16 %v2098
    %v2404 = vunpack.c.h.b16 %v2098
    %v2405 = vunpack.c.l.b16 %v2099
    %v2406 = vunpack.c.h.b16 %v2099
    %v2407 = vunpack.c.l.b16 %v2100
    %v2408 = vunpack.c.h.b16 %v2100
    %v2409 = vunpack.c.l.b16 %v2101
    %v2410 = vunpack.c.h.b16 %v2101
    %v2411 = vunpack.c.l.b16 %v2102
    %v2412 = vunpack.c.h.b16 %v2102
    %v2413 = vunpack.c.l.b16 %v2103
    %v2414 = vunpack.c.h.b16 %v2103
    %v2415 = vunpack.c.l.b16 %v2104
    %v2416 = vunpack.c.h.b16 %v2104
    %v2417 = vunpack.c.l.b16 %v2105
    %v2418 = vunpack.c.h.b16 %v2105
    %v2419 = vunpack.c.l.b16 %v2106
    %v2420 = vunpack.c.h.b16 %v2106
    %v2421 = vunpack.c.l.b16 %v2107
    %v2422 = vunpack.c.h.b16 %v2107
    %v2423 = vunpack.c.l.b16 %v2108
    %v2424 = vunpack.c.h.b16 %v2108
    %v2425 = vunpack.c.l.b16 %v2109
    %v2426 = vunpack.c.h.b16 %v2109
    %v2427 = vunpack.c.l.b16 %v2110
    %v2428 = vunpack.c.h.b16 %v2110
    %v2429 = vunpack.c.l.b16 %v2111
    %v2430 = vunpack.c.h.b16 %v2111
    %v2431 = vunpack.c.l.b16 %v2112
    %v2432 = vunpack.c.h.b16 %v2112
    %v2433 = vunpack.c.l.b16 %v2113
    %v2434 = vunpack.c.h.b16 %v2113
    %v2435 = vunpack.c.l.b16 %v2114
    %v2436 = vunpack.c.h.b16 %v2114
    %v2437 = vunpack.c.l.b16 %v2115
    %v2438 = vunpack.c.h.b16 %v2115
    %v2439 = vunpack.c.l.b16 %v2116
    %v2440 = vunpack.c.h.b16 %v2116
    %v2441 = vunpack.c.l.b16 %v2117
    %v2442 = vunpack.c.h.b16 %v2117
    %v2443 = vunpack.c.l.b16 %v2118
    %v2444 = vunpack.c.h.b16 %v2118
    %v2445 = vunpack.c.l.b16 %v2119
    %v2446 = vunpack.c.h.b16 %v2119
    %v2447 = vunpack.c.l.b16 %v2120
    %v2448 = vunpack.c.h.b16 %v2120
    %v2449 = vunpack.c.l.b16 %v2121
    %v2450 = vunpack.c.h.b16 %v2121
    %v2451 = vunpack.c.l.b16 %v2122
    %v2452 = vunpack.c.h.b16 %v2122
    %v2453 = vunpack.c.l.b16 %v2123
    %v2454 = vunpack.c.h.b16 %v2123
    %v2455 = vunpack.c.l.b16 %v2124
    %v2456 = vunpack.c.h.b16 %v2124
    %v2457 = vunpack.c.l.b16 %v2125
    %v2458 = vunpack.c.h.b16 %v2125
    %v2459 = vunpack.c.l.b16 %v2126
    %v2460 = vunpack.c.h.b16 %v2126
    %v2461 = vunpack.c.l.b16 %v2127
    %v2462 = vunpack.c.h.b16 %v2127
    %v2463 = vunpack.c.l.b16 %v2128
    %v2464 = vunpack.c.h.b16 %v2128
    %v2465 = vunpack.c.l.b16 %v2129
    %v2466 = vunpack.c.h.b16 %v2129
    %v2467 = vunpack.c.l.b16 %v2130
    %v2468 = vunpack.c.h.b16 %v2130
    %v2469 = vunpack.c.l.b16 %v2131
    %v2470 = vunpack.c.h.b16 %v2131
    %v2471 = vunpack.c.l.b16 %v2132
    %v2472 = vunpack.c.h.b16 %v2132
    %v2473 = vunpack.c.l.b16 %v2133
    %v2474 = vunpack.c.h.b16 %v2133
    %v2475 = vunpack.c.l.b16 %v2134
    %v2476 = vunpack.c.h.b16 %v2134
    %v2477 = vunpack.c.l.b16 %v2135
    %v2478 = vunpack.c.h.b16 %v2135
    %v2479 = vunpack.c.l.b16 %v2136
    %v2480 = vunpack.c.h.b16 %v2136
    %v2481 = vunpack.c.l.b16 %v2137
    %v2482 = vunpack.c.h.b16 %v2137
    %v2483 = vunpack.c.l.b16 %v2138
    %v2484 = vunpack.c.h.b16 %v2138
    %v2485 = vunpack.c.l.b16 %v2139
    %v2486 = vunpack.c.h.b16 %v2139
    %v2487 = vunpack.c.l.b16 %v2140
    %v2488 = vunpack.c.h.b16 %v2140
    %v2489 = vunpack.c.l.b16 %v2141
    %v2490 = vunpack.c.h.b16 %v2141
    %v2491 = vunpack.c.l.b16 %v2142
    %v2492 = vunpack.c.h.b16 %v2142
    %v2493 = vunpack.c.l.b16 %v2143
    %v2494 = vunpack.c.h.b16 %v2143
    %v2495 = vunpack.c.l.b16 %v2144
    %v2496 = vunpack.c.h.b16 %v2144
    %v2497 = vunpack.c.l.b16 %v2145
    %v2498 = vunpack.c.h.b16 %v2145
    %v2499 = vunpack.c.l.b16 %v2146
    %v2500 = vunpack.c.h.b16 %v2146
    %v2501 = vunpack.c.l.b16 %v2147
    %v2502 = vunpack.c.h.b16 %v2147
    %v2503 = vunpack.c.l.b16 %v2148
    %v2504 = vunpack.c.h.b16 %v2148
    %v2505 = vunpack.c.l.b16 %v2149
    %v2506 = vunpack.c.h.b16 %v2149
    %v2507 = vunpack.c.l.b16 %v2150
    %v2508 = vunpack.c.h.b16 %v2150
    %v2509 = vunpack.c.l.b16 %v2151
    %v2510 = vunpack.c.h.b16 %v2151
    %v2511 = vunpack.c.l.b16 %v2152
    %v2512 = vunpack.c.h.b16 %v2152
    %v2513 = vunpack.c.l.b16 %v2153
    %v2514 = vunpack.c.h.b16 %v2153
    %v2515 = vunpack.c.l.b16 %v2154
    %v2516 = vunpack.c.h.b16 %v2154
    %v2517 = vunpack.c.l.b16 %v2155
    %v2518 = vunpack.c.h.b16 %v2155
    %v2519 = vunpack.c.l.b16 %v2156
    %v2520 = vunpack.c.h.b16 %v2156
    %v2521 = vunpack.c.l.b16 %v2157
    %v2522 = vunpack.c.h.b16 %v2157
    %v2523 = vunpack.c.l.b16 %v2158
    %v2524 = vunpack.c.h.b16 %v2158
    %v2525 = vunpack.c.l.b16 %v2159
    %v2526 = vunpack.c.h.b16 %v2159
    %v2527 = vunpack.c.l.b16 %v2160
    %v2528 = vunpack.c.h.b16 %v2160
    %v2529 = vunpack.c.l.b16 %v2161
    %v2530 = vunpack.c.h.b16 %v2161
    %v2531 = vunpack.c.l.b16 %v2162
    %v2532 = vunpack.c.h.b16 %v2162
    %v2533 = vunpack.c.l.b16 %v2163
    %v2534 = vunpack.c.h.b16 %v2163
    %v2535 = vunpack.c.l.b16 %v2164
    %v2536 = vunpack.c.h.b16 %v2164
    %v2537 = vunpack.c.l.b16 %v2165
    %v2538 = vunpack.c.h.b16 %v2165
    %v2539 = vunpack.c.l.b16 %v2166
    %v2540 = vunpack.c.h.b16 %v2166
    %v2541 = vunpack.c.l.b16 %v2167
    %v2542 = vunpack.c.h.b16 %v2167
    %v2543 = vunpack.c.l.b16 %v2168
    %v2544 = vunpack.c.h.b16 %v2168
    %v2545 = vunpack.c.l.b16 %v2169
    %v2546 = vunpack.c.h.b16 %v2169
    %v2547 = vunpack.c.l.b16 %v2170
    %v2548 = vunpack.c.h.b16 %v2170
    %v2549 = vunpack.c.l.b16 %v2171
    %v2550 = vunpack.c.h.b16 %v2171
    %v2551 = vunpack.c.l.b16 %v2172
    %v2552 = vunpack.c.h.b16 %v2172
    %v2553 = vunpack.c.l.b16 %v2173
    %v2554 = vunpack.c.h.b16 %v2173
    %v2555 = vunpack.c.l.b16 %v2174
    %v2556 = vunpack.c.h.b16 %v2174
    %v2557 = vunpack.c.l.b16 %v2175
    %v2558 = vunpack.c.h.b16 %v2175
    %v2559 = vunpack.c.l.b16 %v2176
    %v2560 = vunpack.c.h.b16 %v2176
    %v2561 = vunpack.c.l.b16 %v2177
    %v2562 = vunpack.c.h.b16 %v2177
    %v2563 = vunpack.c.l.b16 %v2178
    %v2564 = vunpack.c.h.b16 %v2178
    %v2565 = vunpack.c.l.b16 %v2179
    %v2566 = vunpack.c.h.b16 %v2179
    %v2567 = vunpack.c.l.b16 %v2180
    %v2568 = vunpack.c.h.b16 %v2180
    %v2569 = vunpack.c.l.b16 %v2181
    %v2570 = vunpack.c.h.b16 %v2181
    %v2571 = vunpack.c.l.b16 %v2182
    %v2572 = vunpack.c.h.b16 %v2182
    %v2573 = vpack.c.b16 %v2319, %v2317
    %v2574 = vpack.c.b16 %v2320, %v2318
    %v2575 = vpack.c.b16 %v2323, %v2321
    %v2576 = vpack.c.b16 %v2324, %v2322
    %v2577 = vpack.c.b16 %v2327, %v2325
    %v2578 = vpack.c.b16 %v2328, %v2326
    %v2579 = vpack.c.b16 %v2331, %v2329
    %v2580 = vpack.c.b16 %v2332, %v2330
    %v2581 = vpack.c.b16 %v2335, %v2333
    %v2582 = vpack.c.b16 %v2336, %v2334
    %v2583 = vpack.c.b16 %v2339, %v2337
    %v2584 = vpack.c.b16 %v2340, %v2338
    %v2585 = vpack.c.b16 %v2343, %v2341
    %v2586 = vpack.c.b16 %v2344, %v2342
    %v2587 = vpack.c.b16 %v2347, %v2345
    %v2588 = vpack.c.b16 %v2348, %v2346
    %v2589 = vpack.c.b16 %v2351, %v2349
    %v2590 = vpack.c.b16 %v2352, %v2350
    %v2591 = vpack.c.b16 %v2355, %v2353
    %v2592 = vpack.c.b16 %v2356, %v2354
    %v2593 = vpack.c.b16 %v2359, %v2357
    %v2594 = vpack.c.b16 %v2360, %v2358
    %v2595 = vpack.c.b16 %v2363, %v2361
    %v2596 = vpack.c.b16 %v2364, %v2362
    %v2597 = vpack.c.b16 %v2367, %v2365
    %v2598 = vpack.c.b16 %v2368, %v2366
    %v2599 = vpack.c.b16 %v2371, %v2369
    %v2600 = vpack.c.b16 %v2372, %v2370
    %v2601 = vpack.c.b16 %v2375, %v2373
    %v2602 = vpack.c.b16 %v2376, %v2374
    %v2603 = vpack.c.b16 %v2379, %v2377
    %v2604 = vpack.c.b16 %v2380, %v2378
    %v2605 = vpack.c.b16 %v2383, %v2381
    %v2606 = vpack.c.b16 %v2384, %v2382
    %v2607 = vpack.c.b16 %v2387, %v2385
    %v2608 = vpack.c.b16 %v2388, %v2386
    %v2609 = vpack.c.b16 %v2391, %v2389
    %v2610 = vpack.c.b16 %v2392, %v2390
    %v2611 = vpack.c.b16 %v2395, %v2393
    %v2612 = vpack.c.b16 %v2396, %v2394
    %v2613 = vpack.c.b16 %v2399, %v2397
    %v2614 = vpack.c.b16 %v2400, %v2398
    %v2615 = vpack.c.b16 %v2403, %v2401
    %v2616 = vpack.c.b16 %v2404, %v2402
    %v2617 = vpack.c.b16 %v2407, %v2405
    %v2618 = vpack.c.b16 %v2408, %v2406
    %v2619 = vpack.c.b16 %v2411, %v2409
    %v2620 = vpack.c.b16 %v2412, %v2410
    %v2621 = vpack.c.b16 %v2415, %v2413
    %v2622 = vpack.c.b16 %v2416, %v2414
    %v2623 = vpack.c.b16 %v2419, %v2417
    %v2624 = vpack.c.b16 %v2420, %v2418
    %v2625 = vpack.c.b16 %v2423, %v2421
    %v2626 = vpack.c.b16 %v2424, %v2422
    %v2627 = vpack.c.b16 %v2427, %v2425
    %v2628 = vpack.c.b16 %v2428, %v2426
    %v2629 = vpack.c.b16 %v2431, %v2429
    %v2630 = vpack.c.b16 %v2432, %v2430
    %v2631 = vpack.c.b16 %v2435, %v2433
    %v2632 = vpack.c.b16 %v2436, %v2434
    %v2633 = vpack.c.b16 %v2439, %v2437
    %v2634 = vpack.c.b16 %v2440, %v2438
    %v2635 = vpack.c.b16 %v2443, %v2441
    %v2636 = vpack.c.b16 %v2444, %v2442
    %v2637 = vpack.c.b16 %v2447, %v2445
    %v2638 = vpack.c.b16 %v2448, %v2446
    %v2639 = vpack.c.b16 %v2451, %v2449
    %v2640 = vpack.c.b16 %v2452, %v2450
    %v2641 = vpack.c.b16 %v2455, %v2453
    %v2642 = vpack.c.b16 %v2456, %v2454
    %v2643 = vpack.c.b16 %v2459, %v2457
    %v2644 = vpack.c.b16 %v2460, %v2458
    %v2645 = vpack.c.b16 %v2463, %v2461
    %v2646 = vpack.c.b16 %v2464, %v2462
    %v2647 = vpack.c.b16 %v2467, %v2465
    %v2648 = vpack.c.b16 %v2468, %v2466
    %v2649 = vpack.c.b16 %v2471, %v2469
    %v2650 = vpack.c.b16 %v2472, %v2470
    %v2651 = vpack.c.b16 %v2475, %v2473
    %v2652 = vpack.c.b16 %v2476, %v2474
    %v2653 = vpack.c.b16 %v2479, %v2477
    %v2654 = vpack.c.b16 %v2480, %v2478
    %v2655 = vpack.c.b16 %v2483, %v2481
    %v2656 = vpack.c.b16 %v2484, %v2482
    %v2657 = vpack.c.b16 %v2487, %v2485
    %v2658 = vpack.c.b16 %v2488, %v2486
    %v2659 = vpack.c.b16 %v2491, %v2489
    %v2660 = vpack.c.b16 %v2492, %v2490
    %v2661 = vpack.c.b16 %v2495, %v2493
    %v2662 = vpack.c.b16 %v2496, %v2494
    %v2663 = vpack.c.b16 %v2499, %v2497
    %v2664 = vpack.c.b16 %v2500, %v2498
    %v2665 = vpack.c.b16 %v2503, %v2501
    %v2666 = vpack.c.b16 %v2504, %v2502
    %v2667 = vpack.c.b16 %v2507, %v2505
    %v2668 = vpack.c.b16 %v2508, %v2506
    %v2669 = vpack.c.b16 %v2511, %v2509
    %v2670 = vpack.c.b16 %v2512, %v2510
    %v2671 = vpack.c.b16 %v2515, %v2513
    %v2672 = vpack.c.b16 %v2516, %v2514
    %v2673 = vpack.c.b16 %v2519, %v2517
    %v2674 = vpack.c.b16 %v2520, %v2518
    %v2675 = vpack.c.b16 %v2523, %v2521
    %v2676 = vpack.c.b16 %v2524, %v2522
    %v2677 = vpack.c.b16 %v2527, %v2525
    %v2678 = vpack.c.b16 %v2528, %v2526
    %v2679 = vpack.c.b16 %v2531, %v2529
    %v2680 = vpack.c.b16 %v2532, %v2530
    %v2681 = vpack.c.b16 %v2535, %v2533
    %v2682 = vpack.c.b16 %v2536, %v2534
    %v2683 = vpack.c.b16 %v2539, %v2537
    %v2684 = vpack.c.b16 %v2540, %v2538
    %v2685 = vpack.c.b16 %v2543, %v2541
    %v2686 = vpack.c.b16 %v2544, %v2542
    %v2687 = vpack.c.b16 %v2547, %v2545
    %v2688 = vpack.c.b16 %v2548, %v2546
    %v2689 = vpack.c.b16 %v2551, %v2549
    %v2690 = vpack.c.b16 %v2552, %v2550
    %v2691 = vpack.c.b16 %v2555, %v2553
    %v2692 = vpack.c.b16 %v2556, %v2554
    %v2693 = vpack.c.b16 %v2559, %v2557
    %v2694 = vpack.c.b16 %v2560, %v2558
    %v2695 = vpack.c.b16 %v2563, %v2561
    %v2696 = vpack.c.b16 %v2564, %v2562
    %v2697 = vpack.c.b16 %v2567, %v2565
    %v2698 = vpack.c.b16 %v2568, %v2566
    %v2699 = vpack.c.b16 %v2571, %v2569
    %v2700 = vpack.c.b16 %v2572, %v2570
    %2829 = vmatpush.bf16.msra.mxu0 %v2587
    %2830 = vmatpush.bf16.msra.mxu0 %v2585
    %2831 = vmatpush.bf16.msra.mxu0 %v2583
    %2832 = vmatpush.bf16.msra.mxu0 %v2581
    %2833 = vmatpush.bf16.msra.mxu0 %v2579
    %2834 = vmatpush.bf16.msra.mxu0 %v2577
    %2835 = vmatpush.bf16.msra.mxu0 %v2575
    %2836 = vmatpush.bf16.msra.mxu0 %v2573
    %2837 = vmatmul.bf16.gmra.mxu0 %v1927
    %v2838 = vpop.f32.mrf.mxu0
    %v2839 = vadd.f32 %v2185, %v2838
    %v2840 = vpop.f32.mrf.mxu0
    %v2841 = vadd.f32 %v2185, %v2840
    %2842 = vmatmul.bf16.gmra.mxu0 %v1935
    %v2843 = vpop.f32.mrf.mxu0
    %v2844 = vadd.f32 %v2185, %v2843
    %v2845 = vpop.f32.mrf.mxu0
    %v2846 = vadd.f32 %v2185, %v2845
    %2847 = vmatmul.bf16.gmra.mxu0 %v1943
    %v2848 = vpop.f32.mrf.mxu0
    %v2849 = vadd.f32 %v2185, %v2848
    %v2850 = vpop.f32.mrf.mxu0
    %v2851 = vadd.f32 %v2185, %v2850
    %2852 = vmatmul.bf16.gmra.mxu0 %v1951
    %v2853 = vpop.f32.mrf.mxu0
    %v2854 = vadd.f32 %v2185, %v2853
    %v2855 = vpop.f32.mrf.mxu0
    %v2856 = vadd.f32 %v2185, %v2855
    %2857 = vmatmul.bf16.gmra.mxu0 %v1959
    %v2858 = vpop.f32.mrf.mxu0
    %v2859 = vadd.f32 %v2185, %v2858
    %v2860 = vpop.f32.mrf.mxu0
    %v2861 = vadd.f32 %v2185, %v2860
    %2862 = vmatmul.bf16.gmra.mxu0 %v1967
    %v2863 = vpop.f32.mrf.mxu0
    %v2864 = vadd.f32 %v2185, %v2863
    %v2865 = vpop.f32.mrf.mxu0
    %v2866 = vadd.f32 %v2185, %v2865
    %2867 = vmatmul.bf16.gmra.mxu0 %v1975
    %v2868 = vpop.f32.mrf.mxu0
    %v2869 = vadd.f32 %v2185, %v2868
    %v2870 = vpop.f32.mrf.mxu0
    %v2871 = vadd.f32 %v2185, %v2870
    %2872 = vmatmul.bf16.gmra.mxu0 %v1983
    %v2873 = vpop.f32.mrf.mxu0
    %v2874 = vadd.f32 %v2185, %v2873
    %v2875 = vpop.f32.mrf.mxu0
    %v2876 = vadd.f32 %v2185, %v2875
    %2877 = vmatmul.bf16.gmra.mxu0 %v1991
    %v2878 = vpop.f32.mrf.mxu0
    %v2879 = vadd.f32 %v2185, %v2878
    %v2880 = vpop.f32.mrf.mxu0
    %v2881 = vadd.f32 %v2185, %v2880
    %2882 = vmatmul.bf16.gmra.mxu0 %v1999
    %v2883 = vpop.f32.mrf.mxu0
    %v2884 = vadd.f32 %v2185, %v2883
    %v2885 = vpop.f32.mrf.mxu0
    %v2886 = vadd.f32 %v2185, %v2885
    %2887 = vmatmul.bf16.gmra.mxu0 %v2007
    %v2888 = vpop.f32.mrf.mxu0
    %v2889 = vadd.f32 %v2185, %v2888
    %v2890 = vpop.f32.mrf.mxu0
    %v2891 = vadd.f32 %v2185, %v2890
    %2892 = vmatmul.bf16.gmra.mxu0 %v2015
    %v2893 = vpop.f32.mrf.mxu0
    %v2894 = vadd.f32 %v2185, %v2893
    %v2895 = vpop.f32.mrf.mxu0
    %v2896 = vadd.f32 %v2185, %v2895
    %2897 = vmatmul.bf16.gmra.mxu0 %v2023
    %v2898 = vpop.f32.mrf.mxu0
    %v2899 = vadd.f32 %v2185, %v2898
    %v2900 = vpop.f32.mrf.mxu0
    %v2901 = vadd.f32 %v2185, %v2900
    %2902 = vmatmul.bf16.gmra.mxu0 %v2031
    %v2903 = vpop.f32.mrf.mxu0
    %v2904 = vadd.f32 %v2185, %v2903
    %v2905 = vpop.f32.mrf.mxu0
    %v2906 = vadd.f32 %v2185, %v2905
    %2907 = vmatmul.bf16.gmra.mxu0 %v2039
    %v2908 = vpop.f32.mrf.mxu0
    %v2909 = vadd.f32 %v2185, %v2908
    %v2910 = vpop.f32.mrf.mxu0
    %v2911 = vadd.f32 %v2185, %v2910
    %2912 = vmatmul.bf16.gmra.mxu0 %v2047
    %v2913 = vpop.f32.mrf.mxu0
    %v2914 = vadd.f32 %v2185, %v2913
    %v2915 = vpop.f32.mrf.mxu0
    %v2916 = vadd.f32 %v2185, %v2915
    %2917 = vdwg.mxu0
    %2918 = vmatpush.bf16.msra.mxu0 %v2603
    %2919 = vmatpush.bf16.msra.mxu0 %v2601
    %2920 = vmatpush.bf16.msra.mxu0 %v2599
    %2921 = vmatpush.bf16.msra.mxu0 %v2597
    %2922 = vmatpush.bf16.msra.mxu0 %v2595
    %2923 = vmatpush.bf16.msra.mxu0 %v2593
    %2924 = vmatpush.bf16.msra.mxu0 %v2591
    %2925 = vmatpush.bf16.msra.mxu0 %v2589
    %2926 = vmatmul.bf16.gmra.mxu0 %v1928
    %v2927 = vpop.f32.mrf.mxu0
    %v2928 = vadd.f32 %v2839, %v2927
    %v2929 = vpop.f32.mrf.mxu0
    %v2930 = vadd.f32 %v2841, %v2929
    %2931 = vmatmul.bf16.gmra.mxu0 %v1936
    %v2932 = vpop.f32.mrf.mxu0
    %v2933 = vadd.f32 %v2844, %v2932
    %v2934 = vpop.f32.mrf.mxu0
    %v2935 = vadd.f32 %v2846, %v2934
    %2936 = vmatmul.bf16.gmra.mxu0 %v1944
    %v2937 = vpop.f32.mrf.mxu0
    %v2938 = vadd.f32 %v2849, %v2937
    %v2939 = vpop.f32.mrf.mxu0
    %v2940 = vadd.f32 %v2851, %v2939
    %2941 = vmatmul.bf16.gmra.mxu0 %v1952
    %v2942 = vpop.f32.mrf.mxu0
    %v2943 = vadd.f32 %v2854, %v2942
    %v2944 = vpop.f32.mrf.mxu0
    %v2945 = vadd.f32 %v2856, %v2944
    %2946 = vmatmul.bf16.gmra.mxu0 %v1960
    %v2947 = vpop.f32.mrf.mxu0
    %v2948 = vadd.f32 %v2859, %v2947
    %v2949 = vpop.f32.mrf.mxu0
    %v2950 = vadd.f32 %v2861, %v2949
    %2951 = vmatmul.bf16.gmra.mxu0 %v1968
    %v2952 = vpop.f32.mrf.mxu0
    %v2953 = vadd.f32 %v2864, %v2952
    %v2954 = vpop.f32.mrf.mxu0
    %v2955 = vadd.f32 %v2866, %v2954
    %2956 = vmatmul.bf16.gmra.mxu0 %v1976
    %v2957 = vpop.f32.mrf.mxu0
    %v2958 = vadd.f32 %v2869, %v2957
    %v2959 = vpop.f32.mrf.mxu0
    %v2960 = vadd.f32 %v2871, %v2959
    %2961 = vmatmul.bf16.gmra.mxu0 %v1984
    %v2962 = vpop.f32.mrf.mxu0
    %v2963 = vadd.f32 %v2874, %v2962
    %v2964 = vpop.f32.mrf.mxu0
    %v2965 = vadd.f32 %v2876, %v2964
    %2966 = vmatmul.bf16.gmra.mxu0 %v1992
    %v2967 = vpop.f32.mrf.mxu0
    %v2968 = vadd.f32 %v2879, %v2967
    %v2969 = vpop.f32.mrf.mxu0
    %v2970 = vadd.f32 %v2881, %v2969
    %2971 = vmatmul.bf16.gmra.mxu0 %v2000
    %v2972 = vpop.f32.mrf.mxu0
    %v2973 = vadd.f32 %v2884, %v2972
    %v2974 = vpop.f32.mrf.mxu0
    %v2975 = vadd.f32 %v2886, %v2974
    %2976 = vmatmul.bf16.gmra.mxu0 %v2008
    %v2977 = vpop.f32.mrf.mxu0
    %v2978 = vadd.f32 %v2889, %v2977
    %v2979 = vpop.f32.mrf.mxu0
    %v2980 = vadd.f32 %v2891, %v2979
    %2981 = vmatmul.bf16.gmra.mxu0 %v2016
    %v2982 = vpop.f32.mrf.mxu0
    %v2983 = vadd.f32 %v2894, %v2982
    %v2984 = vpop.f32.mrf.mxu0
    %v2985 = vadd.f32 %v2896, %v2984
    %2986 = vmatmul.bf16.gmra.mxu0 %v2024
    %v2987 = vpop.f32.mrf.mxu0
    %v2988 = vadd.f32 %v2899, %v2987
    %v2989 = vpop.f32.mrf.mxu0
    %v2990 = vadd.f32 %v2901, %v2989
    %2991 = vmatmul.bf16.gmra.mxu0 %v2032
    %v2992 = vpop.f32.mrf.mxu0
    %v2993 = vadd.f32 %v2904, %v2992
    %v2994 = vpop.f32.mrf.mxu0
    %v2995 = vadd.f32 %v2906, %v2994
    %2996 = vmatmul.bf16.gmra.mxu0 %v2040
    %v2997 = vpop.f32.mrf.mxu0
    %v2998 = vadd.f32 %v2909, %v2997
    %v2999 = vpop.f32.mrf.mxu0
    %v3000 = vadd.f32 %v2911, %v2999
    %3001 = vmatmul.bf16.gmra.mxu0 %v2048
    %v3002 = vpop.f32.mrf.mxu0
    %v3003 = vadd.f32 %v2914, %v3002
    %v3004 = vpop.f32.mrf.mxu0
    %v3005 = vadd.f32 %v2916, %v3004
    %3006 = vdwg.mxu0
    %3007 = vmatpush.bf16.msra.mxu0 %v2619
    %3008 = vmatpush.bf16.msra.mxu0 %v2617
    %3009 = vmatpush.bf16.msra.mxu0 %v2615
    %3010 = vmatpush.bf16.msra.mxu0 %v2613
    %3011 = vmatpush.bf16.msra.mxu0 %v2611
    %3012 = vmatpush.bf16.msra.mxu0 %v2609
    %3013 = vmatpush.bf16.msra.mxu0 %v2607
    %3014 = vmatpush.bf16.msra.mxu0 %v2605
    %3015 = vmatmul.bf16.gmra.mxu0 %v1929
    %v3016 = vpop.f32.mrf.mxu0
    %v3017 = vadd.f32 %v2928, %v3016
    %v3018 = vpop.f32.mrf.mxu0
    %v3019 = vadd.f32 %v2930, %v3018
    %3020 = vmatmul.bf16.gmra.mxu0 %v1937
    %v3021 = vpop.f32.mrf.mxu0
    %v3022 = vadd.f32 %v2933, %v3021
    %v3023 = vpop.f32.mrf.mxu0
    %v3024 = vadd.f32 %v2935, %v3023
    %3025 = vmatmul.bf16.gmra.mxu0 %v1945
    %v3026 = vpop.f32.mrf.mxu0
    %v3027 = vadd.f32 %v2938, %v3026
    %v3028 = vpop.f32.mrf.mxu0
    %v3029 = vadd.f32 %v2940, %v3028
    %3030 = vmatmul.bf16.gmra.mxu0 %v1953
    %v3031 = vpop.f32.mrf.mxu0
    %v3032 = vadd.f32 %v2943, %v3031
    %v3033 = vpop.f32.mrf.mxu0
    %v3034 = vadd.f32 %v2945, %v3033
    %3035 = vmatmul.bf16.gmra.mxu0 %v1961
    %v3036 = vpop.f32.mrf.mxu0
    %v3037 = vadd.f32 %v2948, %v3036
    %v3038 = vpop.f32.mrf.mxu0
    %v3039 = vadd.f32 %v2950, %v3038
    %3040 = vmatmul.bf16.gmra.mxu0 %v1969
    %v3041 = vpop.f32.mrf.mxu0
    %v3042 = vadd.f32 %v2953, %v3041
    %v3043 = vpop.f32.mrf.mxu0
    %v3044 = vadd.f32 %v2955, %v3043
    %3045 = vmatmul.bf16.gmra.mxu0 %v1977
    %v3046 = vpop.f32.mrf.mxu0
    %v3047 = vadd.f32 %v2958, %v3046
    %v3048 = vpop.f32.mrf.mxu0
    %v3049 = vadd.f32 %v2960, %v3048
    %3050 = vmatmul.bf16.gmra.mxu0 %v1985
    %v3051 = vpop.f32.mrf.mxu0
    %v3052 = vadd.f32 %v2963, %v3051
    %v3053 = vpop.f32.mrf.mxu0
    %v3054 = vadd.f32 %v2965, %v3053
    %3055 = vmatmul.bf16.gmra.mxu0 %v1993
    %v3056 = vpop.f32.mrf.mxu0
    %v3057 = vadd.f32 %v2968, %v3056
    %v3058 = vpop.f32.mrf.mxu0
    %v3059 = vadd.f32 %v2970, %v3058
    %3060 = vmatmul.bf16.gmra.mxu0 %v2001
    %v3061 = vpop.f32.mrf.mxu0
    %v3062 = vadd.f32 %v2973, %v3061
    %v3063 = vpop.f32.mrf.mxu0
    %v3064 = vadd.f32 %v2975, %v3063
    %3065 = vmatmul.bf16.gmra.mxu0 %v2009
    %v3066 = vpop.f32.mrf.mxu0
    %v3067 = vadd.f32 %v2978, %v3066
    %v3068 = vpop.f32.mrf.mxu0
    %v3069 = vadd.f32 %v2980, %v3068
    %3070 = vmatmul.bf16.gmra.mxu0 %v2017
    %v3071 = vpop.f32.mrf.mxu0
    %v3072 = vadd.f32 %v2983, %v3071
    %v3073 = vpop.f32.mrf.mxu0
    %v3074 = vadd.f32 %v2985, %v3073
    %3075 = vmatmul.bf16.gmra.mxu0 %v2025
    %v3076 = vpop.f32.mrf.mxu0
    %v3077 = vadd.f32 %v2988, %v3076
    %v3078 = vpop.f32.mrf.mxu0
    %v3079 = vadd.f32 %v2990, %v3078
    %3080 = vmatmul.bf16.gmra.mxu0 %v2033
    %v3081 = vpop.f32.mrf.mxu0
    %v3082 = vadd.f32 %v2993, %v3081
    %v3083 = vpop.f32.mrf.mxu0
    %v3084 = vadd.f32 %v2995, %v3083
    %3085 = vmatmul.bf16.gmra.mxu0 %v2041
    %v3086 = vpop.f32.mrf.mxu0
    %v3087 = vadd.f32 %v2998, %v3086
    %v3088 = vpop.f32.mrf.mxu0
    %v3089 = vadd.f32 %v3000, %v3088
    %3090 = vmatmul.bf16.gmra.mxu0 %v2049
    %v3091 = vpop.f32.mrf.mxu0
    %v3092 = vadd.f32 %v3003, %v3091
    %v3093 = vpop.f32.mrf.mxu0
    %v3094 = vadd.f32 %v3005, %v3093
    %3095 = vdwg.mxu0
    %3096 = vmatpush.bf16.msra.mxu0 %v2635
    %3097 = vmatpush.bf16.msra.mxu0 %v2633
    %3098 = vmatpush.bf16.msra.mxu0 %v2631
    %3099 = vmatpush.bf16.msra.mxu0 %v2629
    %3100 = vmatpush.bf16.msra.mxu0 %v2627
    %3101 = vmatpush.bf16.msra.mxu0 %v2625
    %3102 = vmatpush.bf16.msra.mxu0 %v2623
    %3103 = vmatpush.bf16.msra.mxu0 %v2621
    %3104 = vmatmul.bf16.gmra.mxu0 %v1930
    %v3105 = vpop.f32.mrf.mxu0
    %v3106 = vadd.f32 %v3017, %v3105
    %v3107 = vpop.f32.mrf.mxu0
    %v3108 = vadd.f32 %v3019, %v3107
    %3109 = vmatmul.bf16.gmra.mxu0 %v1938
    %v3110 = vpop.f32.mrf.mxu0
    %v3111 = vadd.f32 %v3022, %v3110
    %v3112 = vpop.f32.mrf.mxu0
    %v3113 = vadd.f32 %v3024, %v3112
    %3114 = vmatmul.bf16.gmra.mxu0 %v1946
    %v3115 = vpop.f32.mrf.mxu0
    %v3116 = vadd.f32 %v3027, %v3115
    %v3117 = vpop.f32.mrf.mxu0
    %v3118 = vadd.f32 %v3029, %v3117
    %3119 = vmatmul.bf16.gmra.mxu0 %v1954
    %v3120 = vpop.f32.mrf.mxu0
    %v3121 = vadd.f32 %v3032, %v3120
    %v3122 = vpop.f32.mrf.mxu0
    %v3123 = vadd.f32 %v3034, %v3122
    %3124 = vmatmul.bf16.gmra.mxu0 %v1962
    %v3125 = vpop.f32.mrf.mxu0
    %v3126 = vadd.f32 %v3037, %v3125
    %v3127 = vpop.f32.mrf.mxu0
    %v3128 = vadd.f32 %v3039, %v3127
    %3129 = vmatmul.bf16.gmra.mxu0 %v1970
    %v3130 = vpop.f32.mrf.mxu0
    %v3131 = vadd.f32 %v3042, %v3130
    %v3132 = vpop.f32.mrf.mxu0
    %v3133 = vadd.f32 %v3044, %v3132
    %3134 = vmatmul.bf16.gmra.mxu0 %v1978
    %v3135 = vpop.f32.mrf.mxu0
    %v3136 = vadd.f32 %v3047, %v3135
    %v3137 = vpop.f32.mrf.mxu0
    %v3138 = vadd.f32 %v3049, %v3137
    %3139 = vmatmul.bf16.gmra.mxu0 %v1986
    %v3140 = vpop.f32.mrf.mxu0
    %v3141 = vadd.f32 %v3052, %v3140
    %v3142 = vpop.f32.mrf.mxu0
    %v3143 = vadd.f32 %v3054, %v3142
    %3144 = vmatmul.bf16.gmra.mxu0 %v1994
    %v3145 = vpop.f32.mrf.mxu0
    %v3146 = vadd.f32 %v3057, %v3145
    %v3147 = vpop.f32.mrf.mxu0
    %v3148 = vadd.f32 %v3059, %v3147
    %3149 = vmatmul.bf16.gmra.mxu0 %v2002
    %v3150 = vpop.f32.mrf.mxu0
    %v3151 = vadd.f32 %v3062, %v3150
    %v3152 = vpop.f32.mrf.mxu0
    %v3153 = vadd.f32 %v3064, %v3152
    %3154 = vmatmul.bf16.gmra.mxu0 %v2010
    %v3155 = vpop.f32.mrf.mxu0
    %v3156 = vadd.f32 %v3067, %v3155
    %v3157 = vpop.f32.mrf.mxu0
    %v3158 = vadd.f32 %v3069, %v3157
    %3159 = vmatmul.bf16.gmra.mxu0 %v2018
    %v3160 = vpop.f32.mrf.mxu0
    %v3161 = vadd.f32 %v3072, %v3160
    %v3162 = vpop.f32.mrf.mxu0
    %v3163 = vadd.f32 %v3074, %v3162
    %3164 = vmatmul.bf16.gmra.mxu0 %v2026
    %v3165 = vpop.f32.mrf.mxu0
    %v3166 = vadd.f32 %v3077, %v3165
    %v3167 = vpop.f32.mrf.mxu0
    %v3168 = vadd.f32 %v3079, %v3167
    %3169 = vmatmul.bf16.gmra.mxu0 %v2034
    %v3170 = vpop.f32.mrf.mxu0
    %v3171 = vadd.f32 %v3082, %v3170
    %v3172 = vpop.f32.mrf.mxu0
    %v3173 = vadd.f32 %v3084, %v3172
    %3174 = vmatmul.bf16.gmra.mxu0 %v2042
    %v3175 = vpop.f32.mrf.mxu0
    %v3176 = vadd.f32 %v3087, %v3175
    %v3177 = vpop.f32.mrf.mxu0
    %v3178 = vadd.f32 %v3089, %v3177
    %3179 = vmatmul.bf16.gmra.mxu0 %v2050
    %v3180 = vpop.f32.mrf.mxu0
    %v3181 = vadd.f32 %v3092, %v3180
    %v3182 = vpop.f32.mrf.mxu0
    %v3183 = vadd.f32 %v3094, %v3182
    %3184 = vdwg.mxu0
    %3185 = vmatpush.bf16.msra.mxu0 %v2651
    %3186 = vmatpush.bf16.msra.mxu0 %v2649
    %3187 = vmatpush.bf16.msra.mxu0 %v2647
    %3188 = vmatpush.bf16.msra.mxu0 %v2645
    %3189 = vmatpush.bf16.msra.mxu0 %v2643
    %3190 = vmatpush.bf16.msra.mxu0 %v2641
    %3191 = vmatpush.bf16.msra.mxu0 %v2639
    %3192 = vmatpush.bf16.msra.mxu0 %v2637
    %3193 = vmatmul.bf16.gmra.mxu0 %v1931
    %v3194 = vpop.f32.mrf.mxu0
    %v3195 = vadd.f32 %v3106, %v3194
    %v3196 = vpop.f32.mrf.mxu0
    %v3197 = vadd.f32 %v3108, %v3196
    %3198 = vmatmul.bf16.gmra.mxu0 %v1939
    %v3199 = vpop.f32.mrf.mxu0
    %v3200 = vadd.f32 %v3111, %v3199
    %v3201 = vpop.f32.mrf.mxu0
    %v3202 = vadd.f32 %v3113, %v3201
    %3203 = vmatmul.bf16.gmra.mxu0 %v1947
    %v3204 = vpop.f32.mrf.mxu0
    %v3205 = vadd.f32 %v3116, %v3204
    %v3206 = vpop.f32.mrf.mxu0
    %v3207 = vadd.f32 %v3118, %v3206
    %3208 = vmatmul.bf16.gmra.mxu0 %v1955
    %v3209 = vpop.f32.mrf.mxu0
    %v3210 = vadd.f32 %v3121, %v3209
    %v3211 = vpop.f32.mrf.mxu0
    %v3212 = vadd.f32 %v3123, %v3211
    %3213 = vmatmul.bf16.gmra.mxu0 %v1963
    %v3214 = vpop.f32.mrf.mxu0
    %v3215 = vadd.f32 %v3126, %v3214
    %v3216 = vpop.f32.mrf.mxu0
    %v3217 = vadd.f32 %v3128, %v3216
    %3218 = vmatmul.bf16.gmra.mxu0 %v1971
    %v3219 = vpop.f32.mrf.mxu0
    %v3220 = vadd.f32 %v3131, %v3219
    %v3221 = vpop.f32.mrf.mxu0
    %v3222 = vadd.f32 %v3133, %v3221
    %3223 = vmatmul.bf16.gmra.mxu0 %v1979
    %v3224 = vpop.f32.mrf.mxu0
    %v3225 = vadd.f32 %v3136, %v3224
    %v3226 = vpop.f32.mrf.mxu0
    %v3227 = vadd.f32 %v3138, %v3226
    %3228 = vmatmul.bf16.gmra.mxu0 %v1987
    %v3229 = vpop.f32.mrf.mxu0
    %v3230 = vadd.f32 %v3141, %v3229
    %v3231 = vpop.f32.mrf.mxu0
    %v3232 = vadd.f32 %v3143, %v3231
    %3233 = vmatmul.bf16.gmra.mxu0 %v1995
    %v3234 = vpop.f32.mrf.mxu0
    %v3235 = vadd.f32 %v3146, %v3234
    %v3236 = vpop.f32.mrf.mxu0
    %v3237 = vadd.f32 %v3148, %v3236
    %3238 = vmatmul.bf16.gmra.mxu0 %v2003
    %v3239 = vpop.f32.mrf.mxu0
    %v3240 = vadd.f32 %v3151, %v3239
    %v3241 = vpop.f32.mrf.mxu0
    %v3242 = vadd.f32 %v3153, %v3241
    %3243 = vmatmul.bf16.gmra.mxu0 %v2011
    %v3244 = vpop.f32.mrf.mxu0
    %v3245 = vadd.f32 %v3156, %v3244
    %v3246 = vpop.f32.mrf.mxu0
    %v3247 = vadd.f32 %v3158, %v3246
    %3248 = vmatmul.bf16.gmra.mxu0 %v2019
    %v3249 = vpop.f32.mrf.mxu0
    %v3250 = vadd.f32 %v3161, %v3249
    %v3251 = vpop.f32.mrf.mxu0
    %v3252 = vadd.f32 %v3163, %v3251
    %3253 = vmatmul.bf16.gmra.mxu0 %v2027
    %v3254 = vpop.f32.mrf.mxu0
    %v3255 = vadd.f32 %v3166, %v3254
    %v3256 = vpop.f32.mrf.mxu0
    %v3257 = vadd.f32 %v3168, %v3256
    %3258 = vmatmul.bf16.gmra.mxu0 %v2035
    %v3259 = vpop.f32.mrf.mxu0
    %v3260 = vadd.f32 %v3171, %v3259
    %v3261 = vpop.f32.mrf.mxu0
    %v3262 = vadd.f32 %v3173, %v3261
    %3263 = vmatmul.bf16.gmra.mxu0 %v2043
    %v3264 = vpop.f32.mrf.mxu0
    %v3265 = vadd.f32 %v3176, %v3264
    %v3266 = vpop.f32.mrf.mxu0
    %v3267 = vadd.f32 %v3178, %v3266
    %3268 = vmatmul.bf16.gmra.mxu0 %v2051
    %v3269 = vpop.f32.mrf.mxu0
    %v3270 = vadd.f32 %v3181, %v3269
    %v3271 = vpop.f32.mrf.mxu0
    %v3272 = vadd.f32 %v3183, %v3271
    %3273 = vdwg.mxu0
    %3274 = vmatpush.bf16.msra.mxu0 %v2667
    %3275 = vmatpush.bf16.msra.mxu0 %v2665
    %3276 = vmatpush.bf16.msra.mxu0 %v2663
    %3277 = vmatpush.bf16.msra.mxu0 %v2661
    %3278 = vmatpush.bf16.msra.mxu0 %v2659
    %3279 = vmatpush.bf16.msra.mxu0 %v2657
    %3280 = vmatpush.bf16.msra.mxu0 %v2655
    %3281 = vmatpush.bf16.msra.mxu0 %v2653
    %3282 = vmatmul.bf16.gmra.mxu0 %v1932
    %v3283 = vpop.f32.mrf.mxu0
    %v3284 = vadd.f32 %v3195, %v3283
    %v3285 = vpop.f32.mrf.mxu0
    %v3286 = vadd.f32 %v3197, %v3285
    %3287 = vmatmul.bf16.gmra.mxu0 %v1940
    %v3288 = vpop.f32.mrf.mxu0
    %v3289 = vadd.f32 %v3200, %v3288
    %v3290 = vpop.f32.mrf.mxu0
    %v3291 = vadd.f32 %v3202, %v3290
    %3292 = vmatmul.bf16.gmra.mxu0 %v1948
    %v3293 = vpop.f32.mrf.mxu0
    %v3294 = vadd.f32 %v3205, %v3293
    %v3295 = vpop.f32.mrf.mxu0
    %v3296 = vadd.f32 %v3207, %v3295
    %3297 = vmatmul.bf16.gmra.mxu0 %v1956
    %v3298 = vpop.f32.mrf.mxu0
    %v3299 = vadd.f32 %v3210, %v3298
    %v3300 = vpop.f32.mrf.mxu0
    %v3301 = vadd.f32 %v3212, %v3300
    %3302 = vmatmul.bf16.gmra.mxu0 %v1964
    %v3303 = vpop.f32.mrf.mxu0
    %v3304 = vadd.f32 %v3215, %v3303
    %v3305 = vpop.f32.mrf.mxu0
    %v3306 = vadd.f32 %v3217, %v3305
    %3307 = vmatmul.bf16.gmra.mxu0 %v1972
    %v3308 = vpop.f32.mrf.mxu0
    %v3309 = vadd.f32 %v3220, %v3308
    %v3310 = vpop.f32.mrf.mxu0
    %v3311 = vadd.f32 %v3222, %v3310
    %3312 = vmatmul.bf16.gmra.mxu0 %v1980
    %v3313 = vpop.f32.mrf.mxu0
    %v3314 = vadd.f32 %v3225, %v3313
    %v3315 = vpop.f32.mrf.mxu0
    %v3316 = vadd.f32 %v3227, %v3315
    %3317 = vmatmul.bf16.gmra.mxu0 %v1988
    %v3318 = vpop.f32.mrf.mxu0
    %v3319 = vadd.f32 %v3230, %v3318
    %v3320 = vpop.f32.mrf.mxu0
    %v3321 = vadd.f32 %v3232, %v3320
    %3322 = vmatmul.bf16.gmra.mxu0 %v1996
    %v3323 = vpop.f32.mrf.mxu0
    %v3324 = vadd.f32 %v3235, %v3323
    %v3325 = vpop.f32.mrf.mxu0
    %v3326 = vadd.f32 %v3237, %v3325
    %3327 = vmatmul.bf16.gmra.mxu0 %v2004
    %v3328 = vpop.f32.mrf.mxu0
    %v3329 = vadd.f32 %v3240, %v3328
    %v3330 = vpop.f32.mrf.mxu0
    %v3331 = vadd.f32 %v3242, %v3330
    %3332 = vmatmul.bf16.gmra.mxu0 %v2012
    %v3333 = vpop.f32.mrf.mxu0
    %v3334 = vadd.f32 %v3245, %v3333
    %v3335 = vpop.f32.mrf.mxu0
    %v3336 = vadd.f32 %v3247, %v3335
    %3337 = vmatmul.bf16.gmra.mxu0 %v2020
    %v3338 = vpop.f32.mrf.mxu0
    %v3339 = vadd.f32 %v3250, %v3338
    %v3340 = vpop.f32.mrf.mxu0
    %v3341 = vadd.f32 %v3252, %v3340
    %3342 = vmatmul.bf16.gmra.mxu0 %v2028
    %v3343 = vpop.f32.mrf.mxu0
    %v3344 = vadd.f32 %v3255, %v3343
    %v3345 = vpop.f32.mrf.mxu0
    %v3346 = vadd.f32 %v3257, %v3345
    %3347 = vmatmul.bf16.gmra.mxu0 %v2036
    %v3348 = vpop.f32.mrf.mxu0
    %v3349 = vadd.f32 %v3260, %v3348
    %v3350 = vpop.f32.mrf.mxu0
    %v3351 = vadd.f32 %v3262, %v3350
    %3352 = vmatmul.bf16.gmra.mxu0 %v2044
    %v3353 = vpop.f32.mrf.mxu0
    %v3354 = vadd.f32 %v3265, %v3353
    %v3355 = vpop.f32.mrf.mxu0
    %v3356 = vadd.f32 %v3267, %v3355
    %3357 = vmatmul.bf16.gmra.mxu0 %v2052
    %v3358 = vpop.f32.mrf.mxu0
    %v3359 = vadd.f32 %v3270, %v3358
    %v3360 = vpop.f32.mrf.mxu0
    %v3361 = vadd.f32 %v3272, %v3360
    %3362 = vdwg.mxu0
    %3363 = vmatpush.bf16.msra.mxu0 %v2683
    %3364 = vmatpush.bf16.msra.mxu0 %v2681
    %3365 = vmatpush.bf16.msra.mxu0 %v2679
    %3366 = vmatpush.bf16.msra.mxu0 %v2677
    %3367 = vmatpush.bf16.msra.mxu0 %v2675
    %3368 = vmatpush.bf16.msra.mxu0 %v2673
    %3369 = vmatpush.bf16.msra.mxu0 %v2671
    %3370 = vmatpush.bf16.msra.mxu0 %v2669
    %3371 = vmatmul.bf16.gmra.mxu0 %v1933
    %v3372 = vpop.f32.mrf.mxu0
    %v3373 = vadd.f32 %v3284, %v3372
    %v3374 = vpop.f32.mrf.mxu0
    %v3375 = vadd.f32 %v3286, %v3374
    %3376 = vmatmul.bf16.gmra.mxu0 %v1941
    %v3377 = vpop.f32.mrf.mxu0
    %v3378 = vadd.f32 %v3289, %v3377
    %v3379 = vpop.f32.mrf.mxu0
    %v3380 = vadd.f32 %v3291, %v3379
    %3381 = vmatmul.bf16.gmra.mxu0 %v1949
    %v3382 = vpop.f32.mrf.mxu0
    %v3383 = vadd.f32 %v3294, %v3382
    %v3384 = vpop.f32.mrf.mxu0
    %v3385 = vadd.f32 %v3296, %v3384
    %3386 = vmatmul.bf16.gmra.mxu0 %v1957
    %v3387 = vpop.f32.mrf.mxu0
    %v3388 = vadd.f32 %v3299, %v3387
    %v3389 = vpop.f32.mrf.mxu0
    %v3390 = vadd.f32 %v3301, %v3389
    %3391 = vmatmul.bf16.gmra.mxu0 %v1965
    %v3392 = vpop.f32.mrf.mxu0
    %v3393 = vadd.f32 %v3304, %v3392
    %v3394 = vpop.f32.mrf.mxu0
    %v3395 = vadd.f32 %v3306, %v3394
    %3396 = vmatmul.bf16.gmra.mxu0 %v1973
    %v3397 = vpop.f32.mrf.mxu0
    %v3398 = vadd.f32 %v3309, %v3397
    %v3399 = vpop.f32.mrf.mxu0
    %v3400 = vadd.f32 %v3311, %v3399
    %3401 = vmatmul.bf16.gmra.mxu0 %v1981
    %v3402 = vpop.f32.mrf.mxu0
    %v3403 = vadd.f32 %v3314, %v3402
    %v3404 = vpop.f32.mrf.mxu0
    %v3405 = vadd.f32 %v3316, %v3404
    %3406 = vmatmul.bf16.gmra.mxu0 %v1989
    %v3407 = vpop.f32.mrf.mxu0
    %v3408 = vadd.f32 %v3319, %v3407
    %v3409 = vpop.f32.mrf.mxu0
    %v3410 = vadd.f32 %v3321, %v3409
    %3411 = vmatmul.bf16.gmra.mxu0 %v1997
    %v3412 = vpop.f32.mrf.mxu0
    %v3413 = vadd.f32 %v3324, %v3412
    %v3414 = vpop.f32.mrf.mxu0
    %v3415 = vadd.f32 %v3326, %v3414
    %3416 = vmatmul.bf16.gmra.mxu0 %v2005
    %v3417 = vpop.f32.mrf.mxu0
    %v3418 = vadd.f32 %v3329, %v3417
    %v3419 = vpop.f32.mrf.mxu0
    %v3420 = vadd.f32 %v3331, %v3419
    %3421 = vmatmul.bf16.gmra.mxu0 %v2013
    %v3422 = vpop.f32.mrf.mxu0
    %v3423 = vadd.f32 %v3334, %v3422
    %v3424 = vpop.f32.mrf.mxu0
    %v3425 = vadd.f32 %v3336, %v3424
    %3426 = vmatmul.bf16.gmra.mxu0 %v2021
    %v3427 = vpop.f32.mrf.mxu0
    %v3428 = vadd.f32 %v3339, %v3427
    %v3429 = vpop.f32.mrf.mxu0
    %v3430 = vadd.f32 %v3341, %v3429
    %3431 = vmatmul.bf16.gmra.mxu0 %v2029
    %v3432 = vpop.f32.mrf.mxu0
    %v3433 = vadd.f32 %v3344, %v3432
    %v3434 = vpop.f32.mrf.mxu0
    %v3435 = vadd.f32 %v3346, %v3434
    %3436 = vmatmul.bf16.gmra.mxu0 %v2037
    %v3437 = vpop.f32.mrf.mxu0
    %v3438 = vadd.f32 %v3349, %v3437
    %v3439 = vpop.f32.mrf.mxu0
    %v3440 = vadd.f32 %v3351, %v3439
    %3441 = vmatmul.bf16.gmra.mxu0 %v2045
    %v3442 = vpop.f32.mrf.mxu0
    %v3443 = vadd.f32 %v3354, %v3442
    %v3444 = vpop.f32.mrf.mxu0
    %v3445 = vadd.f32 %v3356, %v3444
    %3446 = vmatmul.bf16.gmra.mxu0 %v2053
    %v3447 = vpop.f32.mrf.mxu0
    %v3448 = vadd.f32 %v3359, %v3447
    %v3449 = vpop.f32.mrf.mxu0
    %v3450 = vadd.f32 %v3361, %v3449
    %3451 = vdwg.mxu0
    %3452 = vmatpush.bf16.msra.mxu0 %v2699
    %3453 = vmatpush.bf16.msra.mxu0 %v2697
    %3454 = vmatpush.bf16.msra.mxu0 %v2695
    %3455 = vmatpush.bf16.msra.mxu0 %v2693
    %3456 = vmatpush.bf16.msra.mxu0 %v2691
    %3457 = vmatpush.bf16.msra.mxu0 %v2689
    %3458 = vmatpush.bf16.msra.mxu0 %v2687
    %3459 = vmatpush.bf16.msra.mxu0 %v2685
    %3460 = vmatmul.bf16.gmra.mxu0 %v1934
    %v3461 = vpop.f32.mrf.mxu0
    %v3462 = vadd.f32 %v3373, %v3461
    %v3463 = vpop.f32.mrf.mxu0
    %v3464 = vadd.f32 %v3375, %v3463
    %3465 = vmatmul.bf16.gmra.mxu0 %v1942
    %v3466 = vpop.f32.mrf.mxu0
    %v3467 = vadd.f32 %v3378, %v3466
    %v3468 = vpop.f32.mrf.mxu0
    %v3469 = vadd.f32 %v3380, %v3468
    %3470 = vmatmul.bf16.gmra.mxu0 %v1950
    %v3471 = vpop.f32.mrf.mxu0
    %v3472 = vadd.f32 %v3383, %v3471
    %v3473 = vpop.f32.mrf.mxu0
    %v3474 = vadd.f32 %v3385, %v3473
    %3475 = vmatmul.bf16.gmra.mxu0 %v1958
    %v3476 = vpop.f32.mrf.mxu0
    %v3477 = vadd.f32 %v3388, %v3476
    %v3478 = vpop.f32.mrf.mxu0
    %v3479 = vadd.f32 %v3390, %v3478
    %3480 = vmatmul.bf16.gmra.mxu0 %v1966
    %v3481 = vpop.f32.mrf.mxu0
    %v3482 = vadd.f32 %v3393, %v3481
    %v3483 = vpop.f32.mrf.mxu0
    %v3484 = vadd.f32 %v3395, %v3483
    %3485 = vmatmul.bf16.gmra.mxu0 %v1974
    %v3486 = vpop.f32.mrf.mxu0
    %v3487 = vadd.f32 %v3398, %v3486
    %v3488 = vpop.f32.mrf.mxu0
    %v3489 = vadd.f32 %v3400, %v3488
    %3490 = vmatmul.bf16.gmra.mxu0 %v1982
    %v3491 = vpop.f32.mrf.mxu0
    %v3492 = vadd.f32 %v3403, %v3491
    %v3493 = vpop.f32.mrf.mxu0
    %v3494 = vadd.f32 %v3405, %v3493
    %3495 = vmatmul.bf16.gmra.mxu0 %v1990
    %v3496 = vpop.f32.mrf.mxu0
    %v3497 = vadd.f32 %v3408, %v3496
    %v3498 = vpop.f32.mrf.mxu0
    %v3499 = vadd.f32 %v3410, %v3498
    %3500 = vmatmul.bf16.gmra.mxu0 %v1998
    %v3501 = vpop.f32.mrf.mxu0
    %v3502 = vadd.f32 %v3413, %v3501
    %v3503 = vpop.f32.mrf.mxu0
    %v3504 = vadd.f32 %v3415, %v3503
    %3505 = vmatmul.bf16.gmra.mxu0 %v2006
    %v3506 = vpop.f32.mrf.mxu0
    %v3507 = vadd.f32 %v3418, %v3506
    %v3508 = vpop.f32.mrf.mxu0
    %v3509 = vadd.f32 %v3420, %v3508
    %3510 = vmatmul.bf16.gmra.mxu0 %v2014
    %v3511 = vpop.f32.mrf.mxu0
    %v3512 = vadd.f32 %v3423, %v3511
    %v3513 = vpop.f32.mrf.mxu0
    %v3514 = vadd.f32 %v3425, %v3513
    %3515 = vmatmul.bf16.gmra.mxu0 %v2022
    %v3516 = vpop.f32.mrf.mxu0
    %v3517 = vadd.f32 %v3428, %v3516
    %v3518 = vpop.f32.mrf.mxu0
    %v3519 = vadd.f32 %v3430, %v3518
    %3520 = vmatmul.bf16.gmra.mxu0 %v2030
    %v3521 = vpop.f32.mrf.mxu0
    %v3522 = vadd.f32 %v3433, %v3521
    %v3523 = vpop.f32.mrf.mxu0
    %v3524 = vadd.f32 %v3435, %v3523
    %3525 = vmatmul.bf16.gmra.mxu0 %v2038
    %v3526 = vpop.f32.mrf.mxu0
    %v3527 = vadd.f32 %v3438, %v3526
    %v3528 = vpop.f32.mrf.mxu0
    %v3529 = vadd.f32 %v3440, %v3528
    %3530 = vmatmul.bf16.gmra.mxu0 %v2046
    %v3531 = vpop.f32.mrf.mxu0
    %v3532 = vadd.f32 %v3443, %v3531
    %v3533 = vpop.f32.mrf.mxu0
    %v3534 = vadd.f32 %v3445, %v3533
    %3535 = vmatmul.bf16.gmra.mxu0 %v2054
    %v3536 = vpop.f32.mrf.mxu0
    %v3537 = vadd.f32 %v3448, %v3536
    %v3538 = vpop.f32.mrf.mxu0
    %v3539 = vadd.f32 %v3450, %v3538
    %3540 = vdwg.mxu0
    %3541 = vmatpush.bf16.msra.mxu0 %v2588
    %3542 = vmatpush.bf16.msra.mxu0 %v2586
    %3543 = vmatpush.bf16.msra.mxu0 %v2584
    %3544 = vmatpush.bf16.msra.mxu0 %v2582
    %3545 = vmatpush.bf16.msra.mxu0 %v2580
    %3546 = vmatpush.bf16.msra.mxu0 %v2578
    %3547 = vmatpush.bf16.msra.mxu0 %v2576
    %3548 = vmatpush.bf16.msra.mxu0 %v2574
    %3549 = vmatmul.bf16.gmra.mxu0 %v1927
    %v3550 = vpop.f32.mrf.mxu0
    %v3551 = vadd.f32 %v2186, %v3550
    %v3552 = vpop.f32.mrf.mxu0
    %v3553 = vadd.f32 %v2186, %v3552
    %3554 = vmatmul.bf16.gmra.mxu0 %v1935
    %v3555 = vpop.f32.mrf.mxu0
    %v3556 = vadd.f32 %v2186, %v3555
    %v3557 = vpop.f32.mrf.mxu0
    %v3558 = vadd.f32 %v2186, %v3557
    %3559 = vmatmul.bf16.gmra.mxu0 %v1943
    %v3560 = vpop.f32.mrf.mxu0
    %v3561 = vadd.f32 %v2186, %v3560
    %v3562 = vpop.f32.mrf.mxu0
    %v3563 = vadd.f32 %v2186, %v3562
    %3564 = vmatmul.bf16.gmra.mxu0 %v1951
    %v3565 = vpop.f32.mrf.mxu0
    %v3566 = vadd.f32 %v2186, %v3565
    %v3567 = vpop.f32.mrf.mxu0
    %v3568 = vadd.f32 %v2186, %v3567
    %3569 = vmatmul.bf16.gmra.mxu0 %v1959
    %v3570 = vpop.f32.mrf.mxu0
    %v3571 = vadd.f32 %v2186, %v3570
    %v3572 = vpop.f32.mrf.mxu0
    %v3573 = vadd.f32 %v2186, %v3572
    %3574 = vmatmul.bf16.gmra.mxu0 %v1967
    %v3575 = vpop.f32.mrf.mxu0
    %v3576 = vadd.f32 %v2186, %v3575
    %v3577 = vpop.f32.mrf.mxu0
    %v3578 = vadd.f32 %v2186, %v3577
    %3579 = vmatmul.bf16.gmra.mxu0 %v1975
    %v3580 = vpop.f32.mrf.mxu0
    %v3581 = vadd.f32 %v2186, %v3580
    %v3582 = vpop.f32.mrf.mxu0
    %v3583 = vadd.f32 %v2186, %v3582
    %3584 = vmatmul.bf16.gmra.mxu0 %v1983
    %v3585 = vpop.f32.mrf.mxu0
    %v3586 = vadd.f32 %v2186, %v3585
    %v3587 = vpop.f32.mrf.mxu0
    %v3588 = vadd.f32 %v2186, %v3587
    %3589 = vmatmul.bf16.gmra.mxu0 %v1991
    %v3590 = vpop.f32.mrf.mxu0
    %v3591 = vadd.f32 %v2186, %v3590
    %v3592 = vpop.f32.mrf.mxu0
    %v3593 = vadd.f32 %v2186, %v3592
    %3594 = vmatmul.bf16.gmra.mxu0 %v1999
    %v3595 = vpop.f32.mrf.mxu0
    %v3596 = vadd.f32 %v2186, %v3595
    %v3597 = vpop.f32.mrf.mxu0
    %v3598 = vadd.f32 %v2186, %v3597
    %3599 = vmatmul.bf16.gmra.mxu0 %v2007
    %v3600 = vpop.f32.mrf.mxu0
    %v3601 = vadd.f32 %v2186, %v3600
    %v3602 = vpop.f32.mrf.mxu0
    %v3603 = vadd.f32 %v2186, %v3602
    %3604 = vmatmul.bf16.gmra.mxu0 %v2015
    %v3605 = vpop.f32.mrf.mxu0
    %v3606 = vadd.f32 %v2186, %v3605
    %v3607 = vpop.f32.mrf.mxu0
    %v3608 = vadd.f32 %v2186, %v3607
    %3609 = vmatmul.bf16.gmra.mxu0 %v2023
    %v3610 = vpop.f32.mrf.mxu0
    %v3611 = vadd.f32 %v2186, %v3610
    %v3612 = vpop.f32.mrf.mxu0
    %v3613 = vadd.f32 %v2186, %v3612
    %3614 = vmatmul.bf16.gmra.mxu0 %v2031
    %v3615 = vpop.f32.mrf.mxu0
    %v3616 = vadd.f32 %v2186, %v3615
    %v3617 = vpop.f32.mrf.mxu0
    %v3618 = vadd.f32 %v2186, %v3617
    %3619 = vmatmul.bf16.gmra.mxu0 %v2039
    %v3620 = vpop.f32.mrf.mxu0
    %v3621 = vadd.f32 %v2186, %v3620
    %v3622 = vpop.f32.mrf.mxu0
    %v3623 = vadd.f32 %v2186, %v3622
    %3624 = vmatmul.bf16.gmra.mxu0 %v2047
    %v3625 = vpop.f32.mrf.mxu0
    %v3626 = vadd.f32 %v2186, %v3625
    %v3627 = vpop.f32.mrf.mxu0
    %v3628 = vadd.f32 %v2186, %v3627
    %3629 = vdwg.mxu0
    %3630 = vmatpush.bf16.msra.mxu0 %v2604
    %3631 = vmatpush.bf16.msra.mxu0 %v2602
    %3632 = vmatpush.bf16.msra.mxu0 %v2600
    %3633 = vmatpush.bf16.msra.mxu0 %v2598
    %3634 = vmatpush.bf16.msra.mxu0 %v2596
    %3635 = vmatpush.bf16.msra.mxu0 %v2594
    %3636 = vmatpush.bf16.msra.mxu0 %v2592
    %3637 = vmatpush.bf16.msra.mxu0 %v2590
    %3638 = vmatmul.bf16.gmra.mxu0 %v1928
    %v3639 = vpop.f32.mrf.mxu0
    %v3640 = vadd.f32 %v3551, %v3639
    %v3641 = vpop.f32.mrf.mxu0
    %v3642 = vadd.f32 %v3553, %v3641
    %3643 = vmatmul.bf16.gmra.mxu0 %v1936
    %v3644 = vpop.f32.mrf.mxu0
    %v3645 = vadd.f32 %v3556, %v3644
    %v3646 = vpop.f32.mrf.mxu0
    %v3647 = vadd.f32 %v3558, %v3646
    %3648 = vmatmul.bf16.gmra.mxu0 %v1944
    %v3649 = vpop.f32.mrf.mxu0
    %v3650 = vadd.f32 %v3561, %v3649
    %v3651 = vpop.f32.mrf.mxu0
    %v3652 = vadd.f32 %v3563, %v3651
    %3653 = vmatmul.bf16.gmra.mxu0 %v1952
    %v3654 = vpop.f32.mrf.mxu0
    %v3655 = vadd.f32 %v3566, %v3654
    %v3656 = vpop.f32.mrf.mxu0
    %v3657 = vadd.f32 %v3568, %v3656
    %3658 = vmatmul.bf16.gmra.mxu0 %v1960
    %v3659 = vpop.f32.mrf.mxu0
    %v3660 = vadd.f32 %v3571, %v3659
    %v3661 = vpop.f32.mrf.mxu0
    %v3662 = vadd.f32 %v3573, %v3661
    %3663 = vmatmul.bf16.gmra.mxu0 %v1968
    %v3664 = vpop.f32.mrf.mxu0
    %v3665 = vadd.f32 %v3576, %v3664
    %v3666 = vpop.f32.mrf.mxu0
    %v3667 = vadd.f32 %v3578, %v3666
    %3668 = vmatmul.bf16.gmra.mxu0 %v1976
    %v3669 = vpop.f32.mrf.mxu0
    %v3670 = vadd.f32 %v3581, %v3669
    %v3671 = vpop.f32.mrf.mxu0
    %v3672 = vadd.f32 %v3583, %v3671
    %3673 = vmatmul.bf16.gmra.mxu0 %v1984
    %v3674 = vpop.f32.mrf.mxu0
    %v3675 = vadd.f32 %v3586, %v3674
    %v3676 = vpop.f32.mrf.mxu0
    %v3677 = vadd.f32 %v3588, %v3676
    %3678 = vmatmul.bf16.gmra.mxu0 %v1992
    %v3679 = vpop.f32.mrf.mxu0
    %v3680 = vadd.f32 %v3591, %v3679
    %v3681 = vpop.f32.mrf.mxu0
    %v3682 = vadd.f32 %v3593, %v3681
    %3683 = vmatmul.bf16.gmra.mxu0 %v2000
    %v3684 = vpop.f32.mrf.mxu0
    %v3685 = vadd.f32 %v3596, %v3684
    %v3686 = vpop.f32.mrf.mxu0
    %v3687 = vadd.f32 %v3598, %v3686
    %3688 = vmatmul.bf16.gmra.mxu0 %v2008
    %v3689 = vpop.f32.mrf.mxu0
    %v3690 = vadd.f32 %v3601, %v3689
    %v3691 = vpop.f32.mrf.mxu0
    %v3692 = vadd.f32 %v3603, %v3691
    %3693 = vmatmul.bf16.gmra.mxu0 %v2016
    %v3694 = vpop.f32.mrf.mxu0
    %v3695 = vadd.f32 %v3606, %v3694
    %v3696 = vpop.f32.mrf.mxu0
    %v3697 = vadd.f32 %v3608, %v3696
    %3698 = vmatmul.bf16.gmra.mxu0 %v2024
    %v3699 = vpop.f32.mrf.mxu0
    %v3700 = vadd.f32 %v3611, %v3699
    %v3701 = vpop.f32.mrf.mxu0
    %v3702 = vadd.f32 %v3613, %v3701
    %3703 = vmatmul.bf16.gmra.mxu0 %v2032
    %v3704 = vpop.f32.mrf.mxu0
    %v3705 = vadd.f32 %v3616, %v3704
    %v3706 = vpop.f32.mrf.mxu0
    %v3707 = vadd.f32 %v3618, %v3706
    %3708 = vmatmul.bf16.gmra.mxu0 %v2040
    %v3709 = vpop.f32.mrf.mxu0
    %v3710 = vadd.f32 %v3621, %v3709
    %v3711 = vpop.f32.mrf.mxu0
    %v3712 = vadd.f32 %v3623, %v3711
    %3713 = vmatmul.bf16.gmra.mxu0 %v2048
    %v3714 = vpop.f32.mrf.mxu0
    %v3715 = vadd.f32 %v3626, %v3714
    %v3716 = vpop.f32.mrf.mxu0
    %v3717 = vadd.f32 %v3628, %v3716
    %3718 = vdwg.mxu0
    %3719 = vmatpush.bf16.msra.mxu0 %v2620
    %3720 = vmatpush.bf16.msra.mxu0 %v2618
    %3721 = vmatpush.bf16.msra.mxu0 %v2616
    %3722 = vmatpush.bf16.msra.mxu0 %v2614
    %3723 = vmatpush.bf16.msra.mxu0 %v2612
    %3724 = vmatpush.bf16.msra.mxu0 %v2610
    %3725 = vmatpush.bf16.msra.mxu0 %v2608
    %3726 = vmatpush.bf16.msra.mxu0 %v2606
    %3727 = vmatmul.bf16.gmra.mxu0 %v1929
    %v3728 = vpop.f32.mrf.mxu0
    %v3729 = vadd.f32 %v3640, %v3728
    %v3730 = vpop.f32.mrf.mxu0
    %v3731 = vadd.f32 %v3642, %v3730
    %3732 = vmatmul.bf16.gmra.mxu0 %v1937
    %v3733 = vpop.f32.mrf.mxu0
    %v3734 = vadd.f32 %v3645, %v3733
    %v3735 = vpop.f32.mrf.mxu0
    %v3736 = vadd.f32 %v3647, %v3735
    %3737 = vmatmul.bf16.gmra.mxu0 %v1945
    %v3738 = vpop.f32.mrf.mxu0
    %v3739 = vadd.f32 %v3650, %v3738
    %v3740 = vpop.f32.mrf.mxu0
    %v3741 = vadd.f32 %v3652, %v3740
    %3742 = vmatmul.bf16.gmra.mxu0 %v1953
    %v3743 = vpop.f32.mrf.mxu0
    %v3744 = vadd.f32 %v3655, %v3743
    %v3745 = vpop.f32.mrf.mxu0
    %v3746 = vadd.f32 %v3657, %v3745
    %3747 = vmatmul.bf16.gmra.mxu0 %v1961
    %v3748 = vpop.f32.mrf.mxu0
    %v3749 = vadd.f32 %v3660, %v3748
    %v3750 = vpop.f32.mrf.mxu0
    %v3751 = vadd.f32 %v3662, %v3750
    %3752 = vmatmul.bf16.gmra.mxu0 %v1969
    %v3753 = vpop.f32.mrf.mxu0
    %v3754 = vadd.f32 %v3665, %v3753
    %v3755 = vpop.f32.mrf.mxu0
    %v3756 = vadd.f32 %v3667, %v3755
    %3757 = vmatmul.bf16.gmra.mxu0 %v1977
    %v3758 = vpop.f32.mrf.mxu0
    %v3759 = vadd.f32 %v3670, %v3758
    %v3760 = vpop.f32.mrf.mxu0
    %v3761 = vadd.f32 %v3672, %v3760
    %3762 = vmatmul.bf16.gmra.mxu0 %v1985
    %v3763 = vpop.f32.mrf.mxu0
    %v3764 = vadd.f32 %v3675, %v3763
    %v3765 = vpop.f32.mrf.mxu0
    %v3766 = vadd.f32 %v3677, %v3765
    %3767 = vmatmul.bf16.gmra.mxu0 %v1993
    %v3768 = vpop.f32.mrf.mxu0
    %v3769 = vadd.f32 %v3680, %v3768
    %v3770 = vpop.f32.mrf.mxu0
    %v3771 = vadd.f32 %v3682, %v3770
    %3772 = vmatmul.bf16.gmra.mxu0 %v2001
    %v3773 = vpop.f32.mrf.mxu0
    %v3774 = vadd.f32 %v3685, %v3773
    %v3775 = vpop.f32.mrf.mxu0
    %v3776 = vadd.f32 %v3687, %v3775
    %3777 = vmatmul.bf16.gmra.mxu0 %v2009
    %v3778 = vpop.f32.mrf.mxu0
    %v3779 = vadd.f32 %v3690, %v3778
    %v3780 = vpop.f32.mrf.mxu0
    %v3781 = vadd.f32 %v3692, %v3780
    %3782 = vmatmul.bf16.gmra.mxu0 %v2017
    %v3783 = vpop.f32.mrf.mxu0
    %v3784 = vadd.f32 %v3695, %v3783
    %v3785 = vpop.f32.mrf.mxu0
    %v3786 = vadd.f32 %v3697, %v3785
    %3787 = vmatmul.bf16.gmra.mxu0 %v2025
    %v3788 = vpop.f32.mrf.mxu0
    %v3789 = vadd.f32 %v3700, %v3788
    %v3790 = vpop.f32.mrf.mxu0
    %v3791 = vadd.f32 %v3702, %v3790
    %3792 = vmatmul.bf16.gmra.mxu0 %v2033
    %v3793 = vpop.f32.mrf.mxu0
    %v3794 = vadd.f32 %v3705, %v3793
    %v3795 = vpop.f32.mrf.mxu0
    %v3796 = vadd.f32 %v3707, %v3795
    %3797 = vmatmul.bf16.gmra.mxu0 %v2041
    %v3798 = vpop.f32.mrf.mxu0
    %v3799 = vadd.f32 %v3710, %v3798
    %v3800 = vpop.f32.mrf.mxu0
    %v3801 = vadd.f32 %v3712, %v3800
    %3802 = vmatmul.bf16.gmra.mxu0 %v2049
    %v3803 = vpop.f32.mrf.mxu0
    %v3804 = vadd.f32 %v3715, %v3803
    %v3805 = vpop.f32.mrf.mxu0
    %v3806 = vadd.f32 %v3717, %v3805
    %3807 = vdwg.mxu0
    %3808 = vmatpush.bf16.msra.mxu0 %v2636
    %3809 = vmatpush.bf16.msra.mxu0 %v2634
    %3810 = vmatpush.bf16.msra.mxu0 %v2632
    %3811 = vmatpush.bf16.msra.mxu0 %v2630
    %3812 = vmatpush.bf16.msra.mxu0 %v2628
    %3813 = vmatpush.bf16.msra.mxu0 %v2626
    %3814 = vmatpush.bf16.msra.mxu0 %v2624
    %3815 = vmatpush.bf16.msra.mxu0 %v2622
    %3816 = vmatmul.bf16.gmra.mxu0 %v1930
    %v3817 = vpop.f32.mrf.mxu0
    %v3818 = vadd.f32 %v3729, %v3817
    %v3819 = vpop.f32.mrf.mxu0
    %v3820 = vadd.f32 %v3731, %v3819
    %3821 = vmatmul.bf16.gmra.mxu0 %v1938
    %v3822 = vpop.f32.mrf.mxu0
    %v3823 = vadd.f32 %v3734, %v3822
    %v3824 = vpop.f32.mrf.mxu0
    %v3825 = vadd.f32 %v3736, %v3824
    %3826 = vmatmul.bf16.gmra.mxu0 %v1946
    %v3827 = vpop.f32.mrf.mxu0
    %v3828 = vadd.f32 %v3739, %v3827
    %v3829 = vpop.f32.mrf.mxu0
    %v3830 = vadd.f32 %v3741, %v3829
    %3831 = vmatmul.bf16.gmra.mxu0 %v1954
    %v3832 = vpop.f32.mrf.mxu0
    %v3833 = vadd.f32 %v3744, %v3832
    %v3834 = vpop.f32.mrf.mxu0
    %v3835 = vadd.f32 %v3746, %v3834
    %3836 = vmatmul.bf16.gmra.mxu0 %v1962
    %v3837 = vpop.f32.mrf.mxu0
    %v3838 = vadd.f32 %v3749, %v3837
    %v3839 = vpop.f32.mrf.mxu0
    %v3840 = vadd.f32 %v3751, %v3839
    %3841 = vmatmul.bf16.gmra.mxu0 %v1970
    %v3842 = vpop.f32.mrf.mxu0
    %v3843 = vadd.f32 %v3754, %v3842
    %v3844 = vpop.f32.mrf.mxu0
    %v3845 = vadd.f32 %v3756, %v3844
    %3846 = vmatmul.bf16.gmra.mxu0 %v1978
    %v3847 = vpop.f32.mrf.mxu0
    %v3848 = vadd.f32 %v3759, %v3847
    %v3849 = vpop.f32.mrf.mxu0
    %v3850 = vadd.f32 %v3761, %v3849
    %3851 = vmatmul.bf16.gmra.mxu0 %v1986
    %v3852 = vpop.f32.mrf.mxu0
    %v3853 = vadd.f32 %v3764, %v3852
    %v3854 = vpop.f32.mrf.mxu0
    %v3855 = vadd.f32 %v3766, %v3854
    %3856 = vmatmul.bf16.gmra.mxu0 %v1994
    %v3857 = vpop.f32.mrf.mxu0
    %v3858 = vadd.f32 %v3769, %v3857
    %v3859 = vpop.f32.mrf.mxu0
    %v3860 = vadd.f32 %v3771, %v3859
    %3861 = vmatmul.bf16.gmra.mxu0 %v2002
    %v3862 = vpop.f32.mrf.mxu0
    %v3863 = vadd.f32 %v3774, %v3862
    %v3864 = vpop.f32.mrf.mxu0
    %v3865 = vadd.f32 %v3776, %v3864
    %3866 = vmatmul.bf16.gmra.mxu0 %v2010
    %v3867 = vpop.f32.mrf.mxu0
    %v3868 = vadd.f32 %v3779, %v3867
    %v3869 = vpop.f32.mrf.mxu0
    %v3870 = vadd.f32 %v3781, %v3869
    %3871 = vmatmul.bf16.gmra.mxu0 %v2018
    %v3872 = vpop.f32.mrf.mxu0
    %v3873 = vadd.f32 %v3784, %v3872
    %v3874 = vpop.f32.mrf.mxu0
    %v3875 = vadd.f32 %v3786, %v3874
    %3876 = vmatmul.bf16.gmra.mxu0 %v2026
    %v3877 = vpop.f32.mrf.mxu0
    %v3878 = vadd.f32 %v3789, %v3877
    %v3879 = vpop.f32.mrf.mxu0
    %v3880 = vadd.f32 %v3791, %v3879
    %3881 = vmatmul.bf16.gmra.mxu0 %v2034
    %v3882 = vpop.f32.mrf.mxu0
    %v3883 = vadd.f32 %v3794, %v3882
    %v3884 = vpop.f32.mrf.mxu0
    %v3885 = vadd.f32 %v3796, %v3884
    %3886 = vmatmul.bf16.gmra.mxu0 %v2042
    %v3887 = vpop.f32.mrf.mxu0
    %v3888 = vadd.f32 %v3799, %v3887
    %v3889 = vpop.f32.mrf.mxu0
    %v3890 = vadd.f32 %v3801, %v3889
    %3891 = vmatmul.bf16.gmra.mxu0 %v2050
    %v3892 = vpop.f32.mrf.mxu0
    %v3893 = vadd.f32 %v3804, %v3892
    %v3894 = vpop.f32.mrf.mxu0
    %v3895 = vadd.f32 %v3806, %v3894
    %3896 = vdwg.mxu0
    %3897 = vmatpush.bf16.msra.mxu0 %v2652
    %3898 = vmatpush.bf16.msra.mxu0 %v2650
    %3899 = vmatpush.bf16.msra.mxu0 %v2648
    %3900 = vmatpush.bf16.msra.mxu0 %v2646
    %3901 = vmatpush.bf16.msra.mxu0 %v2644
    %3902 = vmatpush.bf16.msra.mxu0 %v2642
    %3903 = vmatpush.bf16.msra.mxu0 %v2640
    %3904 = vmatpush.bf16.msra.mxu0 %v2638
    %3905 = vmatmul.bf16.gmra.mxu0 %v1931
    %v3906 = vpop.f32.mrf.mxu0
    %v3907 = vadd.f32 %v3818, %v3906
    %v3908 = vpop.f32.mrf.mxu0
    %v3909 = vadd.f32 %v3820, %v3908
    %3910 = vmatmul.bf16.gmra.mxu0 %v1939
    %v3911 = vpop.f32.mrf.mxu0
    %v3912 = vadd.f32 %v3823, %v3911
    %v3913 = vpop.f32.mrf.mxu0
    %v3914 = vadd.f32 %v3825, %v3913
    %3915 = vmatmul.bf16.gmra.mxu0 %v1947
    %v3916 = vpop.f32.mrf.mxu0
    %v3917 = vadd.f32 %v3828, %v3916
    %v3918 = vpop.f32.mrf.mxu0
    %v3919 = vadd.f32 %v3830, %v3918
    %3920 = vmatmul.bf16.gmra.mxu0 %v1955
    %v3921 = vpop.f32.mrf.mxu0
    %v3922 = vadd.f32 %v3833, %v3921
    %v3923 = vpop.f32.mrf.mxu0
    %v3924 = vadd.f32 %v3835, %v3923
    %3925 = vmatmul.bf16.gmra.mxu0 %v1963
    %v3926 = vpop.f32.mrf.mxu0
    %v3927 = vadd.f32 %v3838, %v3926
    %v3928 = vpop.f32.mrf.mxu0
    %v3929 = vadd.f32 %v3840, %v3928
    %3930 = vmatmul.bf16.gmra.mxu0 %v1971
    %v3931 = vpop.f32.mrf.mxu0
    %v3932 = vadd.f32 %v3843, %v3931
    %v3933 = vpop.f32.mrf.mxu0
    %v3934 = vadd.f32 %v3845, %v3933
    %3935 = vmatmul.bf16.gmra.mxu0 %v1979
    %v3936 = vpop.f32.mrf.mxu0
    %v3937 = vadd.f32 %v3848, %v3936
    %v3938 = vpop.f32.mrf.mxu0
    %v3939 = vadd.f32 %v3850, %v3938
    %3940 = vmatmul.bf16.gmra.mxu0 %v1987
    %v3941 = vpop.f32.mrf.mxu0
    %v3942 = vadd.f32 %v3853, %v3941
    %v3943 = vpop.f32.mrf.mxu0
    %v3944 = vadd.f32 %v3855, %v3943
    %3945 = vmatmul.bf16.gmra.mxu0 %v1995
    %v3946 = vpop.f32.mrf.mxu0
    %v3947 = vadd.f32 %v3858, %v3946
    %v3948 = vpop.f32.mrf.mxu0
    %v3949 = vadd.f32 %v3860, %v3948
    %3950 = vmatmul.bf16.gmra.mxu0 %v2003
    %v3951 = vpop.f32.mrf.mxu0
    %v3952 = vadd.f32 %v3863, %v3951
    %v3953 = vpop.f32.mrf.mxu0
    %v3954 = vadd.f32 %v3865, %v3953
    %3955 = vmatmul.bf16.gmra.mxu0 %v2011
    %v3956 = vpop.f32.mrf.mxu0
    %v3957 = vadd.f32 %v3868, %v3956
    %v3958 = vpop.f32.mrf.mxu0
    %v3959 = vadd.f32 %v3870, %v3958
    %3960 = vmatmul.bf16.gmra.mxu0 %v2019
    %v3961 = vpop.f32.mrf.mxu0
    %v3962 = vadd.f32 %v3873, %v3961
    %v3963 = vpop.f32.mrf.mxu0
    %v3964 = vadd.f32 %v3875, %v3963
    %3965 = vmatmul.bf16.gmra.mxu0 %v2027
    %v3966 = vpop.f32.mrf.mxu0
    %v3967 = vadd.f32 %v3878, %v3966
    %v3968 = vpop.f32.mrf.mxu0
    %v3969 = vadd.f32 %v3880, %v3968
    %3970 = vmatmul.bf16.gmra.mxu0 %v2035
    %v3971 = vpop.f32.mrf.mxu0
    %v3972 = vadd.f32 %v3883, %v3971
    %v3973 = vpop.f32.mrf.mxu0
    %v3974 = vadd.f32 %v3885, %v3973
    %3975 = vmatmul.bf16.gmra.mxu0 %v2043
    %v3976 = vpop.f32.mrf.mxu0
    %v3977 = vadd.f32 %v3888, %v3976
    %v3978 = vpop.f32.mrf.mxu0
    %v3979 = vadd.f32 %v3890, %v3978
    %3980 = vmatmul.bf16.gmra.mxu0 %v2051
    %v3981 = vpop.f32.mrf.mxu0
    %v3982 = vadd.f32 %v3893, %v3981
    %v3983 = vpop.f32.mrf.mxu0
    %v3984 = vadd.f32 %v3895, %v3983
    %3985 = vdwg.mxu0
    %3986 = vmatpush.bf16.msra.mxu0 %v2668
    %3987 = vmatpush.bf16.msra.mxu0 %v2666
    %3988 = vmatpush.bf16.msra.mxu0 %v2664
    %3989 = vmatpush.bf16.msra.mxu0 %v2662
    %3990 = vmatpush.bf16.msra.mxu0 %v2660
    %3991 = vmatpush.bf16.msra.mxu0 %v2658
    %3992 = vmatpush.bf16.msra.mxu0 %v2656
    %3993 = vmatpush.bf16.msra.mxu0 %v2654
    %3994 = vmatmul.bf16.gmra.mxu0 %v1932
    %v3995 = vpop.f32.mrf.mxu0
    %v3996 = vadd.f32 %v3907, %v3995
    %v3997 = vpop.f32.mrf.mxu0
    %v3998 = vadd.f32 %v3909, %v3997
    %3999 = vmatmul.bf16.gmra.mxu0 %v1940
    %v4000 = vpop.f32.mrf.mxu0
    %v4001 = vadd.f32 %v3912, %v4000
    %v4002 = vpop.f32.mrf.mxu0
    %v4003 = vadd.f32 %v3914, %v4002
    %4004 = vmatmul.bf16.gmra.mxu0 %v1948
    %v4005 = vpop.f32.mrf.mxu0
    %v4006 = vadd.f32 %v3917, %v4005
    %v4007 = vpop.f32.mrf.mxu0
    %v4008 = vadd.f32 %v3919, %v4007
    %4009 = vmatmul.bf16.gmra.mxu0 %v1956
    %v4010 = vpop.f32.mrf.mxu0
    %v4011 = vadd.f32 %v3922, %v4010
    %v4012 = vpop.f32.mrf.mxu0
    %v4013 = vadd.f32 %v3924, %v4012
    %4014 = vmatmul.bf16.gmra.mxu0 %v1964
    %v4015 = vpop.f32.mrf.mxu0
    %v4016 = vadd.f32 %v3927, %v4015
    %v4017 = vpop.f32.mrf.mxu0
    %v4018 = vadd.f32 %v3929, %v4017
    %4019 = vmatmul.bf16.gmra.mxu0 %v1972
    %v4020 = vpop.f32.mrf.mxu0
    %v4021 = vadd.f32 %v3932, %v4020
    %v4022 = vpop.f32.mrf.mxu0
    %v4023 = vadd.f32 %v3934, %v4022
    %4024 = vmatmul.bf16.gmra.mxu0 %v1980
    %v4025 = vpop.f32.mrf.mxu0
    %v4026 = vadd.f32 %v3937, %v4025
    %v4027 = vpop.f32.mrf.mxu0
    %v4028 = vadd.f32 %v3939, %v4027
    %4029 = vmatmul.bf16.gmra.mxu0 %v1988
    %v4030 = vpop.f32.mrf.mxu0
    %v4031 = vadd.f32 %v3942, %v4030
    %v4032 = vpop.f32.mrf.mxu0
    %v4033 = vadd.f32 %v3944, %v4032
    %4034 = vmatmul.bf16.gmra.mxu0 %v1996
    %v4035 = vpop.f32.mrf.mxu0
    %v4036 = vadd.f32 %v3947, %v4035
    %v4037 = vpop.f32.mrf.mxu0
    %v4038 = vadd.f32 %v3949, %v4037
    %4039 = vmatmul.bf16.gmra.mxu0 %v2004
    %v4040 = vpop.f32.mrf.mxu0
    %v4041 = vadd.f32 %v3952, %v4040
    %v4042 = vpop.f32.mrf.mxu0
    %v4043 = vadd.f32 %v3954, %v4042
    %4044 = vmatmul.bf16.gmra.mxu0 %v2012
    %v4045 = vpop.f32.mrf.mxu0
    %v4046 = vadd.f32 %v3957, %v4045
    %v4047 = vpop.f32.mrf.mxu0
    %v4048 = vadd.f32 %v3959, %v4047
    %4049 = vmatmul.bf16.gmra.mxu0 %v2020
    %v4050 = vpop.f32.mrf.mxu0
    %v4051 = vadd.f32 %v3962, %v4050
    %v4052 = vpop.f32.mrf.mxu0
    %v4053 = vadd.f32 %v3964, %v4052
    %4054 = vmatmul.bf16.gmra.mxu0 %v2028
    %v4055 = vpop.f32.mrf.mxu0
    %v4056 = vadd.f32 %v3967, %v4055
    %v4057 = vpop.f32.mrf.mxu0
    %v4058 = vadd.f32 %v3969, %v4057
    %4059 = vmatmul.bf16.gmra.mxu0 %v2036
    %v4060 = vpop.f32.mrf.mxu0
    %v4061 = vadd.f32 %v3972, %v4060
    %v4062 = vpop.f32.mrf.mxu0
    %v4063 = vadd.f32 %v3974, %v4062
    %4064 = vmatmul.bf16.gmra.mxu0 %v2044
    %v4065 = vpop.f32.mrf.mxu0
    %v4066 = vadd.f32 %v3977, %v4065
    %v4067 = vpop.f32.mrf.mxu0
    %v4068 = vadd.f32 %v3979, %v4067
    %4069 = vmatmul.bf16.gmra.mxu0 %v2052
    %v4070 = vpop.f32.mrf.mxu0
    %v4071 = vadd.f32 %v3982, %v4070
    %v4072 = vpop.f32.mrf.mxu0
    %v4073 = vadd.f32 %v3984, %v4072
    %4074 = vdwg.mxu0
    %4075 = vmatpush.bf16.msra.mxu0 %v2684
    %4076 = vmatpush.bf16.msra.mxu0 %v2682
    %4077 = vmatpush.bf16.msra.mxu0 %v2680
    %4078 = vmatpush.bf16.msra.mxu0 %v2678
    %4079 = vmatpush.bf16.msra.mxu0 %v2676
    %4080 = vmatpush.bf16.msra.mxu0 %v2674
    %4081 = vmatpush.bf16.msra.mxu0 %v2672
    %4082 = vmatpush.bf16.msra.mxu0 %v2670
    %4083 = vmatmul.bf16.gmra.mxu0 %v1933
    %v4084 = vpop.f32.mrf.mxu0
    %v4085 = vadd.f32 %v3996, %v4084
    %v4086 = vpop.f32.mrf.mxu0
    %v4087 = vadd.f32 %v3998, %v4086
    %4088 = vmatmul.bf16.gmra.mxu0 %v1941
    %v4089 = vpop.f32.mrf.mxu0
    %v4090 = vadd.f32 %v4001, %v4089
    %v4091 = vpop.f32.mrf.mxu0
    %v4092 = vadd.f32 %v4003, %v4091
    %4093 = vmatmul.bf16.gmra.mxu0 %v1949
    %v4094 = vpop.f32.mrf.mxu0
    %v4095 = vadd.f32 %v4006, %v4094
    %v4096 = vpop.f32.mrf.mxu0
    %v4097 = vadd.f32 %v4008, %v4096
    %4098 = vmatmul.bf16.gmra.mxu0 %v1957
    %v4099 = vpop.f32.mrf.mxu0
    %v4100 = vadd.f32 %v4011, %v4099
    %v4101 = vpop.f32.mrf.mxu0
    %v4102 = vadd.f32 %v4013, %v4101
    %4103 = vmatmul.bf16.gmra.mxu0 %v1965
    %v4104 = vpop.f32.mrf.mxu0
    %v4105 = vadd.f32 %v4016, %v4104
    %v4106 = vpop.f32.mrf.mxu0
    %v4107 = vadd.f32 %v4018, %v4106
    %4108 = vmatmul.bf16.gmra.mxu0 %v1973
    %v4109 = vpop.f32.mrf.mxu0
    %v4110 = vadd.f32 %v4021, %v4109
    %v4111 = vpop.f32.mrf.mxu0
    %v4112 = vadd.f32 %v4023, %v4111
    %4113 = vmatmul.bf16.gmra.mxu0 %v1981
    %v4114 = vpop.f32.mrf.mxu0
    %v4115 = vadd.f32 %v4026, %v4114
    %v4116 = vpop.f32.mrf.mxu0
    %v4117 = vadd.f32 %v4028, %v4116
    %4118 = vmatmul.bf16.gmra.mxu0 %v1989
    %v4119 = vpop.f32.mrf.mxu0
    %v4120 = vadd.f32 %v4031, %v4119
    %v4121 = vpop.f32.mrf.mxu0
    %v4122 = vadd.f32 %v4033, %v4121
    %4123 = vmatmul.bf16.gmra.mxu0 %v1997
    %v4124 = vpop.f32.mrf.mxu0
    %v4125 = vadd.f32 %v4036, %v4124
    %v4126 = vpop.f32.mrf.mxu0
    %v4127 = vadd.f32 %v4038, %v4126
    %4128 = vmatmul.bf16.gmra.mxu0 %v2005
    %v4129 = vpop.f32.mrf.mxu0
    %v4130 = vadd.f32 %v4041, %v4129
    %v4131 = vpop.f32.mrf.mxu0
    %v4132 = vadd.f32 %v4043, %v4131
    %4133 = vmatmul.bf16.gmra.mxu0 %v2013
    %v4134 = vpop.f32.mrf.mxu0
    %v4135 = vadd.f32 %v4046, %v4134
    %v4136 = vpop.f32.mrf.mxu0
    %v4137 = vadd.f32 %v4048, %v4136
    %4138 = vmatmul.bf16.gmra.mxu0 %v2021
    %v4139 = vpop.f32.mrf.mxu0
    %v4140 = vadd.f32 %v4051, %v4139
    %v4141 = vpop.f32.mrf.mxu0
    %v4142 = vadd.f32 %v4053, %v4141
    %4143 = vmatmul.bf16.gmra.mxu0 %v2029
    %v4144 = vpop.f32.mrf.mxu0
    %v4145 = vadd.f32 %v4056, %v4144
    %v4146 = vpop.f32.mrf.mxu0
    %v4147 = vadd.f32 %v4058, %v4146
    %4148 = vmatmul.bf16.gmra.mxu0 %v2037
    %v4149 = vpop.f32.mrf.mxu0
    %v4150 = vadd.f32 %v4061, %v4149
    %v4151 = vpop.f32.mrf.mxu0
    %v4152 = vadd.f32 %v4063, %v4151
    %4153 = vmatmul.bf16.gmra.mxu0 %v2045
    %v4154 = vpop.f32.mrf.mxu0
    %v4155 = vadd.f32 %v4066, %v4154
    %v4156 = vpop.f32.mrf.mxu0
    %v4157 = vadd.f32 %v4068, %v4156
    %4158 = vmatmul.bf16.gmra.mxu0 %v2053
    %v4159 = vpop.f32.mrf.mxu0
    %v4160 = vadd.f32 %v4071, %v4159
    %v4161 = vpop.f32.mrf.mxu0
    %v4162 = vadd.f32 %v4073, %v4161
    %4163 = vdwg.mxu0
    %4164 = vmatpush.bf16.msra.mxu0 %v2700
    %4165 = vmatpush.bf16.msra.mxu0 %v2698
    %4166 = vmatpush.bf16.msra.mxu0 %v2696
    %4167 = vmatpush.bf16.msra.mxu0 %v2694
    %4168 = vmatpush.bf16.msra.mxu0 %v2692
    %4169 = vmatpush.bf16.msra.mxu0 %v2690
    %4170 = vmatpush.bf16.msra.mxu0 %v2688
    %4171 = vmatpush.bf16.msra.mxu0 %v2686
    %4172 = vmatmul.bf16.gmra.mxu0 %v1934
    %v4173 = vpop.f32.mrf.mxu0
    %v4174 = vadd.f32 %v4085, %v4173
    %v4175 = vpop.f32.mrf.mxu0
    %v4176 = vadd.f32 %v4087, %v4175
    %4177 = vmatmul.bf16.gmra.mxu0 %v1942
    %v4178 = vpop.f32.mrf.mxu0
    %v4179 = vadd.f32 %v4090, %v4178
    %v4180 = vpop.f32.mrf.mxu0
    %v4181 = vadd.f32 %v4092, %v4180
    %4182 = vmatmul.bf16.gmra.mxu0 %v1950
    %v4183 = vpop.f32.mrf.mxu0
    %v4184 = vadd.f32 %v4095, %v4183
    %v4185 = vpop.f32.mrf.mxu0
    %v4186 = vadd.f32 %v4097, %v4185
    %4187 = vmatmul.bf16.gmra.mxu0 %v1958
    %v4188 = vpop.f32.mrf.mxu0
    %v4189 = vadd.f32 %v4100, %v4188
    %v4190 = vpop.f32.mrf.mxu0
    %v4191 = vadd.f32 %v4102, %v4190
    %4192 = vmatmul.bf16.gmra.mxu0 %v1966
    %v4193 = vpop.f32.mrf.mxu0
    %v4194 = vadd.f32 %v4105, %v4193
    %v4195 = vpop.f32.mrf.mxu0
    %v4196 = vadd.f32 %v4107, %v4195
    %4197 = vmatmul.bf16.gmra.mxu0 %v1974
    %v4198 = vpop.f32.mrf.mxu0
    %v4199 = vadd.f32 %v4110, %v4198
    %v4200 = vpop.f32.mrf.mxu0
    %v4201 = vadd.f32 %v4112, %v4200
    %4202 = vmatmul.bf16.gmra.mxu0 %v1982
    %v4203 = vpop.f32.mrf.mxu0
    %v4204 = vadd.f32 %v4115, %v4203
    %v4205 = vpop.f32.mrf.mxu0
    %v4206 = vadd.f32 %v4117, %v4205
    %4207 = vmatmul.bf16.gmra.mxu0 %v1990
    %v4208 = vpop.f32.mrf.mxu0
    %v4209 = vadd.f32 %v4120, %v4208
    %v4210 = vpop.f32.mrf.mxu0
    %v4211 = vadd.f32 %v4122, %v4210
    %4212 = vmatmul.bf16.gmra.mxu0 %v1998
    %v4213 = vpop.f32.mrf.mxu0
    %v4214 = vadd.f32 %v4125, %v4213
    %v4215 = vpop.f32.mrf.mxu0
    %v4216 = vadd.f32 %v4127, %v4215
    %4217 = vmatmul.bf16.gmra.mxu0 %v2006
    %v4218 = vpop.f32.mrf.mxu0
    %v4219 = vadd.f32 %v4130, %v4218
    %v4220 = vpop.f32.mrf.mxu0
    %v4221 = vadd.f32 %v4132, %v4220
    %4222 = vmatmul.bf16.gmra.mxu0 %v2014
    %v4223 = vpop.f32.mrf.mxu0
    %v4224 = vadd.f32 %v4135, %v4223
    %v4225 = vpop.f32.mrf.mxu0
    %v4226 = vadd.f32 %v4137, %v4225
    %4227 = vmatmul.bf16.gmra.mxu0 %v2022
    %v4228 = vpop.f32.mrf.mxu0
    %v4229 = vadd.f32 %v4140, %v4228
    %v4230 = vpop.f32.mrf.mxu0
    %v4231 = vadd.f32 %v4142, %v4230
    %4232 = vmatmul.bf16.gmra.mxu0 %v2030
    %v4233 = vpop.f32.mrf.mxu0
    %v4234 = vadd.f32 %v4145, %v4233
    %v4235 = vpop.f32.mrf.mxu0
    %v4236 = vadd.f32 %v4147, %v4235
    %4237 = vmatmul.bf16.gmra.mxu0 %v2038
    %v4238 = vpop.f32.mrf.mxu0
    %v4239 = vadd.f32 %v4150, %v4238
    %v4240 = vpop.f32.mrf.mxu0
    %v4241 = vadd.f32 %v4152, %v4240
    %4242 = vmatmul.bf16.gmra.mxu0 %v2046
    %v4243 = vpop.f32.mrf.mxu0
    %v4244 = vadd.f32 %v4155, %v4243
    %v4245 = vpop.f32.mrf.mxu0
    %v4246 = vadd.f32 %v4157, %v4245
    %4247 = vmatmul.bf16.gmra.mxu0 %v2054
    %v4248 = vpop.f32.mrf.mxu0
    %v4249 = vadd.f32 %v4160, %v4248
    %v4250 = vpop.f32.mrf.mxu0
    %v4251 = vadd.f32 %v4162, %v4250
    %4252 = vdwg.mxu0
    %4253 = vst [vmem:[#allocation11] sm:$0xff] %v3462
    %4254 = vst [vmem:[#allocation11 + $0x8] sm:$0xff] %v4174
    %4255 = vst [vmem:[#allocation11 + $0x10] sm:$0xff] %v3464
    %4256 = vst [vmem:[#allocation11 + $0x18] sm:$0xff] %v4176
    %4257 = vst [vmem:[#allocation11 + $0x20] sm:$0xff] %v3467
    %4258 = vst [vmem:[#allocation11 + $0x28] sm:$0xff] %v4179
    %4259 = vst [vmem:[#allocation11 + $0x30] sm:$0xff] %v3469
    %4260 = vst [vmem:[#allocation11 + $0x38] sm:$0xff] %v4181
    %4261 = vst [vmem:[#allocation11 + $0x40] sm:$0xff] %v3472
    %4262 = vst [vmem:[#allocation11 + $0x48] sm:$0xff] %v4184
    %4263 = vst [vmem:[#allocation11 + $0x50] sm:$0xff] %v3474
    %4264 = vst [vmem:[#allocation11 + $0x58] sm:$0xff] %v4186
    %4265 = vst [vmem:[#allocation11 + $0x60] sm:$0xff] %v3477
    %4266 = vst [vmem:[#allocation11 + $0x68] sm:$0xff] %v4189
    %4267 = vst [vmem:[#allocation11 + $0x70] sm:$0xff] %v3479
    %4268 = vst [vmem:[#allocation11 + $0x78] sm:$0xff] %v4191
    %4269 = vst [vmem:[#allocation11 + $0x80] sm:$0xff] %v3482
    %4270 = vst [vmem:[#allocation11 + $0x88] sm:$0xff] %v4194
    %4271 = vst [vmem:[#allocation11 + $0x90] sm:$0xff] %v3484
    %4272 = vst [vmem:[#allocation11 + $0x98] sm:$0xff] %v4196
    %4273 = vst [vmem:[#allocation11 + $0xa0] sm:$0xff] %v3487
    %4274 = vst [vmem:[#allocation11 + $0xa8] sm:$0xff] %v4199
    %4275 = vst [vmem:[#allocation11 + $0xb0] sm:$0xff] %v3489
    %4276 = vst [vmem:[#allocation11 + $0xb8] sm:$0xff] %v4201
    %4277 = vst [vmem:[#allocation11 + $0xc0] sm:$0xff] %v3492
    %4278 = vst [vmem:[#allocation11 + $0xc8] sm:$0xff] %v4204
    %4279 = vst [vmem:[#allocation11 + $0xd0] sm:$0xff] %v3494
    %4280 = vst [vmem:[#allocation11 + $0xd8] sm:$0xff] %v4206
    %4281 = vst [vmem:[#allocation11 + $0xe0] sm:$0xff] %v3497
    %4282 = vst [vmem:[#allocation11 + $0xe8] sm:$0xff] %v4209
    %4283 = vst [vmem:[#allocation11 + $0xf0] sm:$0xff] %v3499
    %4284 = vst [vmem:[#allocation11 + $0xf8] sm:$0xff] %v4211
    %4285 = vst [vmem:[#allocation11 + $0x100] sm:$0xff] %v3502
    %4286 = vst [vmem:[#allocation11 + $0x108] sm:$0xff] %v4214
    %4287 = vst [vmem:[#allocation11 + $0x110] sm:$0xff] %v3504
    %4288 = vst [vmem:[#allocation11 + $0x118] sm:$0xff] %v4216
    %4289 = vst [vmem:[#allocation11 + $0x120] sm:$0xff] %v3507
    %4290 = vst [vmem:[#allocation11 + $0x128] sm:$0xff] %v4219
    %4291 = vst [vmem:[#allocation11 + $0x130] sm:$0xff] %v3509
    %4292 = vst [vmem:[#allocation11 + $0x138] sm:$0xff] %v4221
    %4293 = vst [vmem:[#allocation11 + $0x140] sm:$0xff] %v3512
    %4294 = vst [vmem:[#allocation11 + $0x148] sm:$0xff] %v4224
    %4295 = vst [vmem:[#allocation11 + $0x150] sm:$0xff] %v3514
    %4296 = vst [vmem:[#allocation11 + $0x158] sm:$0xff] %v4226
    %4297 = vst [vmem:[#allocation11 + $0x160] sm:$0xff] %v3517
    %4298 = vst [vmem:[#allocation11 + $0x168] sm:$0xff] %v4229
    %4299 = vst [vmem:[#allocation11 + $0x170] sm:$0xff] %v3519
    %4300 = vst [vmem:[#allocation11 + $0x178] sm:$0xff] %v4231
    %4301 = vst [vmem:[#allocation11 + $0x180] sm:$0xff] %v3522
    %4302 = vst [vmem:[#allocation11 + $0x188] sm:$0xff] %v4234
    %4303 = vst [vmem:[#allocation11 + $0x190] sm:$0xff] %v3524
    %4304 = vst [vmem:[#allocation11 + $0x198] sm:$0xff] %v4236
    %4305 = vst [vmem:[#allocation11 + $0x1a0] sm:$0xff] %v3527
    %4306 = vst [vmem:[#allocation11 + $0x1a8] sm:$0xff] %v4239
    %4307 = vst [vmem:[#allocation11 + $0x1b0] sm:$0xff] %v3529
    %4308 = vst [vmem:[#allocation11 + $0x1b8] sm:$0xff] %v4241
    %4309 = vst [vmem:[#allocation11 + $0x1c0] sm:$0xff] %v3532
    %4310 = vst [vmem:[#allocation11 + $0x1c8] sm:$0xff] %v4244
    %4311 = vst [vmem:[#allocation11 + $0x1d0] sm:$0xff] %v3534
    %4312 = vst [vmem:[#allocation11 + $0x1d8] sm:$0xff] %v4246
    %4313 = vst [vmem:[#allocation11 + $0x1e0] sm:$0xff] %v3537
    %4314 = vst [vmem:[#allocation11 + $0x1e8] sm:$0xff] %v4249
    %4315 = vst [vmem:[#allocation11 + $0x1f0] sm:$0xff] %v3539
    %4316 = vst [vmem:[#allocation11 + $0x1f8] sm:$0xff] %v4251
    // Predicated region
    $region50: #{autoencoder_forward.1} parent=1 // pred_check
      _
    $region51: #{autoencoder_forward.1} parent=1 // pred_check_branch
      %4318 = sbr.rel (0) target = $region53
    $region52: #{autoencoder_forward.1} parent=1 // pred_region
      %4320 = vsyncadd [#allocation4], 0
      %s4321 = sshll.u32 [#allocation11], 4
      %s4322 = int_to_ptr.vmem [resolvable:$true] %s4321
      %s4323 = sshll.u32 %s7, 4
      %s4324 = int_to_ptr.hbm [resolvable:$true] %s4323
      %4329 = dma.vmem_to_hbm [thread:$0]  %s4322, 8192, %s4324, [#allocation4], 256, 256, 16
    $region53: #{autoencoder_forward.1} parent=1 // pred_fallthru
      _
    // Predicated region
    $region54: #{autoencoder_forward.1} parent=1 // pred_check
      _
    $region55: #{autoencoder_forward.1} parent=1 // pred_check_branch
      %4331 = sbr.rel (0) target = $region57
    $region56: #{autoencoder_forward.1} parent=1 // pred_region
      %4333 = dma.done [#allocation4], 8192
    $region57: #{autoencoder_forward.1} parent=1 // pred_fallthru
      _
    %4334 = vsyncpa [#allocation3], 1
    %4335 = vsyncpa [#allocation6], 1
    %4336 = vsyncpa [#allocation9], 1
    %4337 = vsyncpa [#allocation4], 1

</llo_original>
